<compile_context>
chip_gen: v7x
topology: tpu7x:2x2x1
jax: 0.10.0
libtpu: 0.0.40
codegen_flags: <defaults>
</compile_context>

<pallas_src>
import functools

import jax
import jax.numpy as jnp
from jax.experimental import pallas as pl
from jax.experimental.pallas import tpu as pltpu


def _round_up(n, m):
    return ((n + m - 1) // m) * m


def _sigmoid(v):
    # logistic via tanh (single EUP op); identical to 1 / (1 + exp(-v))
    return 0.5 * (jnp.tanh(0.5 * v) + 1.0)


def _gmu_kernel(x_ref, c1_ref, c2_ref, c3_ref,
                wx_ref, wc1_ref, wc2_ref, wc3_ref,
                o_ref, *, d):
    f32 = jnp.float32
    bf16 = jnp.bfloat16

    # f32 tiles from HBM, cast to bf16 for the MXU (cheap VPU cast).
    x = x_ref[...].astype(bf16)     # (tm, D)
    c1 = c1_ref[...].astype(bf16)
    c2 = c2_ref[...].astype(bf16)
    c3 = c3_ref[...].astype(bf16)

    # One matmul per input; columns are [z-gate contributions | tanh pre-act].
    px = jnp.dot(x,  wx_ref[...],  preferred_element_type=f32)   # (tm, 5D) [z1 z2 z3 z4 h1]
    p1 = jnp.dot(c1, wc1_ref[...], preferred_element_type=f32)   # (tm, 4D) [z2 z3 z4 h2]
    p2 = jnp.dot(c2, wc2_ref[...], preferred_element_type=f32)   # (tm, 3D) [z3 z4 h3]
    p3 = jnp.dot(c3, wc3_ref[...], preferred_element_type=f32)   # (tm, 2D) [z4 h4]

    z1 = _sigmoid(px[:, 0 * d:1 * d])
    z2 = _sigmoid(px[:, 1 * d:2 * d] + p1[:, 0 * d:1 * d])
    z3 = _sigmoid(px[:, 2 * d:3 * d] + p1[:, 1 * d:2 * d] + p2[:, 0 * d:1 * d])
    z4 = _sigmoid(px[:, 3 * d:4 * d] + p1[:, 2 * d:3 * d] + p2[:, 1 * d:2 * d]
                  + p3[:, 0 * d:1 * d])

    h1 = jnp.tanh(px[:, 4 * d:5 * d])
    h2 = jnp.tanh(p1[:, 3 * d:4 * d])
    h3 = jnp.tanh(p2[:, 2 * d:3 * d])
    h4 = jnp.tanh(p3[:, 1 * d:2 * d])

    o_ref[...] = (h1 * z1 + h2 * z2 + h3 * z3 + h4 * z4).astype(o_ref.dtype)


def pack_gmu_weights(w):
    """PyTorch-layout (out_f, in_f) Linear weights -> per-input matmul packs (bf16).

    For each input tensor the pack holds, side by side, that input's rows of
    every z-gate weight it contributes to, followed by its Wt weight:
      Wx  : (D, 5D) = [Wz1 | Wz2_x | Wz3_x | Wz4_x | Wt1]
      Wc1 : (D, 4D) = [Wz2_c1 | Wz3_c1 | Wz4_c1 | Wt2]
      Wc2 : (D, 3D) = [Wz3_c2 | Wz4_c2 | Wt3]
      Wc3 : (D, 2D) = [Wz4_c3 | Wt4]
    """
    D = w["Wz1"].shape[0]
    bf = jnp.bfloat16
    wz1, wz2, wz3, wz4 = w["Wz1"].T, w["Wz2"].T, w["Wz3"].T, w["Wz4"].T  # (kD, D)
    wx = jnp.concatenate(
        [wz1, wz2[:D], wz3[:D], wz4[:D], w["Wt1"].T], axis=1).astype(bf)          # (D, 5D)
    wc1 = jnp.concatenate(
        [wz2[D:2 * D], wz3[D:2 * D], wz4[D:2 * D], w["Wt2"].T], axis=1).astype(bf)  # (D, 4D)
    wc2 = jnp.concatenate(
        [wz3[2 * D:3 * D], wz4[2 * D:3 * D], w["Wt3"].T], axis=1).astype(bf)        # (D, 3D)
    wc3 = jnp.concatenate(
        [wz4[3 * D:4 * D], w["Wt4"].T], axis=1).astype(bf)                          # (D, 2D)
    return wx, wc1, wc2, wc3


def gmu_forward(x, c1, c2, c3, weights, *, tm=512):
    """x, c1, c2, c3: (B, S, D) float32.  Returns (B, S, D) float32."""
    B, S, D = x.shape
    M = B * S
    tm = min(tm, _round_up(M, 8))
    m_pad = _round_up(M, tm)

    def prep(a):
        a = a.reshape(M, D)                     # free (metadata only), stays f32
        if m_pad != M:
            a = jnp.pad(a, ((0, m_pad - M), (0, 0)))
        return a

    acts = [prep(a) for a in (x, c1, c2, c3)]
    wx, wc1, wc2, wc3 = pack_gmu_weights(weights)

    act_spec = pl.BlockSpec((tm, D), lambda i: (i, 0))

    def full(a):
        ndim = a.ndim
        return pl.BlockSpec(a.shape, lambda i: (0,) * ndim)

    flops = 2 * m_pad * D * D * 14              # 14 DxD weight blocks total
    transcendentals = 8 * m_pad * D             # 4 tanh + 4 sigmoid-via-tanh
    bytes_accessed = (4 * m_pad * D * 4         # f32 activations in
                      + 14 * D * D * 2          # bf16 packed weights
                      + m_pad * D * 4)          # f32 output

    out = pl.pallas_call(
        functools.partial(_gmu_kernel, d=D),
        out_shape=jax.ShapeDtypeStruct((m_pad, D), jnp.float32),
        grid=(m_pad // tm,),
        in_specs=[act_spec, act_spec, act_spec, act_spec,
                  full(wx), full(wc1), full(wc2), full(wc3)],
        out_specs=pl.BlockSpec((tm, D), lambda i: (i, 0)),
        compiler_params=pltpu.CompilerParams(
            dimension_semantics=("parallel",),
            vmem_limit_bytes=32 * 1024 * 1024),
        cost_estimate=pl.CostEstimate(flops=flops,
                                      transcendentals=transcendentals,
                                      bytes_accessed=bytes_accessed),
    )(*acts, wx, wc1, wc2, wc3)

    return out[:M].reshape(B, S, D)


def init_weights(key, d):
    """PyTorch-style Linear weights (out_features, in_features), bias-free."""
    ks = jax.random.split(key, 8)

    def lin_w(k, in_f, out_f):
        s = float(in_f) ** -0.5
        return jax.random.uniform(k, (out_f, in_f), jnp.float32, -s, s)

    return {
        "Wz1": lin_w(ks[0], d, d),
        "Wt1": lin_w(ks[1], d, d),
        "Wz2": lin_w(ks[2], 2 * d, d),
        "Wt2": lin_w(ks[3], d, d),
        "Wz3": lin_w(ks[4], 3 * d, d),
        "Wt3": lin_w(ks[5], d, d),
        "Wz4": lin_w(ks[6], 4 * d, d),
        "Wt4": lin_w(ks[7], d, d),
    }


def gmu_reference(x, c1, c2, c3, w):
    """Pure-JAX f32 reference mirroring the PyTorch forward exactly."""
    lin = lambda a, W: a @ W.T
    z1 = jax.nn.sigmoid(lin(x, w["Wz1"]))
    h1 = jnp.tanh(lin(x, w["Wt1"]))
    z2 = jax.nn.sigmoid(lin(jnp.concatenate([x, c1], axis=2), w["Wz2"]))
    h2 = jnp.tanh(lin(c1, w["Wt2"]))
    z3 = jax.nn.sigmoid(lin(jnp.concatenate([x, c1, c2], axis=2), w["Wz3"]))
    h3 = jnp.tanh(lin(c2, w["Wt3"]))
    z4 = jax.nn.sigmoid(lin(jnp.concatenate([x, c1, c2, c3], axis=2), w["Wz4"]))
    h4 = jnp.tanh(lin(c3, w["Wt4"]))
    return h1 * z1 + h2 * z2 + h3 * z3 + h4 * z4


if __name__ == "__main__":
    D = 128          # hp.compute_dim (lane-aligned)
    B, S = 4, 128    # small demo shapes; M = B*S = 512 -> single grid tile

    key = jax.random.PRNGKey(0)
    kx, k1, k2, k3, kw = jax.random.split(key, 5)
    x = jax.random.normal(kx, (B, S, D), jnp.float32)
    c1 = jax.random.normal(k1, (B, S, D), jnp.float32)
    c2 = jax.random.normal(k2, (B, S, D), jnp.float32)
    c3 = jax.random.normal(k3, (B, S, D), jnp.float32)
    weights = init_weights(kw, D)

    out = gmu_forward(x, c1, c2, c3, weights)
    jax.block_until_ready(out)

    ref = gmu_reference(x, c1, c2, c3, weights)
    assert out.shape == (B, S, D)
    max_err = float(jnp.max(jnp.abs(out - ref)))
    # bf16 MXU operands with f32 accumulation -> loosened tolerance vs f32 reference
    assert jnp.allclose(out, ref, rtol=3e-2, atol=3e-2), max_err

    print("KERNEL_OK")
</pallas_src>

<mosaic_0001>
module attributes {stable_mosaic.version = 11 : i64} {
  func.func @_gmu_kernel(%arg0: i32, %arg1: memref<512x128xf32, #tpu.memory_space<vmem>>, %arg2: memref<512x128xf32, #tpu.memory_space<vmem>>, %arg3: memref<512x128xf32, #tpu.memory_space<vmem>>, %arg4: memref<512x128xf32, #tpu.memory_space<vmem>>, %arg5: memref<128x640xbf16, #tpu.memory_space<vmem>>, %arg6: memref<128x512xbf16, #tpu.memory_space<vmem>>, %arg7: memref<128x384xbf16, #tpu.memory_space<vmem>>, %arg8: memref<128x256xbf16, #tpu.memory_space<vmem>>, %arg9: memref<512x128xf32, #tpu.memory_space<vmem>>) attributes {dimension_semantics = [#tpu.dimension_semantics<parallel>], iteration_bounds = array<i64: 1>, scalar_prefetch = 0 : i64, scratch_operands = 0 : i64, tpu.core_type = #tpu.core_type<tc>, window_params = [{transform_indices = @transform_0, window_bounds = array<i64: 512, 128>}, {transform_indices = @transform_1, window_bounds = array<i64: 512, 128>}, {transform_indices = @transform_2, window_bounds = array<i64: 512, 128>}, {transform_indices = @transform_3, window_bounds = array<i64: 512, 128>}, {pipeline_mode = #tpu.pipeline_mode<synchronous>, transform_indices = @transform_4, window_bounds = array<i64: 128, 640>}, {pipeline_mode = #tpu.pipeline_mode<synchronous>, transform_indices = @transform_5, window_bounds = array<i64: 128, 512>}, {pipeline_mode = #tpu.pipeline_mode<synchronous>, transform_indices = @transform_6, window_bounds = array<i64: 128, 384>}, {pipeline_mode = #tpu.pipeline_mode<synchronous>, transform_indices = @transform_7, window_bounds = array<i64: 128, 256>}, {transform_indices = @transform_8, window_bounds = array<i64: 512, 128>}]} {
    %c0 = arith.constant 0 : index
    %c0_0 = arith.constant 0 : index
    %0 = vector.load %arg1[%c0, %c0_0] : memref<512x128xf32, #tpu.memory_space<vmem>>, vector<512x128xf32>
    %1 = arith.truncf %0 : vector<512x128xf32> to vector<512x128xbf16>
    %c0_1 = arith.constant 0 : index
    %c0_2 = arith.constant 0 : index
    %2 = vector.load %arg2[%c0_1, %c0_2] : memref<512x128xf32, #tpu.memory_space<vmem>>, vector<512x128xf32>
    %3 = arith.truncf %2 : vector<512x128xf32> to vector<512x128xbf16>
    %c0_3 = arith.constant 0 : index
    %c0_4 = arith.constant 0 : index
    %4 = vector.load %arg3[%c0_3, %c0_4] : memref<512x128xf32, #tpu.memory_space<vmem>>, vector<512x128xf32>
    %5 = arith.truncf %4 : vector<512x128xf32> to vector<512x128xbf16>
    %c0_5 = arith.constant 0 : index
    %c0_6 = arith.constant 0 : index
    %6 = vector.load %arg4[%c0_5, %c0_6] : memref<512x128xf32, #tpu.memory_space<vmem>>, vector<512x128xf32>
    %7 = arith.truncf %6 : vector<512x128xf32> to vector<512x128xbf16>
    %c0_7 = arith.constant 0 : index
    %c0_8 = arith.constant 0 : index
    %8 = vector.load %arg5[%c0_7, %c0_8] : memref<128x640xbf16, #tpu.memory_space<vmem>>, vector<128x640xbf16>
    %cst = arith.constant dense<0.000000e+00> : vector<512x640xf32>
    %9 = tpu.matmul %1, %8, %cst {dimension_numbers = #tpu.dot_dimension_numbers<[1], [0], [0], [1], [0, 0, 1, 1], [], []>} : vector<512x128xbf16>, vector<128x640xbf16>, vector<512x640xf32> -> vector<512x640xf32>
    %c0_9 = arith.constant 0 : index
    %c0_10 = arith.constant 0 : index
    %10 = vector.load %arg6[%c0_9, %c0_10] : memref<128x512xbf16, #tpu.memory_space<vmem>>, vector<128x512xbf16>
    %cst_11 = arith.constant dense<0.000000e+00> : vector<512x512xf32>
    %11 = tpu.matmul %3, %10, %cst_11 {dimension_numbers = #tpu.dot_dimension_numbers<[1], [0], [0], [1], [0, 0, 1, 1], [], []>} : vector<512x128xbf16>, vector<128x512xbf16>, vector<512x512xf32> -> vector<512x512xf32>
    %c0_12 = arith.constant 0 : index
    %c0_13 = arith.constant 0 : index
    %12 = vector.load %arg7[%c0_12, %c0_13] : memref<128x384xbf16, #tpu.memory_space<vmem>>, vector<128x384xbf16>
    %cst_14 = arith.constant dense<0.000000e+00> : vector<512x384xf32>
    %13 = tpu.matmul %5, %12, %cst_14 {dimension_numbers = #tpu.dot_dimension_numbers<[1], [0], [0], [1], [0, 0, 1, 1], [], []>} : vector<512x128xbf16>, vector<128x384xbf16>, vector<512x384xf32> -> vector<512x384xf32>
    %c0_15 = arith.constant 0 : index
    %c0_16 = arith.constant 0 : index
    %14 = vector.load %arg8[%c0_15, %c0_16] : memref<128x256xbf16, #tpu.memory_space<vmem>>, vector<128x256xbf16>
    %cst_17 = arith.constant dense<0.000000e+00> : vector<512x256xf32>
    %15 = tpu.matmul %7, %14, %cst_17 {dimension_numbers = #tpu.dot_dimension_numbers<[1], [0], [0], [1], [0, 0, 1, 1], [], []>} : vector<512x128xbf16>, vector<128x256xbf16>, vector<512x256xf32> -> vector<512x256xf32>
    %16 = vector.extract_strided_slice %9 {offsets = [0, 0], sizes = [512, 128], strides = [1, 1]} : vector<512x640xf32> to vector<512x128xf32>
    %cst_18 = arith.constant 5.000000e-01 : f32
    %17 = vector.broadcast %cst_18 : f32 to vector<512x128xf32>
    %18 = arith.mulf %17, %16 : vector<512x128xf32>
    %19 = math.tanh %18 : vector<512x128xf32>
    %cst_19 = arith.constant 1.000000e+00 : f32
    %20 = vector.broadcast %cst_19 : f32 to vector<512x128xf32>
    %21 = arith.addf %19, %20 : vector<512x128xf32>
    %cst_20 = arith.constant 5.000000e-01 : f32
    %22 = vector.broadcast %cst_20 : f32 to vector<512x128xf32>
    %23 = arith.mulf %22, %21 : vector<512x128xf32>
    %24 = vector.extract_strided_slice %9 {offsets = [0, 128], sizes = [512, 128], strides = [1, 1]} : vector<512x640xf32> to vector<512x128xf32>
    %25 = vector.extract_strided_slice %11 {offsets = [0, 0], sizes = [512, 128], strides = [1, 1]} : vector<512x512xf32> to vector<512x128xf32>
    %26 = arith.addf %24, %25 : vector<512x128xf32>
    %cst_21 = arith.constant 5.000000e-01 : f32
    %27 = vector.broadcast %cst_21 : f32 to vector<512x128xf32>
    %28 = arith.mulf %27, %26 : vector<512x128xf32>
    %29 = math.tanh %28 : vector<512x128xf32>
    %cst_22 = arith.constant 1.000000e+00 : f32
    %30 = vector.broadcast %cst_22 : f32 to vector<512x128xf32>
    %31 = arith.addf %29, %30 : vector<512x128xf32>
    %cst_23 = arith.constant 5.000000e-01 : f32
    %32 = vector.broadcast %cst_23 : f32 to vector<512x128xf32>
    %33 = arith.mulf %32, %31 : vector<512x128xf32>
    %34 = vector.extract_strided_slice %9 {offsets = [0, 256], sizes = [512, 128], strides = [1, 1]} : vector<512x640xf32> to vector<512x128xf32>
    %35 = vector.extract_strided_slice %11 {offsets = [0, 128], sizes = [512, 128], strides = [1, 1]} : vector<512x512xf32> to vector<512x128xf32>
    %36 = arith.addf %34, %35 : vector<512x128xf32>
    %37 = vector.extract_strided_slice %13 {offsets = [0, 0], sizes = [512, 128], strides = [1, 1]} : vector<512x384xf32> to vector<512x128xf32>
    %38 = arith.addf %36, %37 : vector<512x128xf32>
    %cst_24 = arith.constant 5.000000e-01 : f32
    %39 = vector.broadcast %cst_24 : f32 to vector<512x128xf32>
    %40 = arith.mulf %39, %38 : vector<512x128xf32>
    %41 = math.tanh %40 : vector<512x128xf32>
    %cst_25 = arith.constant 1.000000e+00 : f32
    %42 = vector.broadcast %cst_25 : f32 to vector<512x128xf32>
    %43 = arith.addf %41, %42 : vector<512x128xf32>
    %cst_26 = arith.constant 5.000000e-01 : f32
    %44 = vector.broadcast %cst_26 : f32 to vector<512x128xf32>
    %45 = arith.mulf %44, %43 : vector<512x128xf32>
    %46 = vector.extract_strided_slice %9 {offsets = [0, 384], sizes = [512, 128], strides = [1, 1]} : vector<512x640xf32> to vector<512x128xf32>
    %47 = vector.extract_strided_slice %11 {offsets = [0, 256], sizes = [512, 128], strides = [1, 1]} : vector<512x512xf32> to vector<512x128xf32>
    %48 = arith.addf %46, %47 : vector<512x128xf32>
    %49 = vector.extract_strided_slice %13 {offsets = [0, 128], sizes = [512, 128], strides = [1, 1]} : vector<512x384xf32> to vector<512x128xf32>
    %50 = arith.addf %48, %49 : vector<512x128xf32>
    %51 = vector.extract_strided_slice %15 {offsets = [0, 0], sizes = [512, 128], strides = [1, 1]} : vector<512x256xf32> to vector<512x128xf32>
    %52 = arith.addf %50, %51 : vector<512x128xf32>
    %cst_27 = arith.constant 5.000000e-01 : f32
    %53 = vector.broadcast %cst_27 : f32 to vector<512x128xf32>
    %54 = arith.mulf %53, %52 : vector<512x128xf32>
    %55 = math.tanh %54 : vector<512x128xf32>
    %cst_28 = arith.constant 1.000000e+00 : f32
    %56 = vector.broadcast %cst_28 : f32 to vector<512x128xf32>
    %57 = arith.addf %55, %56 : vector<512x128xf32>
    %cst_29 = arith.constant 5.000000e-01 : f32
    %58 = vector.broadcast %cst_29 : f32 to vector<512x128xf32>
    %59 = arith.mulf %58, %57 : vector<512x128xf32>
    %60 = vector.extract_strided_slice %9 {offsets = [0, 512], sizes = [512, 128], strides = [1, 1]} : vector<512x640xf32> to vector<512x128xf32>
    %61 = math.tanh %60 : vector<512x128xf32>
    %62 = vector.extract_strided_slice %11 {offsets = [0, 384], sizes = [512, 128], strides = [1, 1]} : vector<512x512xf32> to vector<512x128xf32>
    %63 = math.tanh %62 : vector<512x128xf32>
    %64 = vector.extract_strided_slice %13 {offsets = [0, 256], sizes = [512, 128], strides = [1, 1]} : vector<512x384xf32> to vector<512x128xf32>
    %65 = math.tanh %64 : vector<512x128xf32>
    %66 = vector.extract_strided_slice %15 {offsets = [0, 128], sizes = [512, 128], strides = [1, 1]} : vector<512x256xf32> to vector<512x128xf32>
    %67 = math.tanh %66 : vector<512x128xf32>
    %68 = arith.mulf %61, %23 : vector<512x128xf32>
    %69 = arith.mulf %63, %33 : vector<512x128xf32>
    %70 = arith.addf %68, %69 : vector<512x128xf32>
    %71 = arith.mulf %65, %45 : vector<512x128xf32>
    %72 = arith.addf %70, %71 : vector<512x128xf32>
    %73 = arith.mulf %67, %59 : vector<512x128xf32>
    %74 = arith.addf %72, %73 : vector<512x128xf32>
    %c0_30 = arith.constant 0 : index
    %c0_31 = arith.constant 0 : index
    %75 = vector.load %arg9[%c0_30, %c0_31] : memref<512x128xf32, #tpu.memory_space<vmem>>, vector<512x128xf32>
    tpu.vector_store %arg9[%c0_30, %c0_31], %74 {strides = array<i32>} : memref<512x128xf32, #tpu.memory_space<vmem>>, vector<512x128xf32>,
    return
  }
  func.func @transform_0(%arg0: i32) -> (i32, i32) {
    %c0_i32 = arith.constant 0 : i32
    %c0_i32_0 = arith.constant 0 : i32
    return %arg0, %c0_i32 : i32, i32
  }
  func.func @transform_1(%arg0: i32) -> (i32, i32) {
    %c0_i32 = arith.constant 0 : i32
    %c0_i32_0 = arith.constant 0 : i32
    return %arg0, %c0_i32 : i32, i32
  }
  func.func @transform_2(%arg0: i32) -> (i32, i32) {
    %c0_i32 = arith.constant 0 : i32
    %c0_i32_0 = arith.constant 0 : i32
    return %arg0, %c0_i32 : i32, i32
  }
  func.func @transform_3(%arg0: i32) -> (i32, i32) {
    %c0_i32 = arith.constant 0 : i32
    %c0_i32_0 = arith.constant 0 : i32
    return %arg0, %c0_i32 : i32, i32
  }
  func.func @transform_4(%arg0: i32) -> (i32, i32) {
    %c0_i32 = arith.constant 0 : i32
    %c0_i32_0 = arith.constant 0 : i32
    %c0_i32_1 = arith.constant 0 : i32
    return %c0_i32, %c0_i32_0 : i32, i32
  }
  func.func @transform_5(%arg0: i32) -> (i32, i32) {
    %c0_i32 = arith.constant 0 : i32
    %c0_i32_0 = arith.constant 0 : i32
    %c0_i32_1 = arith.constant 0 : i32
    return %c0_i32, %c0_i32_0 : i32, i32
  }
  func.func @transform_6(%arg0: i32) -> (i32, i32) {
    %c0_i32 = arith.constant 0 : i32
    %c0_i32_0 = arith.constant 0 : i32
    %c0_i32_1 = arith.constant 0 : i32
    return %c0_i32, %c0_i32_0 : i32, i32
  }
  func.func @transform_7(%arg0: i32) -> (i32, i32) {
    %c0_i32 = arith.constant 0 : i32
    %c0_i32_0 = arith.constant 0 : i32
    %c0_i32_1 = arith.constant 0 : i32
    return %c0_i32, %c0_i32_0 : i32, i32
  }
  func.func @transform_8(%arg0: i32) -> (i32, i32) {
    %c0_i32 = arith.constant 0 : i32
    %c0_i32_0 = arith.constant 0 : i32
    return %arg0, %c0_i32 : i32, i32
  }
}

</mosaic_0001>

<llo_original>
// kernel: tpu_custom_call.1
$region0: #{tpu_custom_call.1}
  #allocation0 [shape = 'u32[]', space=smem, size = 0x4, offset = 0x4, fixed_abs, tag = 'smem constant byte address 0x4 - core index']
  #allocation1 [shape = 'u32[144,128]{1,0:T(1,128)}', space=vmem, size = 0x12000, scoped, tag = 'internal scratch']
  %s0 = inlined_call_operand.hbm [shape: f32[512,128], index: 0, kind: input, shape index: {}]
  %s1 = inlined_call_operand.hbm [shape: f32[512,128], index: 1, kind: input, shape index: {}]
  %s2 = inlined_call_operand.hbm [shape: f32[512,128], index: 2, kind: input, shape index: {}]
  %s3 = inlined_call_operand.hbm [shape: f32[512,128], index: 3, kind: input, shape index: {}]
  %s4 = inlined_call_operand.hbm [shape: bf16[128,640], index: 4, kind: input, shape index: {}]
  %s5 = inlined_call_operand.hbm [shape: bf16[128,512], index: 5, kind: input, shape index: {}]
  %s6 = inlined_call_operand.hbm [shape: bf16[128,384], index: 6, kind: input, shape index: {}]
  %s7 = inlined_call_operand.hbm [shape: bf16[128,256], index: 7, kind: input, shape index: {}]
  %s8 = inlined_call_operand.hbm [shape: f32[512,128], index: 8, kind: output, shape index: {}]
  %s9 = sld [smem:[#allocation0]]
  $region74: #{tpu_custom_call.1} parent=0
    _
  %s11 = ssub.s32 1, %s9
  %s12 = scalar_select 0, %s11, %s9
  $region1: #{tpu_custom_call.1} parent=0
    #allocation2 [shape = 'u8[262144]{0}', space=vmem, size = 0x40000, scoped, tag = 'input window, operand 0, single buffered']
    #allocation3 [shape = 's32[1]{0}', space=sflag, size = 0x4, scoped, tag = 'scoped memory for tpu_custom_call.1']
    #allocation4 [shape = 's32[1]{0}', space=sflag, size = 0x4, scoped, tag = 'scoped memory for tpu_custom_call.1']
    #allocation5 [shape = 'u8[262144]{0}', space=vmem, size = 0x40000, scoped, tag = 'input window, operand 1, single buffered']
    #allocation6 [shape = 's32[1]{0}', space=sflag, size = 0x4, scoped, tag = 'scoped memory for tpu_custom_call.1']
    #allocation7 [shape = 'u8[262144]{0}', space=vmem, size = 0x40000, scoped, tag = 'input window, operand 2, single buffered']
    #allocation8 [shape = 'u8[262144]{0}', space=vmem, size = 0x40000, scoped, tag = 'input window, operand 3, single buffered']
    #allocation9 [shape = 's32[1]{0}', space=sflag, size = 0x4, scoped, tag = 'scoped memory for tpu_custom_call.1']
    #allocation10 [shape = 'u8[163840]{0}', space=vmem, size = 0x28000, scoped, tag = 'input window, operand 4, single buffered']
    #allocation11 [shape = 'u8[131072]{0}', space=vmem, size = 0x20000, scoped, tag = 'input window, operand 5, single buffered']
    #allocation12 [shape = 's32[1]{0}', space=sflag, size = 0x4, scoped, tag = 'scoped memory for tpu_custom_call.1']
    #allocation13 [shape = 'u8[98304]{0}', space=vmem, size = 0x18000, scoped, tag = 'input window, operand 6, single buffered']
    #allocation14 [shape = 'u8[65536]{0}', space=vmem, size = 0x10000, scoped, tag = 'input window, operand 7, single buffered']
    #allocation15 [shape = 's32[1]{0}', space=sflag, size = 0x4, scoped, tag = 'scoped memory for tpu_custom_call.1']
    #allocation16 [shape = 'u8[262144]{0}', space=vmem, size = 0x40000, scoped, tag = 'output window, operand 0, single buffered']
    %13 = vsyncpa [#allocation3], 0
    %14 = vsyncpa [#allocation6], 0
    %15 = vsyncpa [#allocation9], 0
    %16 = vsyncpa [#allocation12], 0
    %17 = vsyncpa [#allocation15], 0
    %18 = vsyncpa [#allocation4], 0
    // Predicated region
    $region2: #{tpu_custom_call.1} parent=1 // pred_check
      _
    $region3: #{tpu_custom_call.1} parent=1 // pred_check_branch
      %20 = sbr.rel (0) target = $region5
    $region4: #{tpu_custom_call.1} parent=1 // pred_region
      %s22 = ssub.s32 8192, 8192
      %23 = vsyncadd [#allocation3], %s22
      %s24 = sshll.u32 [#allocation2], 4
      %s25 = int_to_ptr.vmem [resolvable:$true] %s24
      %30 = dma.hbm_to_vmem [thread:$0]  %s0, 8192, %s25, [#allocation3], 128, 128, 8
    $region5: #{tpu_custom_call.1} parent=1 // pred_fallthru
      _
    // Predicated region
    $region6: #{tpu_custom_call.1} parent=1 // pred_check
      _
    $region7: #{tpu_custom_call.1} parent=1 // pred_check_branch
      %32 = sbr.rel (0) target = $region9
    $region8: #{tpu_custom_call.1} parent=1 // pred_region
      %s34 = ssub.s32 8192, 8192
      %35 = vsyncadd [#allocation6], %s34
      %s36 = sshll.u32 [#allocation5], 4
      %s37 = int_to_ptr.vmem [resolvable:$true] %s36
      %42 = dma.hbm_to_vmem [thread:$0]  %s1, 8192, %s37, [#allocation6], 128, 128, 8
    $region9: #{tpu_custom_call.1} parent=1 // pred_fallthru
      _
    // Predicated region
    $region10: #{tpu_custom_call.1} parent=1 // pred_check
      _
    $region11: #{tpu_custom_call.1} parent=1 // pred_check_branch
      %44 = sbr.rel (0) target = $region13
    $region12: #{tpu_custom_call.1} parent=1 // pred_region
      %s46 = ssub.s32 8192, 8192
      %47 = vsyncadd [#allocation6], %s46
      %s48 = sshll.u32 [#allocation7], 4
      %s49 = int_to_ptr.vmem [resolvable:$true] %s48
      %54 = dma.hbm_to_vmem [thread:$0]  %s2, 8192, %s49, [#allocation6], 128, 128, 8
    $region13: #{tpu_custom_call.1} parent=1 // pred_fallthru
      _
    // Predicated region
    $region14: #{tpu_custom_call.1} parent=1 // pred_check
      _
    $region15: #{tpu_custom_call.1} parent=1 // pred_check_branch
      %56 = sbr.rel (0) target = $region17
    $region16: #{tpu_custom_call.1} parent=1 // pred_region
      %s58 = ssub.s32 8192, 8192
      %59 = vsyncadd [#allocation9], %s58
      %s60 = sshll.u32 [#allocation8], 4
      %s61 = int_to_ptr.vmem [resolvable:$true] %s60
      %66 = dma.hbm_to_vmem [thread:$0]  %s3, 8192, %s61, [#allocation9], 128, 128, 8
    $region17: #{tpu_custom_call.1} parent=1 // pred_fallthru
      _
    // Predicated region
    $region18: #{tpu_custom_call.1} parent=1 // pred_check
      _
    $region19: #{tpu_custom_call.1} parent=1 // pred_check_branch
      %68 = sbr.rel (0) target = $region21
    $region20: #{tpu_custom_call.1} parent=1 // pred_region
      %s70 = ssub.s32 5120, 5120
      %71 = vsyncadd [#allocation9], %s70
      %s72 = sshll.u32 [#allocation10], 4
      %s73 = int_to_ptr.vmem [resolvable:$true] %s72
      %78 = dma.hbm_to_vmem [thread:$0]  %s4, 5120, %s73, [#allocation9], 320, 320, 20
    $region21: #{tpu_custom_call.1} parent=1 // pred_fallthru
      _
    // Predicated region
    $region22: #{tpu_custom_call.1} parent=1 // pred_check
      _
    $region23: #{tpu_custom_call.1} parent=1 // pred_check_branch
      %80 = sbr.rel (0) target = $region25
    $region24: #{tpu_custom_call.1} parent=1 // pred_region
      %s82 = ssub.s32 4096, 4096
      %83 = vsyncadd [#allocation12], %s82
      %s84 = sshll.u32 [#allocation11], 4
      %s85 = int_to_ptr.vmem [resolvable:$true] %s84
      %90 = dma.hbm_to_vmem [thread:$0]  %s5, 4096, %s85, [#allocation12], 256, 256, 16
    $region25: #{tpu_custom_call.1} parent=1 // pred_fallthru
      _
    // Predicated region
    $region26: #{tpu_custom_call.1} parent=1 // pred_check
      _
    $region27: #{tpu_custom_call.1} parent=1 // pred_check_branch
      %92 = sbr.rel (0) target = $region29
    $region28: #{tpu_custom_call.1} parent=1 // pred_region
      %s94 = ssub.s32 3072, 3072
      %95 = vsyncadd [#allocation12], %s94
      %s96 = sshll.u32 [#allocation13], 4
      %s97 = int_to_ptr.vmem [resolvable:$true] %s96
      %102 = dma.hbm_to_vmem [thread:$0]  %s6, 3072, %s97, [#allocation12], 192, 192, 12
    $region29: #{tpu_custom_call.1} parent=1 // pred_fallthru
      _
    // Predicated region
    $region30: #{tpu_custom_call.1} parent=1 // pred_check
      _
    $region31: #{tpu_custom_call.1} parent=1 // pred_check_branch
      %104 = sbr.rel (0) target = $region33
    $region32: #{tpu_custom_call.1} parent=1 // pred_region
      %s106 = ssub.s32 2048, 2048
      %107 = vsyncadd [#allocation15], %s106
      %s108 = sshll.u32 [#allocation14], 4
      %s109 = int_to_ptr.vmem [resolvable:$true] %s108
      %114 = dma.hbm_to_vmem [thread:$0]  %s7, 2048, %s109, [#allocation15], 128, 128, 8
    $region33: #{tpu_custom_call.1} parent=1 // pred_fallthru
      _
    // Predicated region
    $region34: #{tpu_custom_call.1} parent=1 // pred_check
      _
    $region35: #{tpu_custom_call.1} parent=1 // pred_check_branch
      %116 = sbr.rel (0) target = $region37
    $region36: #{tpu_custom_call.1} parent=1 // pred_region
      %117 = dma.done [#allocation3], 8192
    $region37: #{tpu_custom_call.1} parent=1 // pred_fallthru
      _
    // Predicated region
    $region38: #{tpu_custom_call.1} parent=1 // pred_check
      _
    $region39: #{tpu_custom_call.1} parent=1 // pred_check_branch
      %119 = sbr.rel (0) target = $region41
    $region40: #{tpu_custom_call.1} parent=1 // pred_region
      %120 = dma.done [#allocation6], 8192
    $region41: #{tpu_custom_call.1} parent=1 // pred_fallthru
      _
    // Predicated region
    $region42: #{tpu_custom_call.1} parent=1 // pred_check
      _
    $region43: #{tpu_custom_call.1} parent=1 // pred_check_branch
      %122 = sbr.rel (0) target = $region45
    $region44: #{tpu_custom_call.1} parent=1 // pred_region
      %123 = dma.done [#allocation6], 8192
    $region45: #{tpu_custom_call.1} parent=1 // pred_fallthru
      _
    // Predicated region
    $region46: #{tpu_custom_call.1} parent=1 // pred_check
      _
    $region47: #{tpu_custom_call.1} parent=1 // pred_check_branch
      %125 = sbr.rel (0) target = $region49
    $region48: #{tpu_custom_call.1} parent=1 // pred_region
      %126 = dma.done [#allocation9], 8192
    $region49: #{tpu_custom_call.1} parent=1 // pred_fallthru
      _
    // Predicated region
    $region50: #{tpu_custom_call.1} parent=1 // pred_check
      _
    $region51: #{tpu_custom_call.1} parent=1 // pred_check_branch
      %128 = sbr.rel (0) target = $region53
    $region52: #{tpu_custom_call.1} parent=1 // pred_region
      %129 = dma.done [#allocation9], 5120
    $region53: #{tpu_custom_call.1} parent=1 // pred_fallthru
      _
    // Predicated region
    $region54: #{tpu_custom_call.1} parent=1 // pred_check
      _
    $region55: #{tpu_custom_call.1} parent=1 // pred_check_branch
      %131 = sbr.rel (0) target = $region57
    $region56: #{tpu_custom_call.1} parent=1 // pred_region
      %132 = dma.done [#allocation12], 4096
    $region57: #{tpu_custom_call.1} parent=1 // pred_fallthru
      _
    // Predicated region
    $region58: #{tpu_custom_call.1} parent=1 // pred_check
      _
    $region59: #{tpu_custom_call.1} parent=1 // pred_check_branch
      %134 = sbr.rel (0) target = $region61
    $region60: #{tpu_custom_call.1} parent=1 // pred_region
      %135 = dma.done [#allocation12], 3072
    $region61: #{tpu_custom_call.1} parent=1 // pred_fallthru
      _
    // Predicated region
    $region62: #{tpu_custom_call.1} parent=1 // pred_check
      _
    $region63: #{tpu_custom_call.1} parent=1 // pred_check_branch
      %137 = sbr.rel (0) target = $region65
    $region64: #{tpu_custom_call.1} parent=1 // pred_region
      %138 = dma.done [#allocation15], 2048
    $region65: #{tpu_custom_call.1} parent=1 // pred_fallthru
      _
    %v140 = vld [vmem:[#allocation2] sm:$0xff]
    %v141 = vld [vmem:[#allocation2 + $0x8] sm:$0xff]
    %v142 = vld [vmem:[#allocation2 + $0x10] sm:$0xff]
    %v143 = vld [vmem:[#allocation2 + $0x18] sm:$0xff]
    %v144 = vld [vmem:[#allocation2 + $0x20] sm:$0xff]
    %v145 = vld [vmem:[#allocation2 + $0x28] sm:$0xff]
    %v146 = vld [vmem:[#allocation2 + $0x30] sm:$0xff]
    %v147 = vld [vmem:[#allocation2 + $0x38] sm:$0xff]
    %v148 = vld [vmem:[#allocation2 + $0x40] sm:$0xff]
    %v149 = vld [vmem:[#allocation2 + $0x48] sm:$0xff]
    %v150 = vld [vmem:[#allocation2 + $0x50] sm:$0xff]
    %v151 = vld [vmem:[#allocation2 + $0x58] sm:$0xff]
    %v152 = vld [vmem:[#allocation2 + $0x60] sm:$0xff]
    %v153 = vld [vmem:[#allocation2 + $0x68] sm:$0xff]
    %v154 = vld [vmem:[#allocation2 + $0x70] sm:$0xff]
    %v155 = vld [vmem:[#allocation2 + $0x78] sm:$0xff]
    %v156 = vld [vmem:[#allocation2 + $0x80] sm:$0xff]
    %v157 = vld [vmem:[#allocation2 + $0x88] sm:$0xff]
    %v158 = vld [vmem:[#allocation2 + $0x90] sm:$0xff]
    %v159 = vld [vmem:[#allocation2 + $0x98] sm:$0xff]
    %v160 = vld [vmem:[#allocation2 + $0xa0] sm:$0xff]
    %v161 = vld [vmem:[#allocation2 + $0xa8] sm:$0xff]
    %v162 = vld [vmem:[#allocation2 + $0xb0] sm:$0xff]
    %v163 = vld [vmem:[#allocation2 + $0xb8] sm:$0xff]
    %v164 = vld [vmem:[#allocation2 + $0xc0] sm:$0xff]
    %v165 = vld [vmem:[#allocation2 + $0xc8] sm:$0xff]
    %v166 = vld [vmem:[#allocation2 + $0xd0] sm:$0xff]
    %v167 = vld [vmem:[#allocation2 + $0xd8] sm:$0xff]
    %v168 = vld [vmem:[#allocation2 + $0xe0] sm:$0xff]
    %v169 = vld [vmem:[#allocation2 + $0xe8] sm:$0xff]
    %v170 = vld [vmem:[#allocation2 + $0xf0] sm:$0xff]
    %v171 = vld [vmem:[#allocation2 + $0xf8] sm:$0xff]
    %v172 = vld [vmem:[#allocation2 + $0x100] sm:$0xff]
    %v173 = vld [vmem:[#allocation2 + $0x108] sm:$0xff]
    %v174 = vld [vmem:[#allocation2 + $0x110] sm:$0xff]
    %v175 = vld [vmem:[#allocation2 + $0x118] sm:$0xff]
    %v176 = vld [vmem:[#allocation2 + $0x120] sm:$0xff]
    %v177 = vld [vmem:[#allocation2 + $0x128] sm:$0xff]
    %v178 = vld [vmem:[#allocation2 + $0x130] sm:$0xff]
    %v179 = vld [vmem:[#allocation2 + $0x138] sm:$0xff]
    %v180 = vld [vmem:[#allocation2 + $0x140] sm:$0xff]
    %v181 = vld [vmem:[#allocation2 + $0x148] sm:$0xff]
    %v182 = vld [vmem:[#allocation2 + $0x150] sm:$0xff]
    %v183 = vld [vmem:[#allocation2 + $0x158] sm:$0xff]
    %v184 = vld [vmem:[#allocation2 + $0x160] sm:$0xff]
    %v185 = vld [vmem:[#allocation2 + $0x168] sm:$0xff]
    %v186 = vld [vmem:[#allocation2 + $0x170] sm:$0xff]
    %v187 = vld [vmem:[#allocation2 + $0x178] sm:$0xff]
    %v188 = vld [vmem:[#allocation2 + $0x180] sm:$0xff]
    %v189 = vld [vmem:[#allocation2 + $0x188] sm:$0xff]
    %v190 = vld [vmem:[#allocation2 + $0x190] sm:$0xff]
    %v191 = vld [vmem:[#allocation2 + $0x198] sm:$0xff]
    %v192 = vld [vmem:[#allocation2 + $0x1a0] sm:$0xff]
    %v193 = vld [vmem:[#allocation2 + $0x1a8] sm:$0xff]
    %v194 = vld [vmem:[#allocation2 + $0x1b0] sm:$0xff]
    %v195 = vld [vmem:[#allocation2 + $0x1b8] sm:$0xff]
    %v196 = vld [vmem:[#allocation2 + $0x1c0] sm:$0xff]
    %v197 = vld [vmem:[#allocation2 + $0x1c8] sm:$0xff]
    %v198 = vld [vmem:[#allocation2 + $0x1d0] sm:$0xff]
    %v199 = vld [vmem:[#allocation2 + $0x1d8] sm:$0xff]
    %v200 = vld [vmem:[#allocation2 + $0x1e0] sm:$0xff]
    %v201 = vld [vmem:[#allocation2 + $0x1e8] sm:$0xff]
    %v202 = vld [vmem:[#allocation2 + $0x1f0] sm:$0xff]
    %v203 = vld [vmem:[#allocation2 + $0x1f8] sm:$0xff]
    %v204 = vpack.c.bf16 %v141, %v140
    %v205 = vpack.c.bf16 %v143, %v142
    %v206 = vpack.c.bf16 %v145, %v144
    %v207 = vpack.c.bf16 %v147, %v146
    %v208 = vpack.c.bf16 %v149, %v148
    %v209 = vpack.c.bf16 %v151, %v150
    %v210 = vpack.c.bf16 %v153, %v152
    %v211 = vpack.c.bf16 %v155, %v154
    %v212 = vpack.c.bf16 %v157, %v156
    %v213 = vpack.c.bf16 %v159, %v158
    %v214 = vpack.c.bf16 %v161, %v160
    %v215 = vpack.c.bf16 %v163, %v162
    %v216 = vpack.c.bf16 %v165, %v164
    %v217 = vpack.c.bf16 %v167, %v166
    %v218 = vpack.c.bf16 %v169, %v168
    %v219 = vpack.c.bf16 %v171, %v170
    %v220 = vpack.c.bf16 %v173, %v172
    %v221 = vpack.c.bf16 %v175, %v174
    %v222 = vpack.c.bf16 %v177, %v176
    %v223 = vpack.c.bf16 %v179, %v178
    %v224 = vpack.c.bf16 %v181, %v180
    %v225 = vpack.c.bf16 %v183, %v182
    %v226 = vpack.c.bf16 %v185, %v184
    %v227 = vpack.c.bf16 %v187, %v186
    %v228 = vpack.c.bf16 %v189, %v188
    %v229 = vpack.c.bf16 %v191, %v190
    %v230 = vpack.c.bf16 %v193, %v192
    %v231 = vpack.c.bf16 %v195, %v194
    %v232 = vpack.c.bf16 %v197, %v196
    %v233 = vpack.c.bf16 %v199, %v198
    %v234 = vpack.c.bf16 %v201, %v200
    %v235 = vpack.c.bf16 %v203, %v202
    %v236 = vld [vmem:[#allocation5] sm:$0xff]
    %v237 = vld [vmem:[#allocation5 + $0x8] sm:$0xff]
    %v238 = vld [vmem:[#allocation5 + $0x10] sm:$0xff]
    %v239 = vld [vmem:[#allocation5 + $0x18] sm:$0xff]
    %v240 = vld [vmem:[#allocation5 + $0x20] sm:$0xff]
    %v241 = vld [vmem:[#allocation5 + $0x28] sm:$0xff]
    %v242 = vld [vmem:[#allocation5 + $0x30] sm:$0xff]
    %v243 = vld [vmem:[#allocation5 + $0x38] sm:$0xff]
    %v244 = vld [vmem:[#allocation5 + $0x40] sm:$0xff]
    %v245 = vld [vmem:[#allocation5 + $0x48] sm:$0xff]
    %v246 = vld [vmem:[#allocation5 + $0x50] sm:$0xff]
    %v247 = vld [vmem:[#allocation5 + $0x58] sm:$0xff]
    %v248 = vld [vmem:[#allocation5 + $0x60] sm:$0xff]
    %v249 = vld [vmem:[#allocation5 + $0x68] sm:$0xff]
    %v250 = vld [vmem:[#allocation5 + $0x70] sm:$0xff]
    %v251 = vld [vmem:[#allocation5 + $0x78] sm:$0xff]
    %v252 = vld [vmem:[#allocation5 + $0x80] sm:$0xff]
    %v253 = vld [vmem:[#allocation5 + $0x88] sm:$0xff]
    %v254 = vld [vmem:[#allocation5 + $0x90] sm:$0xff]
    %v255 = vld [vmem:[#allocation5 + $0x98] sm:$0xff]
    %v256 = vld [vmem:[#allocation5 + $0xa0] sm:$0xff]
    %v257 = vld [vmem:[#allocation5 + $0xa8] sm:$0xff]
    %v258 = vld [vmem:[#allocation5 + $0xb0] sm:$0xff]
    %v259 = vld [vmem:[#allocation5 + $0xb8] sm:$0xff]
    %v260 = vld [vmem:[#allocation5 + $0xc0] sm:$0xff]
    %v261 = vld [vmem:[#allocation5 + $0xc8] sm:$0xff]
    %v262 = vld [vmem:[#allocation5 + $0xd0] sm:$0xff]
    %v263 = vld [vmem:[#allocation5 + $0xd8] sm:$0xff]
    %v264 = vld [vmem:[#allocation5 + $0xe0] sm:$0xff]
    %v265 = vld [vmem:[#allocation5 + $0xe8] sm:$0xff]
    %v266 = vld [vmem:[#allocation5 + $0xf0] sm:$0xff]
    %v267 = vld [vmem:[#allocation5 + $0xf8] sm:$0xff]
    %v268 = vld [vmem:[#allocation5 + $0x100] sm:$0xff]
    %v269 = vld [vmem:[#allocation5 + $0x108] sm:$0xff]
    %v270 = vld [vmem:[#allocation5 + $0x110] sm:$0xff]
    %v271 = vld [vmem:[#allocation5 + $0x118] sm:$0xff]
    %v272 = vld [vmem:[#allocation5 + $0x120] sm:$0xff]
    %v273 = vld [vmem:[#allocation5 + $0x128] sm:$0xff]
    %v274 = vld [vmem:[#allocation5 + $0x130] sm:$0xff]
    %v275 = vld [vmem:[#allocation5 + $0x138] sm:$0xff]
    %v276 = vld [vmem:[#allocation5 + $0x140] sm:$0xff]
    %v277 = vld [vmem:[#allocation5 + $0x148] sm:$0xff]
    %v278 = vld [vmem:[#allocation5 + $0x150] sm:$0xff]
    %v279 = vld [vmem:[#allocation5 + $0x158] sm:$0xff]
    %v280 = vld [vmem:[#allocation5 + $0x160] sm:$0xff]
    %v281 = vld [vmem:[#allocation5 + $0x168] sm:$0xff]
    %v282 = vld [vmem:[#allocation5 + $0x170] sm:$0xff]
    %v283 = vld [vmem:[#allocation5 + $0x178] sm:$0xff]
    %v284 = vld [vmem:[#allocation5 + $0x180] sm:$0xff]
    %v285 = vld [vmem:[#allocation5 + $0x188] sm:$0xff]
    %v286 = vld [vmem:[#allocation5 + $0x190] sm:$0xff]
    %v287 = vld [vmem:[#allocation5 + $0x198] sm:$0xff]
    %v288 = vld [vmem:[#allocation5 + $0x1a0] sm:$0xff]
    %v289 = vld [vmem:[#allocation5 + $0x1a8] sm:$0xff]
    %v290 = vld [vmem:[#allocation5 + $0x1b0] sm:$0xff]
    %v291 = vld [vmem:[#allocation5 + $0x1b8] sm:$0xff]
    %v292 = vld [vmem:[#allocation5 + $0x1c0] sm:$0xff]
    %v293 = vld [vmem:[#allocation5 + $0x1c8] sm:$0xff]
    %v294 = vld [vmem:[#allocation5 + $0x1d0] sm:$0xff]
    %v295 = vld [vmem:[#allocation5 + $0x1d8] sm:$0xff]
    %v296 = vld [vmem:[#allocation5 + $0x1e0] sm:$0xff]
    %v297 = vld [vmem:[#allocation5 + $0x1e8] sm:$0xff]
    %v298 = vld [vmem:[#allocation5 + $0x1f0] sm:$0xff]
    %v299 = vld [vmem:[#allocation5 + $0x1f8] sm:$0xff]
    %v300 = vpack.c.bf16 %v237, %v236
    %v301 = vpack.c.bf16 %v239, %v238
    %v302 = vpack.c.bf16 %v241, %v240
    %v303 = vpack.c.bf16 %v243, %v242
    %v304 = vpack.c.bf16 %v245, %v244
    %v305 = vpack.c.bf16 %v247, %v246
    %v306 = vpack.c.bf16 %v249, %v248
    %v307 = vpack.c.bf16 %v251, %v250
    %v308 = vpack.c.bf16 %v253, %v252
    %v309 = vpack.c.bf16 %v255, %v254
    %v310 = vpack.c.bf16 %v257, %v256
    %v311 = vpack.c.bf16 %v259, %v258
    %v312 = vpack.c.bf16 %v261, %v260
    %v313 = vpack.c.bf16 %v263, %v262
    %v314 = vpack.c.bf16 %v265, %v264
    %v315 = vpack.c.bf16 %v267, %v266
    %v316 = vpack.c.bf16 %v269, %v268
    %v317 = vpack.c.bf16 %v271, %v270
    %v318 = vpack.c.bf16 %v273, %v272
    %v319 = vpack.c.bf16 %v275, %v274
    %v320 = vpack.c.bf16 %v277, %v276
    %v321 = vpack.c.bf16 %v279, %v278
    %v322 = vpack.c.bf16 %v281, %v280
    %v323 = vpack.c.bf16 %v283, %v282
    %v324 = vpack.c.bf16 %v285, %v284
    %v325 = vpack.c.bf16 %v287, %v286
    %v326 = vpack.c.bf16 %v289, %v288
    %v327 = vpack.c.bf16 %v291, %v290
    %v328 = vpack.c.bf16 %v293, %v292
    %v329 = vpack.c.bf16 %v295, %v294
    %v330 = vpack.c.bf16 %v297, %v296
    %v331 = vpack.c.bf16 %v299, %v298
    %v332 = vld [vmem:[#allocation7] sm:$0xff]
    %v333 = vld [vmem:[#allocation7 + $0x8] sm:$0xff]
    %v334 = vld [vmem:[#allocation7 + $0x10] sm:$0xff]
    %v335 = vld [vmem:[#allocation7 + $0x18] sm:$0xff]
    %v336 = vld [vmem:[#allocation7 + $0x20] sm:$0xff]
    %v337 = vld [vmem:[#allocation7 + $0x28] sm:$0xff]
    %v338 = vld [vmem:[#allocation7 + $0x30] sm:$0xff]
    %v339 = vld [vmem:[#allocation7 + $0x38] sm:$0xff]
    %v340 = vld [vmem:[#allocation7 + $0x40] sm:$0xff]
    %v341 = vld [vmem:[#allocation7 + $0x48] sm:$0xff]
    %v342 = vld [vmem:[#allocation7 + $0x50] sm:$0xff]
    %v343 = vld [vmem:[#allocation7 + $0x58] sm:$0xff]
    %v344 = vld [vmem:[#allocation7 + $0x60] sm:$0xff]
    %v345 = vld [vmem:[#allocation7 + $0x68] sm:$0xff]
    %v346 = vld [vmem:[#allocation7 + $0x70] sm:$0xff]
    %v347 = vld [vmem:[#allocation7 + $0x78] sm:$0xff]
    %v348 = vld [vmem:[#allocation7 + $0x80] sm:$0xff]
    %v349 = vld [vmem:[#allocation7 + $0x88] sm:$0xff]
    %v350 = vld [vmem:[#allocation7 + $0x90] sm:$0xff]
    %v351 = vld [vmem:[#allocation7 + $0x98] sm:$0xff]
    %v352 = vld [vmem:[#allocation7 + $0xa0] sm:$0xff]
    %v353 = vld [vmem:[#allocation7 + $0xa8] sm:$0xff]
    %v354 = vld [vmem:[#allocation7 + $0xb0] sm:$0xff]
    %v355 = vld [vmem:[#allocation7 + $0xb8] sm:$0xff]
    %v356 = vld [vmem:[#allocation7 + $0xc0] sm:$0xff]
    %v357 = vld [vmem:[#allocation7 + $0xc8] sm:$0xff]
    %v358 = vld [vmem:[#allocation7 + $0xd0] sm:$0xff]
    %v359 = vld [vmem:[#allocation7 + $0xd8] sm:$0xff]
    %v360 = vld [vmem:[#allocation7 + $0xe0] sm:$0xff]
    %v361 = vld [vmem:[#allocation7 + $0xe8] sm:$0xff]
    %v362 = vld [vmem:[#allocation7 + $0xf0] sm:$0xff]
    %v363 = vld [vmem:[#allocation7 + $0xf8] sm:$0xff]
    %v364 = vld [vmem:[#allocation7 + $0x100] sm:$0xff]
    %v365 = vld [vmem:[#allocation7 + $0x108] sm:$0xff]
    %v366 = vld [vmem:[#allocation7 + $0x110] sm:$0xff]
    %v367 = vld [vmem:[#allocation7 + $0x118] sm:$0xff]
    %v368 = vld [vmem:[#allocation7 + $0x120] sm:$0xff]
    %v369 = vld [vmem:[#allocation7 + $0x128] sm:$0xff]
    %v370 = vld [vmem:[#allocation7 + $0x130] sm:$0xff]
    %v371 = vld [vmem:[#allocation7 + $0x138] sm:$0xff]
    %v372 = vld [vmem:[#allocation7 + $0x140] sm:$0xff]
    %v373 = vld [vmem:[#allocation7 + $0x148] sm:$0xff]
    %v374 = vld [vmem:[#allocation7 + $0x150] sm:$0xff]
    %v375 = vld [vmem:[#allocation7 + $0x158] sm:$0xff]
    %v376 = vld [vmem:[#allocation7 + $0x160] sm:$0xff]
    %v377 = vld [vmem:[#allocation7 + $0x168] sm:$0xff]
    %v378 = vld [vmem:[#allocation7 + $0x170] sm:$0xff]
    %v379 = vld [vmem:[#allocation7 + $0x178] sm:$0xff]
    %v380 = vld [vmem:[#allocation7 + $0x180] sm:$0xff]
    %v381 = vld [vmem:[#allocation7 + $0x188] sm:$0xff]
    %v382 = vld [vmem:[#allocation7 + $0x190] sm:$0xff]
    %v383 = vld [vmem:[#allocation7 + $0x198] sm:$0xff]
    %v384 = vld [vmem:[#allocation7 + $0x1a0] sm:$0xff]
    %v385 = vld [vmem:[#allocation7 + $0x1a8] sm:$0xff]
    %v386 = vld [vmem:[#allocation7 + $0x1b0] sm:$0xff]
    %v387 = vld [vmem:[#allocation7 + $0x1b8] sm:$0xff]
    %v388 = vld [vmem:[#allocation7 + $0x1c0] sm:$0xff]
    %v389 = vld [vmem:[#allocation7 + $0x1c8] sm:$0xff]
    %v390 = vld [vmem:[#allocation7 + $0x1d0] sm:$0xff]
    %v391 = vld [vmem:[#allocation7 + $0x1d8] sm:$0xff]
    %v392 = vld [vmem:[#allocation7 + $0x1e0] sm:$0xff]
    %v393 = vld [vmem:[#allocation7 + $0x1e8] sm:$0xff]
    %v394 = vld [vmem:[#allocation7 + $0x1f0] sm:$0xff]
    %v395 = vld [vmem:[#allocation7 + $0x1f8] sm:$0xff]
    %v396 = vpack.c.bf16 %v333, %v332
    %v397 = vpack.c.bf16 %v335, %v334
    %v398 = vpack.c.bf16 %v337, %v336
    %v399 = vpack.c.bf16 %v339, %v338
    %v400 = vpack.c.bf16 %v341, %v340
    %v401 = vpack.c.bf16 %v343, %v342
    %v402 = vpack.c.bf16 %v345, %v344
    %v403 = vpack.c.bf16 %v347, %v346
    %v404 = vpack.c.bf16 %v349, %v348
    %v405 = vpack.c.bf16 %v351, %v350
    %v406 = vpack.c.bf16 %v353, %v352
    %v407 = vpack.c.bf16 %v355, %v354
    %v408 = vpack.c.bf16 %v357, %v356
    %v409 = vpack.c.bf16 %v359, %v358
    %v410 = vpack.c.bf16 %v361, %v360
    %v411 = vpack.c.bf16 %v363, %v362
    %v412 = vpack.c.bf16 %v365, %v364
    %v413 = vpack.c.bf16 %v367, %v366
    %v414 = vpack.c.bf16 %v369, %v368
    %v415 = vpack.c.bf16 %v371, %v370
    %v416 = vpack.c.bf16 %v373, %v372
    %v417 = vpack.c.bf16 %v375, %v374
    %v418 = vpack.c.bf16 %v377, %v376
    %v419 = vpack.c.bf16 %v379, %v378
    %v420 = vpack.c.bf16 %v381, %v380
    %v421 = vpack.c.bf16 %v383, %v382
    %v422 = vpack.c.bf16 %v385, %v384
    %v423 = vpack.c.bf16 %v387, %v386
    %v424 = vpack.c.bf16 %v389, %v388
    %v425 = vpack.c.bf16 %v391, %v390
    %v426 = vpack.c.bf16 %v393, %v392
    %v427 = vpack.c.bf16 %v395, %v394
    %v428 = vld [vmem:[#allocation8] sm:$0xff]
    %v429 = vld [vmem:[#allocation8 + $0x8] sm:$0xff]
    %v430 = vld [vmem:[#allocation8 + $0x10] sm:$0xff]
    %v431 = vld [vmem:[#allocation8 + $0x18] sm:$0xff]
    %v432 = vld [vmem:[#allocation8 + $0x20] sm:$0xff]
    %v433 = vld [vmem:[#allocation8 + $0x28] sm:$0xff]
    %v434 = vld [vmem:[#allocation8 + $0x30] sm:$0xff]
    %v435 = vld [vmem:[#allocation8 + $0x38] sm:$0xff]
    %v436 = vld [vmem:[#allocation8 + $0x40] sm:$0xff]
    %v437 = vld [vmem:[#allocation8 + $0x48] sm:$0xff]
    %v438 = vld [vmem:[#allocation8 + $0x50] sm:$0xff]
    %v439 = vld [vmem:[#allocation8 + $0x58] sm:$0xff]
    %v440 = vld [vmem:[#allocation8 + $0x60] sm:$0xff]
    %v441 = vld [vmem:[#allocation8 + $0x68] sm:$0xff]
    %v442 = vld [vmem:[#allocation8 + $0x70] sm:$0xff]
    %v443 = vld [vmem:[#allocation8 + $0x78] sm:$0xff]
    %v444 = vld [vmem:[#allocation8 + $0x80] sm:$0xff]
    %v445 = vld [vmem:[#allocation8 + $0x88] sm:$0xff]
    %v446 = vld [vmem:[#allocation8 + $0x90] sm:$0xff]
    %v447 = vld [vmem:[#allocation8 + $0x98] sm:$0xff]
    %v448 = vld [vmem:[#allocation8 + $0xa0] sm:$0xff]
    %v449 = vld [vmem:[#allocation8 + $0xa8] sm:$0xff]
    %v450 = vld [vmem:[#allocation8 + $0xb0] sm:$0xff]
    %v451 = vld [vmem:[#allocation8 + $0xb8] sm:$0xff]
    %v452 = vld [vmem:[#allocation8 + $0xc0] sm:$0xff]
    %v453 = vld [vmem:[#allocation8 + $0xc8] sm:$0xff]
    %v454 = vld [vmem:[#allocation8 + $0xd0] sm:$0xff]
    %v455 = vld [vmem:[#allocation8 + $0xd8] sm:$0xff]
    %v456 = vld [vmem:[#allocation8 + $0xe0] sm:$0xff]
    %v457 = vld [vmem:[#allocation8 + $0xe8] sm:$0xff]
    %v458 = vld [vmem:[#allocation8 + $0xf0] sm:$0xff]
    %v459 = vld [vmem:[#allocation8 + $0xf8] sm:$0xff]
    %v460 = vld [vmem:[#allocation8 + $0x100] sm:$0xff]
    %v461 = vld [vmem:[#allocation8 + $0x108] sm:$0xff]
    %v462 = vld [vmem:[#allocation8 + $0x110] sm:$0xff]
    %v463 = vld [vmem:[#allocation8 + $0x118] sm:$0xff]
    %v464 = vld [vmem:[#allocation8 + $0x120] sm:$0xff]
    %v465 = vld [vmem:[#allocation8 + $0x128] sm:$0xff]
    %v466 = vld [vmem:[#allocation8 + $0x130] sm:$0xff]
    %v467 = vld [vmem:[#allocation8 + $0x138] sm:$0xff]
    %v468 = vld [vmem:[#allocation8 + $0x140] sm:$0xff]
    %v469 = vld [vmem:[#allocation8 + $0x148] sm:$0xff]
    %v470 = vld [vmem:[#allocation8 + $0x150] sm:$0xff]
    %v471 = vld [vmem:[#allocation8 + $0x158] sm:$0xff]
    %v472 = vld [vmem:[#allocation8 + $0x160] sm:$0xff]
    %v473 = vld [vmem:[#allocation8 + $0x168] sm:$0xff]
    %v474 = vld [vmem:[#allocation8 + $0x170] sm:$0xff]
    %v475 = vld [vmem:[#allocation8 + $0x178] sm:$0xff]
    %v476 = vld [vmem:[#allocation8 + $0x180] sm:$0xff]
    %v477 = vld [vmem:[#allocation8 + $0x188] sm:$0xff]
    %v478 = vld [vmem:[#allocation8 + $0x190] sm:$0xff]
    %v479 = vld [vmem:[#allocation8 + $0x198] sm:$0xff]
    %v480 = vld [vmem:[#allocation8 + $0x1a0] sm:$0xff]
    %v481 = vld [vmem:[#allocation8 + $0x1a8] sm:$0xff]
    %v482 = vld [vmem:[#allocation8 + $0x1b0] sm:$0xff]
    %v483 = vld [vmem:[#allocation8 + $0x1b8] sm:$0xff]
    %v484 = vld [vmem:[#allocation8 + $0x1c0] sm:$0xff]
    %v485 = vld [vmem:[#allocation8 + $0x1c8] sm:$0xff]
    %v486 = vld [vmem:[#allocation8 + $0x1d0] sm:$0xff]
    %v487 = vld [vmem:[#allocation8 + $0x1d8] sm:$0xff]
    %v488 = vld [vmem:[#allocation8 + $0x1e0] sm:$0xff]
    %v489 = vld [vmem:[#allocation8 + $0x1e8] sm:$0xff]
    %v490 = vld [vmem:[#allocation8 + $0x1f0] sm:$0xff]
    %v491 = vld [vmem:[#allocation8 + $0x1f8] sm:$0xff]
    %v492 = vpack.c.bf16 %v429, %v428
    %v493 = vpack.c.bf16 %v431, %v430
    %v494 = vpack.c.bf16 %v433, %v432
    %v495 = vpack.c.bf16 %v435, %v434
    %v496 = vpack.c.bf16 %v437, %v436
    %v497 = vpack.c.bf16 %v439, %v438
    %v498 = vpack.c.bf16 %v441, %v440
    %v499 = vpack.c.bf16 %v443, %v442
    %v500 = vpack.c.bf16 %v445, %v444
    %v501 = vpack.c.bf16 %v447, %v446
    %v502 = vpack.c.bf16 %v449, %v448
    %v503 = vpack.c.bf16 %v451, %v450
    %v504 = vpack.c.bf16 %v453, %v452
    %v505 = vpack.c.bf16 %v455, %v454
    %v506 = vpack.c.bf16 %v457, %v456
    %v507 = vpack.c.bf16 %v459, %v458
    %v508 = vpack.c.bf16 %v461, %v460
    %v509 = vpack.c.bf16 %v463, %v462
    %v510 = vpack.c.bf16 %v465, %v464
    %v511 = vpack.c.bf16 %v467, %v466
    %v512 = vpack.c.bf16 %v469, %v468
    %v513 = vpack.c.bf16 %v471, %v470
    %v514 = vpack.c.bf16 %v473, %v472
    %v515 = vpack.c.bf16 %v475, %v474
    %v516 = vpack.c.bf16 %v477, %v476
    %v517 = vpack.c.bf16 %v479, %v478
    %v518 = vpack.c.bf16 %v481, %v480
    %v519 = vpack.c.bf16 %v483, %v482
    %v520 = vpack.c.bf16 %v485, %v484
    %v521 = vpack.c.bf16 %v487, %v486
    %v522 = vpack.c.bf16 %v489, %v488
    %v523 = vpack.c.bf16 %v491, %v490
    %v524 = vld [vmem:[#allocation10] sm:$0xff]
    %v525 = vld [vmem:[#allocation10 + $0x8] sm:$0xff]
    %v526 = vld [vmem:[#allocation10 + $0x10] sm:$0xf]
    %v527 = vld [vmem:[#allocation10 + $0x14] sm:$0xff]
    %v528 = vld [vmem:[#allocation10 + $0x1c] sm:$0xff]
    %v529 = vld [vmem:[#allocation10 + $0x24] sm:$0xf]
    %v530 = vld [vmem:[#allocation10 + $0x28] sm:$0xff]
    %v531 = vld [vmem:[#allocation10 + $0x30] sm:$0xff]
    %v532 = vld [vmem:[#allocation10 + $0x38] sm:$0xf]
    %v533 = vld [vmem:[#allocation10 + $0x3c] sm:$0xff]
    %v534 = vld [vmem:[#allocation10 + $0x44] sm:$0xff]
    %v535 = vld [vmem:[#allocation10 + $0x4c] sm:$0xf]
    %v536 = vld [vmem:[#allocation10 + $0x50] sm:$0xff]
    %v537 = vld [vmem:[#allocation10 + $0x58] sm:$0xff]
    %v538 = vld [vmem:[#allocation10 + $0x60] sm:$0xf]
    %v539 = vld [vmem:[#allocation10 + $0x64] sm:$0xff]
    %v540 = vld [vmem:[#allocation10 + $0x6c] sm:$0xff]
    %v541 = vld [vmem:[#allocation10 + $0x74] sm:$0xf]
    %v542 = vld [vmem:[#allocation10 + $0x78] sm:$0xff]
    %v543 = vld [vmem:[#allocation10 + $0x80] sm:$0xff]
    %v544 = vld [vmem:[#allocation10 + $0x88] sm:$0xf]
    %v545 = vld [vmem:[#allocation10 + $0x8c] sm:$0xff]
    %v546 = vld [vmem:[#allocation10 + $0x94] sm:$0xff]
    %v547 = vld [vmem:[#allocation10 + $0x9c] sm:$0xf]
    %v548 = vld [vmem:[#allocation10 + $0xa0] sm:$0xff]
    %v549 = vld [vmem:[#allocation10 + $0xa8] sm:$0xff]
    %v550 = vld [vmem:[#allocation10 + $0xb0] sm:$0xf]
    %v551 = vld [vmem:[#allocation10 + $0xb4] sm:$0xff]
    %v552 = vld [vmem:[#allocation10 + $0xbc] sm:$0xff]
    %v553 = vld [vmem:[#allocation10 + $0xc4] sm:$0xf]
    %v554 = vld [vmem:[#allocation10 + $0xc8] sm:$0xff]
    %v555 = vld [vmem:[#allocation10 + $0xd0] sm:$0xff]
    %v556 = vld [vmem:[#allocation10 + $0xd8] sm:$0xf]
    %v557 = vld [vmem:[#allocation10 + $0xdc] sm:$0xff]
    %v558 = vld [vmem:[#allocation10 + $0xe4] sm:$0xff]
    %v559 = vld [vmem:[#allocation10 + $0xec] sm:$0xf]
    %v560 = vld [vmem:[#allocation10 + $0xf0] sm:$0xff]
    %v561 = vld [vmem:[#allocation10 + $0xf8] sm:$0xff]
    %v562 = vld [vmem:[#allocation10 + $0x100] sm:$0xf]
    %v563 = vld [vmem:[#allocation10 + $0x104] sm:$0xff]
    %v564 = vld [vmem:[#allocation10 + $0x10c] sm:$0xff]
    %v565 = vld [vmem:[#allocation10 + $0x114] sm:$0xf]
    %v566 = vld [vmem:[#allocation10 + $0x118] sm:$0xff]
    %v567 = vld [vmem:[#allocation10 + $0x120] sm:$0xff]
    %v568 = vld [vmem:[#allocation10 + $0x128] sm:$0xf]
    %v569 = vld [vmem:[#allocation10 + $0x12c] sm:$0xff]
    %v570 = vld [vmem:[#allocation10 + $0x134] sm:$0xff]
    %v571 = vld [vmem:[#allocation10 + $0x13c] sm:$0xf]
    %v620 = vunpack.c.l.b16 %v524
    %v621 = vunpack.c.h.b16 %v524
    %v622 = vunpack.c.l.b16 %v525
    %v623 = vunpack.c.h.b16 %v525
    %v624 = vunpack.c.l.b16 %v526
    %v625 = vunpack.c.l.b16 %v527
    %v626 = vunpack.c.h.b16 %v527
    %v627 = vunpack.c.l.b16 %v528
    %v628 = vunpack.c.h.b16 %v528
    %v629 = vunpack.c.l.b16 %v529
    %v630 = vunpack.c.l.b16 %v530
    %v631 = vunpack.c.h.b16 %v530
    %v632 = vunpack.c.l.b16 %v531
    %v633 = vunpack.c.h.b16 %v531
    %v634 = vunpack.c.l.b16 %v532
    %v635 = vunpack.c.l.b16 %v533
    %v636 = vunpack.c.h.b16 %v533
    %v637 = vunpack.c.l.b16 %v534
    %v638 = vunpack.c.h.b16 %v534
    %v639 = vunpack.c.l.b16 %v535
    %v640 = vunpack.c.l.b16 %v536
    %v641 = vunpack.c.h.b16 %v536
    %v642 = vunpack.c.l.b16 %v537
    %v643 = vunpack.c.h.b16 %v537
    %v644 = vunpack.c.l.b16 %v538
    %v645 = vunpack.c.l.b16 %v539
    %v646 = vunpack.c.h.b16 %v539
    %v647 = vunpack.c.l.b16 %v540
    %v648 = vunpack.c.h.b16 %v540
    %v649 = vunpack.c.l.b16 %v541
    %v650 = vunpack.c.l.b16 %v542
    %v651 = vunpack.c.h.b16 %v542
    %v652 = vunpack.c.l.b16 %v543
    %v653 = vunpack.c.h.b16 %v543
    %v654 = vunpack.c.l.b16 %v544
    %v655 = vunpack.c.l.b16 %v545
    %v656 = vunpack.c.h.b16 %v545
    %v657 = vunpack.c.l.b16 %v546
    %v658 = vunpack.c.h.b16 %v546
    %v659 = vunpack.c.l.b16 %v547
    %v660 = vunpack.c.l.b16 %v548
    %v661 = vunpack.c.h.b16 %v548
    %v662 = vunpack.c.l.b16 %v549
    %v663 = vunpack.c.h.b16 %v549
    %v664 = vunpack.c.l.b16 %v550
    %v665 = vunpack.c.l.b16 %v551
    %v666 = vunpack.c.h.b16 %v551
    %v667 = vunpack.c.l.b16 %v552
    %v668 = vunpack.c.h.b16 %v552
    %v669 = vunpack.c.l.b16 %v553
    %v670 = vunpack.c.l.b16 %v554
    %v671 = vunpack.c.h.b16 %v554
    %v672 = vunpack.c.l.b16 %v555
    %v673 = vunpack.c.h.b16 %v555
    %v674 = vunpack.c.l.b16 %v556
    %v675 = vunpack.c.l.b16 %v557
    %v676 = vunpack.c.h.b16 %v557
    %v677 = vunpack.c.l.b16 %v558
    %v678 = vunpack.c.h.b16 %v558
    %v679 = vunpack.c.l.b16 %v559
    %v680 = vunpack.c.l.b16 %v560
    %v681 = vunpack.c.h.b16 %v560
    %v682 = vunpack.c.l.b16 %v561
    %v683 = vunpack.c.h.b16 %v561
    %v684 = vunpack.c.l.b16 %v562
    %v685 = vunpack.c.l.b16 %v563
    %v686 = vunpack.c.h.b16 %v563
    %v687 = vunpack.c.l.b16 %v564
    %v688 = vunpack.c.h.b16 %v564
    %v689 = vunpack.c.l.b16 %v565
    %v690 = vunpack.c.l.b16 %v566
    %v691 = vunpack.c.h.b16 %v566
    %v692 = vunpack.c.l.b16 %v567
    %v693 = vunpack.c.h.b16 %v567
    %v694 = vunpack.c.l.b16 %v568
    %v695 = vunpack.c.l.b16 %v569
    %v696 = vunpack.c.h.b16 %v569
    %v697 = vunpack.c.l.b16 %v570
    %v698 = vunpack.c.h.b16 %v570
    %v699 = vunpack.c.l.b16 %v571
    %v700 = vpack.c.b16 %v625, %v620
    %v701 = vpack.c.b16 %v626, %v621
    %v702 = vpack.c.b16 %v627, %v622
    %v703 = vpack.c.b16 %v628, %v623
    %v704 = vpack.c.b16 %v629, %v624
    %v705 = vpack.c.b16 %v635, %v630
    %v706 = vpack.c.b16 %v636, %v631
    %v707 = vpack.c.b16 %v637, %v632
    %v708 = vpack.c.b16 %v638, %v633
    %v709 = vpack.c.b16 %v639, %v634
    %v710 = vpack.c.b16 %v645, %v640
    %v711 = vpack.c.b16 %v646, %v641
    %v712 = vpack.c.b16 %v647, %v642
    %v713 = vpack.c.b16 %v648, %v643
    %v714 = vpack.c.b16 %v649, %v644
    %v715 = vpack.c.b16 %v655, %v650
    %v716 = vpack.c.b16 %v656, %v651
    %v717 = vpack.c.b16 %v657, %v652
    %v718 = vpack.c.b16 %v658, %v653
    %v719 = vpack.c.b16 %v659, %v654
    %v720 = vpack.c.b16 %v665, %v660
    %v721 = vpack.c.b16 %v666, %v661
    %v722 = vpack.c.b16 %v667, %v662
    %v723 = vpack.c.b16 %v668, %v663
    %v724 = vpack.c.b16 %v669, %v664
    %v725 = vpack.c.b16 %v675, %v670
    %v726 = vpack.c.b16 %v676, %v671
    %v727 = vpack.c.b16 %v677, %v672
    %v728 = vpack.c.b16 %v678, %v673
    %v729 = vpack.c.b16 %v679, %v674
    %v730 = vpack.c.b16 %v685, %v680
    %v731 = vpack.c.b16 %v686, %v681
    %v732 = vpack.c.b16 %v687, %v682
    %v733 = vpack.c.b16 %v688, %v683
    %v734 = vpack.c.b16 %v689, %v684
    %v735 = vpack.c.b16 %v695, %v690
    %v736 = vpack.c.b16 %v696, %v691
    %v737 = vpack.c.b16 %v697, %v692
    %v738 = vpack.c.b16 %v698, %v693
    %v739 = vpack.c.b16 %v699, %v694
    %780 = vmatprep.subr.bf16.mxu0 %v701
    %781 = vmatpush1.bf16.msra.mxu0 %v700
    %782 = vmatprep.subr.bf16.mxu0 %v706
    %783 = vmatpush1.bf16.msra.mxu0 %v705
    %784 = vmatprep.subr.bf16.mxu0 %v711
    %785 = vmatpush1.bf16.msra.mxu0 %v710
    %786 = vmatprep.subr.bf16.mxu0 %v716
    %787 = vmatpush1.bf16.msra.mxu0 %v715
    %788 = vmatprep.subr.bf16.mxu0 %v721
    %789 = vmatpush1.bf16.msra.mxu0 %v720
    %790 = vmatprep.subr.bf16.mxu0 %v726
    %791 = vmatpush1.bf16.msra.mxu0 %v725
    %792 = vmatprep.subr.bf16.mxu0 %v731
    %793 = vmatpush1.bf16.msra.mxu0 %v730
    %794 = vmatprep.subr.bf16.mxu0 %v736
    %795 = vmatpush1.bf16.msra.mxu0 %v735
    %796 = vmatprep.subr.bf16.mxu0 0
    %797 = vmatpush1.bf16.msra.mxu0 0
    %798 = vmatprep.subr.bf16.mxu0 0
    %799 = vmatpush1.bf16.msra.mxu0 0
    %800 = vmatprep.subr.bf16.mxu0 0
    %801 = vmatpush1.bf16.msra.mxu0 0
    %802 = vmatprep.subr.bf16.mxu0 0
    %803 = vmatpush1.bf16.msra.mxu0 0
    %804 = vmatprep.subr.bf16.mxu0 0
    %805 = vmatpush1.bf16.msra.mxu0 0
    %806 = vmatprep.subr.bf16.mxu0 0
    %807 = vmatpush1.bf16.msra.mxu0 0
    %808 = vmatprep.subr.bf16.mxu0 0
    %809 = vmatpush1.bf16.msra.mxu0 0
    %810 = vmatprep.subr.bf16.mxu0 0
    %811 = vmatpush1.bf16.msra.mxu0 0
    %812 = vmatprep.mubr.bf16.mxu0 0
    %813 = vmatmul.mubr.bf16.gmra.mrb[0].mxu0 %v204
    %v814 = vpop.f32.mrb[0].mxu0
    %v815 = vadd.f32 0.0, %v814
    %v816 = vpop.f32.mrb[0].mxu0
    %v817 = vadd.f32 0.0, %v816
    %v818 = vpop.f32.mrb[0].mxu0
    %v819 = vadd.f32 0.0, %v818
    %v820 = vpop.f32.mrb[0].mxu0
    %v821 = vadd.f32 0.0, %v820
    %822 = vmatprep.mubr.bf16.mxu0 0
    %823 = vmatmul.mubr.bf16.gmra.mrb[0].mxu0 %v205
    %v824 = vpop.f32.mrb[0].mxu0
    %v825 = vadd.f32 0.0, %v824
    %v826 = vpop.f32.mrb[0].mxu0
    %v827 = vadd.f32 0.0, %v826
    %v828 = vpop.f32.mrb[0].mxu0
    %v829 = vadd.f32 0.0, %v828
    %v830 = vpop.f32.mrb[0].mxu0
    %v831 = vadd.f32 0.0, %v830
    %832 = vmatprep.mubr.bf16.mxu0 0
    %833 = vmatmul.mubr.bf16.gmra.mrb[0].mxu0 %v206
    %v834 = vpop.f32.mrb[0].mxu0
    %v835 = vadd.f32 0.0, %v834
    %v836 = vpop.f32.mrb[0].mxu0
    %v837 = vadd.f32 0.0, %v836
    %v838 = vpop.f32.mrb[0].mxu0
    %v839 = vadd.f32 0.0, %v838
    %v840 = vpop.f32.mrb[0].mxu0
    %v841 = vadd.f32 0.0, %v840
    %842 = vmatprep.mubr.bf16.mxu0 0
    %843 = vmatmul.mubr.bf16.gmra.mrb[0].mxu0 %v207
    %v844 = vpop.f32.mrb[0].mxu0
    %v845 = vadd.f32 0.0, %v844
    %v846 = vpop.f32.mrb[0].mxu0
    %v847 = vadd.f32 0.0, %v846
    %v848 = vpop.f32.mrb[0].mxu0
    %v849 = vadd.f32 0.0, %v848
    %v850 = vpop.f32.mrb[0].mxu0
    %v851 = vadd.f32 0.0, %v850
    %852 = vmatprep.mubr.bf16.mxu0 0
    %853 = vmatmul.mubr.bf16.gmra.mrb[0].mxu0 %v208
    %v854 = vpop.f32.mrb[0].mxu0
    %v855 = vadd.f32 0.0, %v854
    %v856 = vpop.f32.mrb[0].mxu0
    %v857 = vadd.f32 0.0, %v856
    %v858 = vpop.f32.mrb[0].mxu0
    %v859 = vadd.f32 0.0, %v858
    %v860 = vpop.f32.mrb[0].mxu0
    %v861 = vadd.f32 0.0, %v860
    %862 = vmatprep.mubr.bf16.mxu0 0
    %863 = vmatmul.mubr.bf16.gmra.mrb[0].mxu0 %v209
    %v864 = vpop.f32.mrb[0].mxu0
    %v865 = vadd.f32 0.0, %v864
    %v866 = vpop.f32.mrb[0].mxu0
    %v867 = vadd.f32 0.0, %v866
    %v868 = vpop.f32.mrb[0].mxu0
    %v869 = vadd.f32 0.0, %v868
    %v870 = vpop.f32.mrb[0].mxu0
    %v871 = vadd.f32 0.0, %v870
    %872 = vmatprep.mubr.bf16.mxu0 0
    %873 = vmatmul.mubr.bf16.gmra.mrb[0].mxu0 %v210
    %v874 = vpop.f32.mrb[0].mxu0
    %v875 = vadd.f32 0.0, %v874
    %v876 = vpop.f32.mrb[0].mxu0
    %v877 = vadd.f32 0.0, %v876
    %v878 = vpop.f32.mrb[0].mxu0
    %v879 = vadd.f32 0.0, %v878
    %v880 = vpop.f32.mrb[0].mxu0
    %v881 = vadd.f32 0.0, %v880
    %882 = vmatprep.mubr.bf16.mxu0 0
    %883 = vmatmul.mubr.bf16.gmra.mrb[0].mxu0 %v211
    %v884 = vpop.f32.mrb[0].mxu0
    %v885 = vadd.f32 0.0, %v884
    %v886 = vpop.f32.mrb[0].mxu0
    %v887 = vadd.f32 0.0, %v886
    %v888 = vpop.f32.mrb[0].mxu0
    %v889 = vadd.f32 0.0, %v888
    %v890 = vpop.f32.mrb[0].mxu0
    %v891 = vadd.f32 0.0, %v890
    %892 = vmatprep.mubr.bf16.mxu0 0
    %893 = vmatmul.mubr.bf16.gmra.mrb[0].mxu0 %v212
    %v894 = vpop.f32.mrb[0].mxu0
    %v895 = vadd.f32 0.0, %v894
    %v896 = vpop.f32.mrb[0].mxu0
    %v897 = vadd.f32 0.0, %v896
    %v898 = vpop.f32.mrb[0].mxu0
    %v899 = vadd.f32 0.0, %v898
    %v900 = vpop.f32.mrb[0].mxu0
    %v901 = vadd.f32 0.0, %v900
    %902 = vmatprep.mubr.bf16.mxu0 0
    %903 = vmatmul.mubr.bf16.gmra.mrb[0].mxu0 %v213
    %v904 = vpop.f32.mrb[0].mxu0
    %v905 = vadd.f32 0.0, %v904
    %v906 = vpop.f32.mrb[0].mxu0
    %v907 = vadd.f32 0.0, %v906
    %v908 = vpop.f32.mrb[0].mxu0
    %v909 = vadd.f32 0.0, %v908
    %v910 = vpop.f32.mrb[0].mxu0
    %v911 = vadd.f32 0.0, %v910
    %912 = vmatprep.mubr.bf16.mxu0 0
    %913 = vmatmul.mubr.bf16.gmra.mrb[0].mxu0 %v214
    %v914 = vpop.f32.mrb[0].mxu0
    %v915 = vadd.f32 0.0, %v914
    %v916 = vpop.f32.mrb[0].mxu0
    %v917 = vadd.f32 0.0, %v916
    %v918 = vpop.f32.mrb[0].mxu0
    %v919 = vadd.f32 0.0, %v918
    %v920 = vpop.f32.mrb[0].mxu0
    %v921 = vadd.f32 0.0, %v920
    %922 = vmatprep.mubr.bf16.mxu0 0
    %923 = vmatmul.mubr.bf16.gmra.mrb[0].mxu0 %v215
    %v924 = vpop.f32.mrb[0].mxu0
    %v925 = vadd.f32 0.0, %v924
    %v926 = vpop.f32.mrb[0].mxu0
    %v927 = vadd.f32 0.0, %v926
    %v928 = vpop.f32.mrb[0].mxu0
    %v929 = vadd.f32 0.0, %v928
    %v930 = vpop.f32.mrb[0].mxu0
    %v931 = vadd.f32 0.0, %v930
    %932 = vmatprep.mubr.bf16.mxu0 0
    %933 = vmatmul.mubr.bf16.gmra.mrb[0].mxu0 %v216
    %v934 = vpop.f32.mrb[0].mxu0
    %v935 = vadd.f32 0.0, %v934
    %v936 = vpop.f32.mrb[0].mxu0
    %v937 = vadd.f32 0.0, %v936
    %v938 = vpop.f32.mrb[0].mxu0
    %v939 = vadd.f32 0.0, %v938
    %v940 = vpop.f32.mrb[0].mxu0
    %v941 = vadd.f32 0.0, %v940
    %942 = vmatprep.mubr.bf16.mxu0 0
    %943 = vmatmul.mubr.bf16.gmra.mrb[0].mxu0 %v217
    %v944 = vpop.f32.mrb[0].mxu0
    %v945 = vadd.f32 0.0, %v944
    %v946 = vpop.f32.mrb[0].mxu0
    %v947 = vadd.f32 0.0, %v946
    %v948 = vpop.f32.mrb[0].mxu0
    %v949 = vadd.f32 0.0, %v948
    %v950 = vpop.f32.mrb[0].mxu0
    %v951 = vadd.f32 0.0, %v950
    %952 = vmatprep.mubr.bf16.mxu0 0
    %953 = vmatmul.mubr.bf16.gmra.mrb[0].mxu0 %v218
    %v954 = vpop.f32.mrb[0].mxu0
    %v955 = vadd.f32 0.0, %v954
    %v956 = vpop.f32.mrb[0].mxu0
    %v957 = vadd.f32 0.0, %v956
    %v958 = vpop.f32.mrb[0].mxu0
    %v959 = vadd.f32 0.0, %v958
    %v960 = vpop.f32.mrb[0].mxu0
    %v961 = vadd.f32 0.0, %v960
    %962 = vmatprep.mubr.bf16.mxu0 0
    %963 = vmatmul.mubr.bf16.gmra.mrb[0].mxu0 %v219
    %v964 = vpop.f32.mrb[0].mxu0
    %v965 = vadd.f32 0.0, %v964
    %v966 = vpop.f32.mrb[0].mxu0
    %v967 = vadd.f32 0.0, %v966
    %v968 = vpop.f32.mrb[0].mxu0
    %v969 = vadd.f32 0.0, %v968
    %v970 = vpop.f32.mrb[0].mxu0
    %v971 = vadd.f32 0.0, %v970
    %972 = vmatprep.mubr.bf16.mxu0 0
    %973 = vmatmul.mubr.bf16.gmra.mrb[0].mxu0 %v220
    %v974 = vpop.f32.mrb[0].mxu0
    %v975 = vadd.f32 0.0, %v974
    %v976 = vpop.f32.mrb[0].mxu0
    %v977 = vadd.f32 0.0, %v976
    %v978 = vpop.f32.mrb[0].mxu0
    %v979 = vadd.f32 0.0, %v978
    %v980 = vpop.f32.mrb[0].mxu0
    %v981 = vadd.f32 0.0, %v980
    %982 = vmatprep.mubr.bf16.mxu0 0
    %983 = vmatmul.mubr.bf16.gmra.mrb[0].mxu0 %v221
    %v984 = vpop.f32.mrb[0].mxu0
    %v985 = vadd.f32 0.0, %v984
    %v986 = vpop.f32.mrb[0].mxu0
    %v987 = vadd.f32 0.0, %v986
    %v988 = vpop.f32.mrb[0].mxu0
    %v989 = vadd.f32 0.0, %v988
    %v990 = vpop.f32.mrb[0].mxu0
    %v991 = vadd.f32 0.0, %v990
    %992 = vmatprep.mubr.bf16.mxu0 0
    %993 = vmatmul.mubr.bf16.gmra.mrb[0].mxu0 %v222
    %v994 = vpop.f32.mrb[0].mxu0
    %v995 = vadd.f32 0.0, %v994
    %v996 = vpop.f32.mrb[0].mxu0
    %v997 = vadd.f32 0.0, %v996
    %v998 = vpop.f32.mrb[0].mxu0
    %v999 = vadd.f32 0.0, %v998
    %v1000 = vpop.f32.mrb[0].mxu0
    %v1001 = vadd.f32 0.0, %v1000
    %1002 = vmatprep.mubr.bf16.mxu0 0
    %1003 = vmatmul.mubr.bf16.gmra.mrb[0].mxu0 %v223
    %v1004 = vpop.f32.mrb[0].mxu0
    %v1005 = vadd.f32 0.0, %v1004
    %v1006 = vpop.f32.mrb[0].mxu0
    %v1007 = vadd.f32 0.0, %v1006
    %v1008 = vpop.f32.mrb[0].mxu0
    %v1009 = vadd.f32 0.0, %v1008
    %v1010 = vpop.f32.mrb[0].mxu0
    %v1011 = vadd.f32 0.0, %v1010
    %1012 = vmatprep.mubr.bf16.mxu0 0
    %1013 = vmatmul.mubr.bf16.gmra.mrb[0].mxu0 %v224
    %v1014 = vpop.f32.mrb[0].mxu0
    %v1015 = vadd.f32 0.0, %v1014
    %v1016 = vpop.f32.mrb[0].mxu0
    %v1017 = vadd.f32 0.0, %v1016
    %v1018 = vpop.f32.mrb[0].mxu0
    %v1019 = vadd.f32 0.0, %v1018
    %v1020 = vpop.f32.mrb[0].mxu0
    %v1021 = vadd.f32 0.0, %v1020
    %1022 = vmatprep.mubr.bf16.mxu0 0
    %1023 = vmatmul.mubr.bf16.gmra.mrb[0].mxu0 %v225
    %v1024 = vpop.f32.mrb[0].mxu0
    %v1025 = vadd.f32 0.0, %v1024
    %v1026 = vpop.f32.mrb[0].mxu0
    %v1027 = vadd.f32 0.0, %v1026
    %v1028 = vpop.f32.mrb[0].mxu0
    %v1029 = vadd.f32 0.0, %v1028
    %v1030 = vpop.f32.mrb[0].mxu0
    %v1031 = vadd.f32 0.0, %v1030
    %1032 = vmatprep.mubr.bf16.mxu0 0
    %1033 = vmatmul.mubr.bf16.gmra.mrb[0].mxu0 %v226
    %v1034 = vpop.f32.mrb[0].mxu0
    %v1035 = vadd.f32 0.0, %v1034
    %v1036 = vpop.f32.mrb[0].mxu0
    %v1037 = vadd.f32 0.0, %v1036
    %v1038 = vpop.f32.mrb[0].mxu0
    %v1039 = vadd.f32 0.0, %v1038
    %v1040 = vpop.f32.mrb[0].mxu0
    %v1041 = vadd.f32 0.0, %v1040
    %1042 = vmatprep.mubr.bf16.mxu0 0
    %1043 = vmatmul.mubr.bf16.gmra.mrb[0].mxu0 %v227
    %v1044 = vpop.f32.mrb[0].mxu0
    %v1045 = vadd.f32 0.0, %v1044
    %v1046 = vpop.f32.mrb[0].mxu0
    %v1047 = vadd.f32 0.0, %v1046
    %v1048 = vpop.f32.mrb[0].mxu0
    %v1049 = vadd.f32 0.0, %v1048
    %v1050 = vpop.f32.mrb[0].mxu0
    %v1051 = vadd.f32 0.0, %v1050
    %1052 = vmatprep.mubr.bf16.mxu0 0
    %1053 = vmatmul.mubr.bf16.gmra.mrb[0].mxu0 %v228
    %v1054 = vpop.f32.mrb[0].mxu0
    %v1055 = vadd.f32 0.0, %v1054
    %v1056 = vpop.f32.mrb[0].mxu0
    %v1057 = vadd.f32 0.0, %v1056
    %v1058 = vpop.f32.mrb[0].mxu0
    %v1059 = vadd.f32 0.0, %v1058
    %v1060 = vpop.f32.mrb[0].mxu0
    %v1061 = vadd.f32 0.0, %v1060
    %1062 = vmatprep.mubr.bf16.mxu0 0
    %1063 = vmatmul.mubr.bf16.gmra.mrb[0].mxu0 %v229
    %v1064 = vpop.f32.mrb[0].mxu0
    %v1065 = vadd.f32 0.0, %v1064
    %v1066 = vpop.f32.mrb[0].mxu0
    %v1067 = vadd.f32 0.0, %v1066
    %v1068 = vpop.f32.mrb[0].mxu0
    %v1069 = vadd.f32 0.0, %v1068
    %v1070 = vpop.f32.mrb[0].mxu0
    %v1071 = vadd.f32 0.0, %v1070
    %1072 = vmatprep.mubr.bf16.mxu0 0
    %1073 = vmatmul.mubr.bf16.gmra.mrb[0].mxu0 %v230
    %v1074 = vpop.f32.mrb[0].mxu0
    %v1075 = vadd.f32 0.0, %v1074
    %v1076 = vpop.f32.mrb[0].mxu0
    %v1077 = vadd.f32 0.0, %v1076
    %v1078 = vpop.f32.mrb[0].mxu0
    %v1079 = vadd.f32 0.0, %v1078
    %v1080 = vpop.f32.mrb[0].mxu0
    %v1081 = vadd.f32 0.0, %v1080
    %1082 = vmatprep.mubr.bf16.mxu0 0
    %1083 = vmatmul.mubr.bf16.gmra.mrb[0].mxu0 %v231
    %v1084 = vpop.f32.mrb[0].mxu0
    %v1085 = vadd.f32 0.0, %v1084
    %v1086 = vpop.f32.mrb[0].mxu0
    %v1087 = vadd.f32 0.0, %v1086
    %v1088 = vpop.f32.mrb[0].mxu0
    %v1089 = vadd.f32 0.0, %v1088
    %v1090 = vpop.f32.mrb[0].mxu0
    %v1091 = vadd.f32 0.0, %v1090
    %1092 = vmatprep.mubr.bf16.mxu0 0
    %1093 = vmatmul.mubr.bf16.gmra.mrb[0].mxu0 %v232
    %v1094 = vpop.f32.mrb[0].mxu0
    %v1095 = vadd.f32 0.0, %v1094
    %v1096 = vpop.f32.mrb[0].mxu0
    %v1097 = vadd.f32 0.0, %v1096
    %v1098 = vpop.f32.mrb[0].mxu0
    %v1099 = vadd.f32 0.0, %v1098
    %v1100 = vpop.f32.mrb[0].mxu0
    %v1101 = vadd.f32 0.0, %v1100
    %1102 = vmatprep.mubr.bf16.mxu0 0
    %1103 = vmatmul.mubr.bf16.gmra.mrb[0].mxu0 %v233
    %v1104 = vpop.f32.mrb[0].mxu0
    %v1105 = vadd.f32 0.0, %v1104
    %v1106 = vpop.f32.mrb[0].mxu0
    %v1107 = vadd.f32 0.0, %v1106
    %v1108 = vpop.f32.mrb[0].mxu0
    %v1109 = vadd.f32 0.0, %v1108
    %v1110 = vpop.f32.mrb[0].mxu0
    %v1111 = vadd.f32 0.0, %v1110
    %1112 = vmatprep.mubr.bf16.mxu0 0
    %1113 = vmatmul.mubr.bf16.gmra.mrb[0].mxu0 %v234
    %v1114 = vpop.f32.mrb[0].mxu0
    %v1115 = vadd.f32 0.0, %v1114
    %v1116 = vpop.f32.mrb[0].mxu0
    %v1117 = vadd.f32 0.0, %v1116
    %v1118 = vpop.f32.mrb[0].mxu0
    %v1119 = vadd.f32 0.0, %v1118
    %v1120 = vpop.f32.mrb[0].mxu0
    %v1121 = vadd.f32 0.0, %v1120
    %1122 = vmatprep.mubr.bf16.mxu0 0
    %1123 = vmatmul.mubr.bf16.gmra.mrb[0].mxu0 %v235
    %v1124 = vpop.f32.mrb[0].mxu0
    %v1125 = vadd.f32 0.0, %v1124
    %v1126 = vpop.f32.mrb[0].mxu0
    %v1127 = vadd.f32 0.0, %v1126
    %v1128 = vpop.f32.mrb[0].mxu0
    %v1129 = vadd.f32 0.0, %v1128
    %v1130 = vpop.f32.mrb[0].mxu0
    %v1131 = vadd.f32 0.0, %v1130
    %1132 = vdwg.mxu0
    %1133 = vmatprep.subr.bf16.mxu0 %v703
    %1134 = vmatpush1.bf16.msra.mxu0 %v702
    %1135 = vmatprep.subr.bf16.mxu0 %v708
    %1136 = vmatpush1.bf16.msra.mxu0 %v707
    %1137 = vmatprep.subr.bf16.mxu0 %v713
    %1138 = vmatpush1.bf16.msra.mxu0 %v712
    %1139 = vmatprep.subr.bf16.mxu0 %v718
    %1140 = vmatpush1.bf16.msra.mxu0 %v717
    %1141 = vmatprep.subr.bf16.mxu0 %v723
    %1142 = vmatpush1.bf16.msra.mxu0 %v722
    %1143 = vmatprep.subr.bf16.mxu0 %v728
    %1144 = vmatpush1.bf16.msra.mxu0 %v727
    %1145 = vmatprep.subr.bf16.mxu0 %v733
    %1146 = vmatpush1.bf16.msra.mxu0 %v732
    %1147 = vmatprep.subr.bf16.mxu0 %v738
    %1148 = vmatpush1.bf16.msra.mxu0 %v737
    %1149 = vmatprep.subr.bf16.mxu0 0
    %1150 = vmatpush1.bf16.msra.mxu0 0
    %1151 = vmatprep.subr.bf16.mxu0 0
    %1152 = vmatpush1.bf16.msra.mxu0 0
    %1153 = vmatprep.subr.bf16.mxu0 0
    %1154 = vmatpush1.bf16.msra.mxu0 0
    %1155 = vmatprep.subr.bf16.mxu0 0
    %1156 = vmatpush1.bf16.msra.mxu0 0
    %1157 = vmatprep.subr.bf16.mxu0 0
    %1158 = vmatpush1.bf16.msra.mxu0 0
    %1159 = vmatprep.subr.bf16.mxu0 0
    %1160 = vmatpush1.bf16.msra.mxu0 0
    %1161 = vmatprep.subr.bf16.mxu0 0
    %1162 = vmatpush1.bf16.msra.mxu0 0
    %1163 = vmatprep.subr.bf16.mxu0 0
    %1164 = vmatpush1.bf16.msra.mxu0 0
    %1165 = vmatprep.mubr.bf16.mxu0 0
    %1166 = vmatmul.mubr.bf16.gmra.mrb[0].mxu0 %v204
    %v1167 = vpop.f32.mrb[0].mxu0
    %v1168 = vadd.f32 0.0, %v1167
    %v1169 = vpop.f32.mrb[0].mxu0
    %v1170 = vadd.f32 0.0, %v1169
    %v1171 = vpop.f32.mrb[0].mxu0
    %v1172 = vadd.f32 0.0, %v1171
    %v1173 = vpop.f32.mrb[0].mxu0
    %v1174 = vadd.f32 0.0, %v1173
    %1175 = vmatprep.mubr.bf16.mxu0 0
    %1176 = vmatmul.mubr.bf16.gmra.mrb[0].mxu0 %v205
    %v1177 = vpop.f32.mrb[0].mxu0
    %v1178 = vadd.f32 0.0, %v1177
    %v1179 = vpop.f32.mrb[0].mxu0
    %v1180 = vadd.f32 0.0, %v1179
    %v1181 = vpop.f32.mrb[0].mxu0
    %v1182 = vadd.f32 0.0, %v1181
    %v1183 = vpop.f32.mrb[0].mxu0
    %v1184 = vadd.f32 0.0, %v1183
    %1185 = vmatprep.mubr.bf16.mxu0 0
    %1186 = vmatmul.mubr.bf16.gmra.mrb[0].mxu0 %v206
    %v1187 = vpop.f32.mrb[0].mxu0
    %v1188 = vadd.f32 0.0, %v1187
    %v1189 = vpop.f32.mrb[0].mxu0
    %v1190 = vadd.f32 0.0, %v1189
    %v1191 = vpop.f32.mrb[0].mxu0
    %v1192 = vadd.f32 0.0, %v1191
    %v1193 = vpop.f32.mrb[0].mxu0
    %v1194 = vadd.f32 0.0, %v1193
    %1195 = vmatprep.mubr.bf16.mxu0 0
    %1196 = vmatmul.mubr.bf16.gmra.mrb[0].mxu0 %v207
    %v1197 = vpop.f32.mrb[0].mxu0
    %v1198 = vadd.f32 0.0, %v1197
    %v1199 = vpop.f32.mrb[0].mxu0
    %v1200 = vadd.f32 0.0, %v1199
    %v1201 = vpop.f32.mrb[0].mxu0
    %v1202 = vadd.f32 0.0, %v1201
    %v1203 = vpop.f32.mrb[0].mxu0
    %v1204 = vadd.f32 0.0, %v1203
    %1205 = vmatprep.mubr.bf16.mxu0 0
    %1206 = vmatmul.mubr.bf16.gmra.mrb[0].mxu0 %v208
    %v1207 = vpop.f32.mrb[0].mxu0
    %v1208 = vadd.f32 0.0, %v1207
    %v1209 = vpop.f32.mrb[0].mxu0
    %v1210 = vadd.f32 0.0, %v1209
    %v1211 = vpop.f32.mrb[0].mxu0
    %v1212 = vadd.f32 0.0, %v1211
    %v1213 = vpop.f32.mrb[0].mxu0
    %v1214 = vadd.f32 0.0, %v1213
    %1215 = vmatprep.mubr.bf16.mxu0 0
    %1216 = vmatmul.mubr.bf16.gmra.mrb[0].mxu0 %v209
    %v1217 = vpop.f32.mrb[0].mxu0
    %v1218 = vadd.f32 0.0, %v1217
    %v1219 = vpop.f32.mrb[0].mxu0
    %v1220 = vadd.f32 0.0, %v1219
    %v1221 = vpop.f32.mrb[0].mxu0
    %v1222 = vadd.f32 0.0, %v1221
    %v1223 = vpop.f32.mrb[0].mxu0
    %v1224 = vadd.f32 0.0, %v1223
    %1225 = vmatprep.mubr.bf16.mxu0 0
    %1226 = vmatmul.mubr.bf16.gmra.mrb[0].mxu0 %v210
    %v1227 = vpop.f32.mrb[0].mxu0
    %v1228 = vadd.f32 0.0, %v1227
    %v1229 = vpop.f32.mrb[0].mxu0
    %v1230 = vadd.f32 0.0, %v1229
    %v1231 = vpop.f32.mrb[0].mxu0
    %v1232 = vadd.f32 0.0, %v1231
    %v1233 = vpop.f32.mrb[0].mxu0
    %v1234 = vadd.f32 0.0, %v1233
    %1235 = vmatprep.mubr.bf16.mxu0 0
    %1236 = vmatmul.mubr.bf16.gmra.mrb[0].mxu0 %v211
    %v1237 = vpop.f32.mrb[0].mxu0
    %v1238 = vadd.f32 0.0, %v1237
    %v1239 = vpop.f32.mrb[0].mxu0
    %v1240 = vadd.f32 0.0, %v1239
    %v1241 = vpop.f32.mrb[0].mxu0
    %v1242 = vadd.f32 0.0, %v1241
    %v1243 = vpop.f32.mrb[0].mxu0
    %v1244 = vadd.f32 0.0, %v1243
    %1245 = vmatprep.mubr.bf16.mxu0 0
    %1246 = vmatmul.mubr.bf16.gmra.mrb[0].mxu0 %v212
    %v1247 = vpop.f32.mrb[0].mxu0
    %v1248 = vadd.f32 0.0, %v1247
    %v1249 = vpop.f32.mrb[0].mxu0
    %v1250 = vadd.f32 0.0, %v1249
    %v1251 = vpop.f32.mrb[0].mxu0
    %v1252 = vadd.f32 0.0, %v1251
    %v1253 = vpop.f32.mrb[0].mxu0
    %v1254 = vadd.f32 0.0, %v1253
    %1255 = vmatprep.mubr.bf16.mxu0 0
    %1256 = vmatmul.mubr.bf16.gmra.mrb[0].mxu0 %v213
    %v1257 = vpop.f32.mrb[0].mxu0
    %v1258 = vadd.f32 0.0, %v1257
    %v1259 = vpop.f32.mrb[0].mxu0
    %v1260 = vadd.f32 0.0, %v1259
    %v1261 = vpop.f32.mrb[0].mxu0
    %v1262 = vadd.f32 0.0, %v1261
    %v1263 = vpop.f32.mrb[0].mxu0
    %v1264 = vadd.f32 0.0, %v1263
    %1265 = vmatprep.mubr.bf16.mxu0 0
    %1266 = vmatmul.mubr.bf16.gmra.mrb[0].mxu0 %v214
    %v1267 = vpop.f32.mrb[0].mxu0
    %v1268 = vadd.f32 0.0, %v1267
    %v1269 = vpop.f32.mrb[0].mxu0
    %v1270 = vadd.f32 0.0, %v1269
    %v1271 = vpop.f32.mrb[0].mxu0
    %v1272 = vadd.f32 0.0, %v1271
    %v1273 = vpop.f32.mrb[0].mxu0
    %v1274 = vadd.f32 0.0, %v1273
    %1275 = vmatprep.mubr.bf16.mxu0 0
    %1276 = vmatmul.mubr.bf16.gmra.mrb[0].mxu0 %v215
    %v1277 = vpop.f32.mrb[0].mxu0
    %v1278 = vadd.f32 0.0, %v1277
    %v1279 = vpop.f32.mrb[0].mxu0
    %v1280 = vadd.f32 0.0, %v1279
    %v1281 = vpop.f32.mrb[0].mxu0
    %v1282 = vadd.f32 0.0, %v1281
    %v1283 = vpop.f32.mrb[0].mxu0
    %v1284 = vadd.f32 0.0, %v1283
    %1285 = vmatprep.mubr.bf16.mxu0 0
    %1286 = vmatmul.mubr.bf16.gmra.mrb[0].mxu0 %v216
    %v1287 = vpop.f32.mrb[0].mxu0
    %v1288 = vadd.f32 0.0, %v1287
    %v1289 = vpop.f32.mrb[0].mxu0
    %v1290 = vadd.f32 0.0, %v1289
    %v1291 = vpop.f32.mrb[0].mxu0
    %v1292 = vadd.f32 0.0, %v1291
    %v1293 = vpop.f32.mrb[0].mxu0
    %v1294 = vadd.f32 0.0, %v1293
    %1295 = vmatprep.mubr.bf16.mxu0 0
    %1296 = vmatmul.mubr.bf16.gmra.mrb[0].mxu0 %v217
    %v1297 = vpop.f32.mrb[0].mxu0
    %v1298 = vadd.f32 0.0, %v1297
    %v1299 = vpop.f32.mrb[0].mxu0
    %v1300 = vadd.f32 0.0, %v1299
    %v1301 = vpop.f32.mrb[0].mxu0
    %v1302 = vadd.f32 0.0, %v1301
    %v1303 = vpop.f32.mrb[0].mxu0
    %v1304 = vadd.f32 0.0, %v1303
    %1305 = vmatprep.mubr.bf16.mxu0 0
    %1306 = vmatmul.mubr.bf16.gmra.mrb[0].mxu0 %v218
    %v1307 = vpop.f32.mrb[0].mxu0
    %v1308 = vadd.f32 0.0, %v1307
    %v1309 = vpop.f32.mrb[0].mxu0
    %v1310 = vadd.f32 0.0, %v1309
    %v1311 = vpop.f32.mrb[0].mxu0
    %v1312 = vadd.f32 0.0, %v1311
    %v1313 = vpop.f32.mrb[0].mxu0
    %v1314 = vadd.f32 0.0, %v1313
    %1315 = vmatprep.mubr.bf16.mxu0 0
    %1316 = vmatmul.mubr.bf16.gmra.mrb[0].mxu0 %v219
    %v1317 = vpop.f32.mrb[0].mxu0
    %v1318 = vadd.f32 0.0, %v1317
    %v1319 = vpop.f32.mrb[0].mxu0
    %v1320 = vadd.f32 0.0, %v1319
    %v1321 = vpop.f32.mrb[0].mxu0
    %v1322 = vadd.f32 0.0, %v1321
    %v1323 = vpop.f32.mrb[0].mxu0
    %v1324 = vadd.f32 0.0, %v1323
    %1325 = vmatprep.mubr.bf16.mxu0 0
    %1326 = vmatmul.mubr.bf16.gmra.mrb[0].mxu0 %v220
    %v1327 = vpop.f32.mrb[0].mxu0
    %v1328 = vadd.f32 0.0, %v1327
    %v1329 = vpop.f32.mrb[0].mxu0
    %v1330 = vadd.f32 0.0, %v1329
    %v1331 = vpop.f32.mrb[0].mxu0
    %v1332 = vadd.f32 0.0, %v1331
    %v1333 = vpop.f32.mrb[0].mxu0
    %v1334 = vadd.f32 0.0, %v1333
    %1335 = vmatprep.mubr.bf16.mxu0 0
    %1336 = vmatmul.mubr.bf16.gmra.mrb[0].mxu0 %v221
    %v1337 = vpop.f32.mrb[0].mxu0
    %v1338 = vadd.f32 0.0, %v1337
    %v1339 = vpop.f32.mrb[0].mxu0
    %v1340 = vadd.f32 0.0, %v1339
    %v1341 = vpop.f32.mrb[0].mxu0
    %v1342 = vadd.f32 0.0, %v1341
    %v1343 = vpop.f32.mrb[0].mxu0
    %v1344 = vadd.f32 0.0, %v1343
    %1345 = vmatprep.mubr.bf16.mxu0 0
    %1346 = vmatmul.mubr.bf16.gmra.mrb[0].mxu0 %v222
    %v1347 = vpop.f32.mrb[0].mxu0
    %v1348 = vadd.f32 0.0, %v1347
    %v1349 = vpop.f32.mrb[0].mxu0
    %v1350 = vadd.f32 0.0, %v1349
    %v1351 = vpop.f32.mrb[0].mxu0
    %v1352 = vadd.f32 0.0, %v1351
    %v1353 = vpop.f32.mrb[0].mxu0
    %v1354 = vadd.f32 0.0, %v1353
    %1355 = vmatprep.mubr.bf16.mxu0 0
    %1356 = vmatmul.mubr.bf16.gmra.mrb[0].mxu0 %v223
    %v1357 = vpop.f32.mrb[0].mxu0
    %v1358 = vadd.f32 0.0, %v1357
    %v1359 = vpop.f32.mrb[0].mxu0
    %v1360 = vadd.f32 0.0, %v1359
    %v1361 = vpop.f32.mrb[0].mxu0
    %v1362 = vadd.f32 0.0, %v1361
    %v1363 = vpop.f32.mrb[0].mxu0
    %v1364 = vadd.f32 0.0, %v1363
    %1365 = vmatprep.mubr.bf16.mxu0 0
    %1366 = vmatmul.mubr.bf16.gmra.mrb[0].mxu0 %v224
    %v1367 = vpop.f32.mrb[0].mxu0
    %v1368 = vadd.f32 0.0, %v1367
    %v1369 = vpop.f32.mrb[0].mxu0
    %v1370 = vadd.f32 0.0, %v1369
    %v1371 = vpop.f32.mrb[0].mxu0
    %v1372 = vadd.f32 0.0, %v1371
    %v1373 = vpop.f32.mrb[0].mxu0
    %v1374 = vadd.f32 0.0, %v1373
    %1375 = vmatprep.mubr.bf16.mxu0 0
    %1376 = vmatmul.mubr.bf16.gmra.mrb[0].mxu0 %v225
    %v1377 = vpop.f32.mrb[0].mxu0
    %v1378 = vadd.f32 0.0, %v1377
    %v1379 = vpop.f32.mrb[0].mxu0
    %v1380 = vadd.f32 0.0, %v1379
    %v1381 = vpop.f32.mrb[0].mxu0
    %v1382 = vadd.f32 0.0, %v1381
    %v1383 = vpop.f32.mrb[0].mxu0
    %v1384 = vadd.f32 0.0, %v1383
    %1385 = vmatprep.mubr.bf16.mxu0 0
    %1386 = vmatmul.mubr.bf16.gmra.mrb[0].mxu0 %v226
    %v1387 = vpop.f32.mrb[0].mxu0
    %v1388 = vadd.f32 0.0, %v1387
    %v1389 = vpop.f32.mrb[0].mxu0
    %v1390 = vadd.f32 0.0, %v1389
    %v1391 = vpop.f32.mrb[0].mxu0
    %v1392 = vadd.f32 0.0, %v1391
    %v1393 = vpop.f32.mrb[0].mxu0
    %v1394 = vadd.f32 0.0, %v1393
    %1395 = vmatprep.mubr.bf16.mxu0 0
    %1396 = vmatmul.mubr.bf16.gmra.mrb[0].mxu0 %v227
    %v1397 = vpop.f32.mrb[0].mxu0
    %v1398 = vadd.f32 0.0, %v1397
    %v1399 = vpop.f32.mrb[0].mxu0
    %v1400 = vadd.f32 0.0, %v1399
    %v1401 = vpop.f32.mrb[0].mxu0
    %v1402 = vadd.f32 0.0, %v1401
    %v1403 = vpop.f32.mrb[0].mxu0
    %v1404 = vadd.f32 0.0, %v1403
    %1405 = vmatprep.mubr.bf16.mxu0 0
    %1406 = vmatmul.mubr.bf16.gmra.mrb[0].mxu0 %v228
    %v1407 = vpop.f32.mrb[0].mxu0
    %v1408 = vadd.f32 0.0, %v1407
    %v1409 = vpop.f32.mrb[0].mxu0
    %v1410 = vadd.f32 0.0, %v1409
    %v1411 = vpop.f32.mrb[0].mxu0
    %v1412 = vadd.f32 0.0, %v1411
    %v1413 = vpop.f32.mrb[0].mxu0
    %v1414 = vadd.f32 0.0, %v1413
    %1415 = vmatprep.mubr.bf16.mxu0 0
    %1416 = vmatmul.mubr.bf16.gmra.mrb[0].mxu0 %v229
    %v1417 = vpop.f32.mrb[0].mxu0
    %v1418 = vadd.f32 0.0, %v1417
    %v1419 = vpop.f32.mrb[0].mxu0
    %v1420 = vadd.f32 0.0, %v1419
    %v1421 = vpop.f32.mrb[0].mxu0
    %v1422 = vadd.f32 0.0, %v1421
    %v1423 = vpop.f32.mrb[0].mxu0
    %v1424 = vadd.f32 0.0, %v1423
    %1425 = vmatprep.mubr.bf16.mxu0 0
    %1426 = vmatmul.mubr.bf16.gmra.mrb[0].mxu0 %v230
    %v1427 = vpop.f32.mrb[0].mxu0
    %v1428 = vadd.f32 0.0, %v1427
    %v1429 = vpop.f32.mrb[0].mxu0
    %v1430 = vadd.f32 0.0, %v1429
    %v1431 = vpop.f32.mrb[0].mxu0
    %v1432 = vadd.f32 0.0, %v1431
    %v1433 = vpop.f32.mrb[0].mxu0
    %v1434 = vadd.f32 0.0, %v1433
    %1435 = vmatprep.mubr.bf16.mxu0 0
    %1436 = vmatmul.mubr.bf16.gmra.mrb[0].mxu0 %v231
    %v1437 = vpop.f32.mrb[0].mxu0
    %v1438 = vadd.f32 0.0, %v1437
    %v1439 = vpop.f32.mrb[0].mxu0
    %v1440 = vadd.f32 0.0, %v1439
    %v1441 = vpop.f32.mrb[0].mxu0
    %v1442 = vadd.f32 0.0, %v1441
    %v1443 = vpop.f32.mrb[0].mxu0
    %v1444 = vadd.f32 0.0, %v1443
    %1445 = vmatprep.mubr.bf16.mxu0 0
    %1446 = vmatmul.mubr.bf16.gmra.mrb[0].mxu0 %v232
    %v1447 = vpop.f32.mrb[0].mxu0
    %v1448 = vadd.f32 0.0, %v1447
    %v1449 = vpop.f32.mrb[0].mxu0
    %v1450 = vadd.f32 0.0, %v1449
    %v1451 = vpop.f32.mrb[0].mxu0
    %v1452 = vadd.f32 0.0, %v1451
    %v1453 = vpop.f32.mrb[0].mxu0
    %v1454 = vadd.f32 0.0, %v1453
    %1455 = vmatprep.mubr.bf16.mxu0 0
    %1456 = vmatmul.mubr.bf16.gmra.mrb[0].mxu0 %v233
    %v1457 = vpop.f32.mrb[0].mxu0
    %v1458 = vadd.f32 0.0, %v1457
    %v1459 = vpop.f32.mrb[0].mxu0
    %v1460 = vadd.f32 0.0, %v1459
    %v1461 = vpop.f32.mrb[0].mxu0
    %v1462 = vadd.f32 0.0, %v1461
    %v1463 = vpop.f32.mrb[0].mxu0
    %v1464 = vadd.f32 0.0, %v1463
    %1465 = vmatprep.mubr.bf16.mxu0 0
    %1466 = vmatmul.mubr.bf16.gmra.mrb[0].mxu0 %v234
    %v1467 = vpop.f32.mrb[0].mxu0
    %v1468 = vadd.f32 0.0, %v1467
    %v1469 = vpop.f32.mrb[0].mxu0
    %v1470 = vadd.f32 0.0, %v1469
    %v1471 = vpop.f32.mrb[0].mxu0
    %v1472 = vadd.f32 0.0, %v1471
    %v1473 = vpop.f32.mrb[0].mxu0
    %v1474 = vadd.f32 0.0, %v1473
    %1475 = vmatprep.mubr.bf16.mxu0 0
    %1476 = vmatmul.mubr.bf16.gmra.mrb[0].mxu0 %v235
    %v1477 = vpop.f32.mrb[0].mxu0
    %v1478 = vadd.f32 0.0, %v1477
    %v1479 = vpop.f32.mrb[0].mxu0
    %v1480 = vadd.f32 0.0, %v1479
    %v1481 = vpop.f32.mrb[0].mxu0
    %v1482 = vadd.f32 0.0, %v1481
    %v1483 = vpop.f32.mrb[0].mxu0
    %v1484 = vadd.f32 0.0, %v1483
    %1485 = vdwg.mxu0
    %1486 = vmatprep.subr.bf16.mxu0 0
    %1487 = vmatpush1.bf16.msra.mxu0 %v704
    %1488 = vmatprep.subr.bf16.mxu0 0
    %1489 = vmatpush1.bf16.msra.mxu0 %v709
    %1490 = vmatprep.subr.bf16.mxu0 0
    %1491 = vmatpush1.bf16.msra.mxu0 %v714
    %1492 = vmatprep.subr.bf16.mxu0 0
    %1493 = vmatpush1.bf16.msra.mxu0 %v719
    %1494 = vmatprep.subr.bf16.mxu0 0
    %1495 = vmatpush1.bf16.msra.mxu0 %v724
    %1496 = vmatprep.subr.bf16.mxu0 0
    %1497 = vmatpush1.bf16.msra.mxu0 %v729
    %1498 = vmatprep.subr.bf16.mxu0 0
    %1499 = vmatpush1.bf16.msra.mxu0 %v734
    %1500 = vmatprep.subr.bf16.mxu0 0
    %1501 = vmatpush1.bf16.msra.mxu0 %v739
    %1502 = vmatprep.subr.bf16.mxu0 0
    %1503 = vmatpush1.bf16.msra.mxu0 0
    %1504 = vmatprep.subr.bf16.mxu0 0
    %1505 = vmatpush1.bf16.msra.mxu0 0
    %1506 = vmatprep.subr.bf16.mxu0 0
    %1507 = vmatpush1.bf16.msra.mxu0 0
    %1508 = vmatprep.subr.bf16.mxu0 0
    %1509 = vmatpush1.bf16.msra.mxu0 0
    %1510 = vmatprep.subr.bf16.mxu0 0
    %1511 = vmatpush1.bf16.msra.mxu0 0
    %1512 = vmatprep.subr.bf16.mxu0 0
    %1513 = vmatpush1.bf16.msra.mxu0 0
    %1514 = vmatprep.subr.bf16.mxu0 0
    %1515 = vmatpush1.bf16.msra.mxu0 0
    %1516 = vmatprep.subr.bf16.mxu0 0
    %1517 = vmatpush1.bf16.msra.mxu0 0
    %1518 = vmatprep.mubr.bf16.mxu0 0
    %1519 = vmatmul.mubr.bf16.gmra.mrb[0].mxu0 %v204
    %v1520 = vpop.f32.mrb[0].mxu0
    %v1521 = vadd.f32 0.0, %v1520
    %v1522 = vpop.f32.mrb[0].mxu0
    %v1523 = vpop.f32.mrb[0].mxu0
    %v1524 = vadd.f32 0.0, %v1523
    %v1525 = vpop.f32.mrb[0].mxu0
    %1526 = vmatprep.mubr.bf16.mxu0 0
    %1527 = vmatmul.mubr.bf16.gmra.mrb[0].mxu0 %v205
    %v1528 = vpop.f32.mrb[0].mxu0
    %v1529 = vadd.f32 0.0, %v1528
    %v1530 = vpop.f32.mrb[0].mxu0
    %v1531 = vpop.f32.mrb[0].mxu0
    %v1532 = vadd.f32 0.0, %v1531
    %v1533 = vpop.f32.mrb[0].mxu0
    %1534 = vmatprep.mubr.bf16.mxu0 0
    %1535 = vmatmul.mubr.bf16.gmra.mrb[0].mxu0 %v206
    %v1536 = vpop.f32.mrb[0].mxu0
    %v1537 = vadd.f32 0.0, %v1536
    %v1538 = vpop.f32.mrb[0].mxu0
    %v1539 = vpop.f32.mrb[0].mxu0
    %v1540 = vadd.f32 0.0, %v1539
    %v1541 = vpop.f32.mrb[0].mxu0
    %1542 = vmatprep.mubr.bf16.mxu0 0
    %1543 = vmatmul.mubr.bf16.gmra.mrb[0].mxu0 %v207
    %v1544 = vpop.f32.mrb[0].mxu0
    %v1545 = vadd.f32 0.0, %v1544
    %v1546 = vpop.f32.mrb[0].mxu0
    %v1547 = vpop.f32.mrb[0].mxu0
    %v1548 = vadd.f32 0.0, %v1547
    %v1549 = vpop.f32.mrb[0].mxu0
    %1550 = vmatprep.mubr.bf16.mxu0 0
    %1551 = vmatmul.mubr.bf16.gmra.mrb[0].mxu0 %v208
    %v1552 = vpop.f32.mrb[0].mxu0
    %v1553 = vadd.f32 0.0, %v1552
    %v1554 = vpop.f32.mrb[0].mxu0
    %v1555 = vpop.f32.mrb[0].mxu0
    %v1556 = vadd.f32 0.0, %v1555
    %v1557 = vpop.f32.mrb[0].mxu0
    %1558 = vmatprep.mubr.bf16.mxu0 0
    %1559 = vmatmul.mubr.bf16.gmra.mrb[0].mxu0 %v209
    %v1560 = vpop.f32.mrb[0].mxu0
    %v1561 = vadd.f32 0.0, %v1560
    %v1562 = vpop.f32.mrb[0].mxu0
    %v1563 = vpop.f32.mrb[0].mxu0
    %v1564 = vadd.f32 0.0, %v1563
    %v1565 = vpop.f32.mrb[0].mxu0
    %1566 = vmatprep.mubr.bf16.mxu0 0
    %1567 = vmatmul.mubr.bf16.gmra.mrb[0].mxu0 %v210
    %v1568 = vpop.f32.mrb[0].mxu0
    %v1569 = vadd.f32 0.0, %v1568
    %v1570 = vpop.f32.mrb[0].mxu0
    %v1571 = vpop.f32.mrb[0].mxu0
    %v1572 = vadd.f32 0.0, %v1571
    %v1573 = vpop.f32.mrb[0].mxu0
    %1574 = vmatprep.mubr.bf16.mxu0 0
    %1575 = vmatmul.mubr.bf16.gmra.mrb[0].mxu0 %v211
    %v1576 = vpop.f32.mrb[0].mxu0
    %v1577 = vadd.f32 0.0, %v1576
    %v1578 = vpop.f32.mrb[0].mxu0
    %v1579 = vpop.f32.mrb[0].mxu0
    %v1580 = vadd.f32 0.0, %v1579
    %v1581 = vpop.f32.mrb[0].mxu0
    %1582 = vmatprep.mubr.bf16.mxu0 0
    %1583 = vmatmul.mubr.bf16.gmra.mrb[0].mxu0 %v212
    %v1584 = vpop.f32.mrb[0].mxu0
    %v1585 = vadd.f32 0.0, %v1584
    %v1586 = vpop.f32.mrb[0].mxu0
    %v1587 = vpop.f32.mrb[0].mxu0
    %v1588 = vadd.f32 0.0, %v1587
    %v1589 = vpop.f32.mrb[0].mxu0
    %1590 = vmatprep.mubr.bf16.mxu0 0
    %1591 = vmatmul.mubr.bf16.gmra.mrb[0].mxu0 %v213
    %v1592 = vpop.f32.mrb[0].mxu0
    %v1593 = vadd.f32 0.0, %v1592
    %v1594 = vpop.f32.mrb[0].mxu0
    %v1595 = vpop.f32.mrb[0].mxu0
    %v1596 = vadd.f32 0.0, %v1595
    %v1597 = vpop.f32.mrb[0].mxu0
    %1598 = vmatprep.mubr.bf16.mxu0 0
    %1599 = vmatmul.mubr.bf16.gmra.mrb[0].mxu0 %v214
    %v1600 = vpop.f32.mrb[0].mxu0
    %v1601 = vadd.f32 0.0, %v1600
    %v1602 = vpop.f32.mrb[0].mxu0
    %v1603 = vpop.f32.mrb[0].mxu0
    %v1604 = vadd.f32 0.0, %v1603
    %v1605 = vpop.f32.mrb[0].mxu0
    %1606 = vmatprep.mubr.bf16.mxu0 0
    %1607 = vmatmul.mubr.bf16.gmra.mrb[0].mxu0 %v215
    %v1608 = vpop.f32.mrb[0].mxu0
    %v1609 = vadd.f32 0.0, %v1608
    %v1610 = vpop.f32.mrb[0].mxu0
    %v1611 = vpop.f32.mrb[0].mxu0
    %v1612 = vadd.f32 0.0, %v1611
    %v1613 = vpop.f32.mrb[0].mxu0
    %1614 = vmatprep.mubr.bf16.mxu0 0
    %1615 = vmatmul.mubr.bf16.gmra.mrb[0].mxu0 %v216
    %v1616 = vpop.f32.mrb[0].mxu0
    %v1617 = vadd.f32 0.0, %v1616
    %v1618 = vpop.f32.mrb[0].mxu0
    %v1619 = vpop.f32.mrb[0].mxu0
    %v1620 = vadd.f32 0.0, %v1619
    %v1621 = vpop.f32.mrb[0].mxu0
    %1622 = vmatprep.mubr.bf16.mxu0 0
    %1623 = vmatmul.mubr.bf16.gmra.mrb[0].mxu0 %v217
    %v1624 = vpop.f32.mrb[0].mxu0
    %v1625 = vadd.f32 0.0, %v1624
    %v1626 = vpop.f32.mrb[0].mxu0
    %v1627 = vpop.f32.mrb[0].mxu0
    %v1628 = vadd.f32 0.0, %v1627
    %v1629 = vpop.f32.mrb[0].mxu0
    %1630 = vmatprep.mubr.bf16.mxu0 0
    %1631 = vmatmul.mubr.bf16.gmra.mrb[0].mxu0 %v218
    %v1632 = vpop.f32.mrb[0].mxu0
    %v1633 = vadd.f32 0.0, %v1632
    %v1634 = vpop.f32.mrb[0].mxu0
    %v1635 = vpop.f32.mrb[0].mxu0
    %v1636 = vadd.f32 0.0, %v1635
    %v1637 = vpop.f32.mrb[0].mxu0
    %1638 = vmatprep.mubr.bf16.mxu0 0
    %1639 = vmatmul.mubr.bf16.gmra.mrb[0].mxu0 %v219
    %v1640 = vpop.f32.mrb[0].mxu0
    %v1641 = vadd.f32 0.0, %v1640
    %v1642 = vpop.f32.mrb[0].mxu0
    %v1643 = vpop.f32.mrb[0].mxu0
    %v1644 = vadd.f32 0.0, %v1643
    %v1645 = vpop.f32.mrb[0].mxu0
    %1646 = vmatprep.mubr.bf16.mxu0 0
    %1647 = vmatmul.mubr.bf16.gmra.mrb[0].mxu0 %v220
    %v1648 = vpop.f32.mrb[0].mxu0
    %v1649 = vadd.f32 0.0, %v1648
    %v1650 = vpop.f32.mrb[0].mxu0
    %v1651 = vpop.f32.mrb[0].mxu0
    %v1652 = vadd.f32 0.0, %v1651
    %v1653 = vpop.f32.mrb[0].mxu0
    %1654 = vmatprep.mubr.bf16.mxu0 0
    %1655 = vmatmul.mubr.bf16.gmra.mrb[0].mxu0 %v221
    %v1656 = vpop.f32.mrb[0].mxu0
    %v1657 = vadd.f32 0.0, %v1656
    %v1658 = vpop.f32.mrb[0].mxu0
    %v1659 = vpop.f32.mrb[0].mxu0
    %v1660 = vadd.f32 0.0, %v1659
    %v1661 = vpop.f32.mrb[0].mxu0
    %1662 = vmatprep.mubr.bf16.mxu0 0
    %1663 = vmatmul.mubr.bf16.gmra.mrb[0].mxu0 %v222
    %v1664 = vpop.f32.mrb[0].mxu0
    %v1665 = vadd.f32 0.0, %v1664
    %v1666 = vpop.f32.mrb[0].mxu0
    %v1667 = vpop.f32.mrb[0].mxu0
    %v1668 = vadd.f32 0.0, %v1667
    %v1669 = vpop.f32.mrb[0].mxu0
    %1670 = vmatprep.mubr.bf16.mxu0 0
    %1671 = vmatmul.mubr.bf16.gmra.mrb[0].mxu0 %v223
    %v1672 = vpop.f32.mrb[0].mxu0
    %v1673 = vadd.f32 0.0, %v1672
    %v1674 = vpop.f32.mrb[0].mxu0
    %v1675 = vpop.f32.mrb[0].mxu0
    %v1676 = vadd.f32 0.0, %v1675
    %v1677 = vpop.f32.mrb[0].mxu0
    %1678 = vmatprep.mubr.bf16.mxu0 0
    %1679 = vmatmul.mubr.bf16.gmra.mrb[0].mxu0 %v224
    %v1680 = vpop.f32.mrb[0].mxu0
    %v1681 = vadd.f32 0.0, %v1680
    %v1682 = vpop.f32.mrb[0].mxu0
    %v1683 = vpop.f32.mrb[0].mxu0
    %v1684 = vadd.f32 0.0, %v1683
    %v1685 = vpop.f32.mrb[0].mxu0
    %1686 = vmatprep.mubr.bf16.mxu0 0
    %1687 = vmatmul.mubr.bf16.gmra.mrb[0].mxu0 %v225
    %v1688 = vpop.f32.mrb[0].mxu0
    %v1689 = vadd.f32 0.0, %v1688
    %v1690 = vpop.f32.mrb[0].mxu0
    %v1691 = vpop.f32.mrb[0].mxu0
    %v1692 = vadd.f32 0.0, %v1691
    %v1693 = vpop.f32.mrb[0].mxu0
    %1694 = vmatprep.mubr.bf16.mxu0 0
    %1695 = vmatmul.mubr.bf16.gmra.mrb[0].mxu0 %v226
    %v1696 = vpop.f32.mrb[0].mxu0
    %v1697 = vadd.f32 0.0, %v1696
    %v1698 = vpop.f32.mrb[0].mxu0
    %v1699 = vpop.f32.mrb[0].mxu0
    %v1700 = vadd.f32 0.0, %v1699
    %v1701 = vpop.f32.mrb[0].mxu0
    %1702 = vmatprep.mubr.bf16.mxu0 0
    %1703 = vmatmul.mubr.bf16.gmra.mrb[0].mxu0 %v227
    %v1704 = vpop.f32.mrb[0].mxu0
    %v1705 = vadd.f32 0.0, %v1704
    %v1706 = vpop.f32.mrb[0].mxu0
    %v1707 = vpop.f32.mrb[0].mxu0
    %v1708 = vadd.f32 0.0, %v1707
    %v1709 = vpop.f32.mrb[0].mxu0
    %1710 = vmatprep.mubr.bf16.mxu0 0
    %1711 = vmatmul.mubr.bf16.gmra.mrb[0].mxu0 %v228
    %v1712 = vpop.f32.mrb[0].mxu0
    %v1713 = vadd.f32 0.0, %v1712
    %v1714 = vpop.f32.mrb[0].mxu0
    %v1715 = vpop.f32.mrb[0].mxu0
    %v1716 = vadd.f32 0.0, %v1715
    %v1717 = vpop.f32.mrb[0].mxu0
    %1718 = vmatprep.mubr.bf16.mxu0 0
    %1719 = vmatmul.mubr.bf16.gmra.mrb[0].mxu0 %v229
    %v1720 = vpop.f32.mrb[0].mxu0
    %v1721 = vadd.f32 0.0, %v1720
    %v1722 = vpop.f32.mrb[0].mxu0
    %v1723 = vpop.f32.mrb[0].mxu0
    %v1724 = vadd.f32 0.0, %v1723
    %v1725 = vpop.f32.mrb[0].mxu0
    %1726 = vmatprep.mubr.bf16.mxu0 0
    %1727 = vmatmul.mubr.bf16.gmra.mrb[0].mxu0 %v230
    %v1728 = vpop.f32.mrb[0].mxu0
    %v1729 = vadd.f32 0.0, %v1728
    %v1730 = vpop.f32.mrb[0].mxu0
    %v1731 = vpop.f32.mrb[0].mxu0
    %v1732 = vadd.f32 0.0, %v1731
    %v1733 = vpop.f32.mrb[0].mxu0
    %1734 = vmatprep.mubr.bf16.mxu0 0
    %1735 = vmatmul.mubr.bf16.gmra.mrb[0].mxu0 %v231
    %v1736 = vpop.f32.mrb[0].mxu0
    %v1737 = vadd.f32 0.0, %v1736
    %v1738 = vpop.f32.mrb[0].mxu0
    %v1739 = vpop.f32.mrb[0].mxu0
    %v1740 = vadd.f32 0.0, %v1739
    %v1741 = vpop.f32.mrb[0].mxu0
    %1742 = vmatprep.mubr.bf16.mxu0 0
    %1743 = vmatmul.mubr.bf16.gmra.mrb[0].mxu0 %v232
    %v1744 = vpop.f32.mrb[0].mxu0
    %v1745 = vadd.f32 0.0, %v1744
    %v1746 = vpop.f32.mrb[0].mxu0
    %v1747 = vpop.f32.mrb[0].mxu0
    %v1748 = vadd.f32 0.0, %v1747
    %v1749 = vpop.f32.mrb[0].mxu0
    %1750 = vmatprep.mubr.bf16.mxu0 0
    %1751 = vmatmul.mubr.bf16.gmra.mrb[0].mxu0 %v233
    %v1752 = vpop.f32.mrb[0].mxu0
    %v1753 = vadd.f32 0.0, %v1752
    %v1754 = vpop.f32.mrb[0].mxu0
    %v1755 = vpop.f32.mrb[0].mxu0
    %v1756 = vadd.f32 0.0, %v1755
    %v1757 = vpop.f32.mrb[0].mxu0
    %1758 = vmatprep.mubr.bf16.mxu0 0
    %1759 = vmatmul.mubr.bf16.gmra.mrb[0].mxu0 %v234
    %v1760 = vpop.f32.mrb[0].mxu0
    %v1761 = vadd.f32 0.0, %v1760
    %v1762 = vpop.f32.mrb[0].mxu0
    %v1763 = vpop.f32.mrb[0].mxu0
    %v1764 = vadd.f32 0.0, %v1763
    %v1765 = vpop.f32.mrb[0].mxu0
    %1766 = vmatprep.mubr.bf16.mxu0 0
    %1767 = vmatmul.mubr.bf16.gmra.mrb[0].mxu0 %v235
    %v1768 = vpop.f32.mrb[0].mxu0
    %v1769 = vadd.f32 0.0, %v1768
    %v1770 = vpop.f32.mrb[0].mxu0
    %v1771 = vpop.f32.mrb[0].mxu0
    %v1772 = vadd.f32 0.0, %v1771
    %v1773 = vpop.f32.mrb[0].mxu0
    %1774 = vdwg.mxu0
    %v1775 = vld [vmem:[#allocation11] sm:$0xff]
    %v1776 = vld [vmem:[#allocation11 + $0x8] sm:$0xff]
    %v1777 = vld [vmem:[#allocation11 + $0x10] sm:$0xff]
    %v1778 = vld [vmem:[#allocation11 + $0x18] sm:$0xff]
    %v1779 = vld [vmem:[#allocation11 + $0x20] sm:$0xff]
    %v1780 = vld [vmem:[#allocation11 + $0x28] sm:$0xff]
    %v1781 = vld [vmem:[#allocation11 + $0x30] sm:$0xff]
    %v1782 = vld [vmem:[#allocation11 + $0x38] sm:$0xff]
    %v1783 = vld [vmem:[#allocation11 + $0x40] sm:$0xff]
    %v1784 = vld [vmem:[#allocation11 + $0x48] sm:$0xff]
    %v1785 = vld [vmem:[#allocation11 + $0x50] sm:$0xff]
    %v1786 = vld [vmem:[#allocation11 + $0x58] sm:$0xff]
    %v1787 = vld [vmem:[#allocation11 + $0x60] sm:$0xff]
    %v1788 = vld [vmem:[#allocation11 + $0x68] sm:$0xff]
    %v1789 = vld [vmem:[#allocation11 + $0x70] sm:$0xff]
    %v1790 = vld [vmem:[#allocation11 + $0x78] sm:$0xff]
    %v1791 = vld [vmem:[#allocation11 + $0x80] sm:$0xff]
    %v1792 = vld [vmem:[#allocation11 + $0x88] sm:$0xff]
    %v1793 = vld [vmem:[#allocation11 + $0x90] sm:$0xff]
    %v1794 = vld [vmem:[#allocation11 + $0x98] sm:$0xff]
    %v1795 = vld [vmem:[#allocation11 + $0xa0] sm:$0xff]
    %v1796 = vld [vmem:[#allocation11 + $0xa8] sm:$0xff]
    %v1797 = vld [vmem:[#allocation11 + $0xb0] sm:$0xff]
    %v1798 = vld [vmem:[#allocation11 + $0xb8] sm:$0xff]
    %v1799 = vld [vmem:[#allocation11 + $0xc0] sm:$0xff]
    %v1800 = vld [vmem:[#allocation11 + $0xc8] sm:$0xff]
    %v1801 = vld [vmem:[#allocation11 + $0xd0] sm:$0xff]
    %v1802 = vld [vmem:[#allocation11 + $0xd8] sm:$0xff]
    %v1803 = vld [vmem:[#allocation11 + $0xe0] sm:$0xff]
    %v1804 = vld [vmem:[#allocation11 + $0xe8] sm:$0xff]
    %v1805 = vld [vmem:[#allocation11 + $0xf0] sm:$0xff]
    %v1806 = vld [vmem:[#allocation11 + $0xf8] sm:$0xff]
    %v1839 = vunpack.c.l.b16 %v1775
    %v1840 = vunpack.c.h.b16 %v1775
    %v1841 = vunpack.c.l.b16 %v1776
    %v1842 = vunpack.c.h.b16 %v1776
    %v1843 = vunpack.c.l.b16 %v1777
    %v1844 = vunpack.c.h.b16 %v1777
    %v1845 = vunpack.c.l.b16 %v1778
    %v1846 = vunpack.c.h.b16 %v1778
    %v1847 = vunpack.c.l.b16 %v1779
    %v1848 = vunpack.c.h.b16 %v1779
    %v1849 = vunpack.c.l.b16 %v1780
    %v1850 = vunpack.c.h.b16 %v1780
    %v1851 = vunpack.c.l.b16 %v1781
    %v1852 = vunpack.c.h.b16 %v1781
    %v1853 = vunpack.c.l.b16 %v1782
    %v1854 = vunpack.c.h.b16 %v1782
    %v1855 = vunpack.c.l.b16 %v1783
    %v1856 = vunpack.c.h.b16 %v1783
    %v1857 = vunpack.c.l.b16 %v1784
    %v1858 = vunpack.c.h.b16 %v1784
    %v1859 = vunpack.c.l.b16 %v1785
    %v1860 = vunpack.c.h.b16 %v1785
    %v1861 = vunpack.c.l.b16 %v1786
    %v1862 = vunpack.c.h.b16 %v1786
    %v1863 = vunpack.c.l.b16 %v1787
    %v1864 = vunpack.c.h.b16 %v1787
    %v1865 = vunpack.c.l.b16 %v1788
    %v1866 = vunpack.c.h.b16 %v1788
    %v1867 = vunpack.c.l.b16 %v1789
    %v1868 = vunpack.c.h.b16 %v1789
    %v1869 = vunpack.c.l.b16 %v1790
    %v1870 = vunpack.c.h.b16 %v1790
    %v1871 = vunpack.c.l.b16 %v1791
    %v1872 = vunpack.c.h.b16 %v1791
    %v1873 = vunpack.c.l.b16 %v1792
    %v1874 = vunpack.c.h.b16 %v1792
    %v1875 = vunpack.c.l.b16 %v1793
    %v1876 = vunpack.c.h.b16 %v1793
    %v1877 = vunpack.c.l.b16 %v1794
    %v1878 = vunpack.c.h.b16 %v1794
    %v1879 = vunpack.c.l.b16 %v1795
    %v1880 = vunpack.c.h.b16 %v1795
    %v1881 = vunpack.c.l.b16 %v1796
    %v1882 = vunpack.c.h.b16 %v1796
    %v1883 = vunpack.c.l.b16 %v1797
    %v1884 = vunpack.c.h.b16 %v1797
    %v1885 = vunpack.c.l.b16 %v1798
    %v1886 = vunpack.c.h.b16 %v1798
    %v1887 = vunpack.c.l.b16 %v1799
    %v1888 = vunpack.c.h.b16 %v1799
    %v1889 = vunpack.c.l.b16 %v1800
    %v1890 = vunpack.c.h.b16 %v1800
    %v1891 = vunpack.c.l.b16 %v1801
    %v1892 = vunpack.c.h.b16 %v1801
    %v1893 = vunpack.c.l.b16 %v1802
    %v1894 = vunpack.c.h.b16 %v1802
    %v1895 = vunpack.c.l.b16 %v1803
    %v1896 = vunpack.c.h.b16 %v1803
    %v1897 = vunpack.c.l.b16 %v1804
    %v1898 = vunpack.c.h.b16 %v1804
    %v1899 = vunpack.c.l.b16 %v1805
    %v1900 = vunpack.c.h.b16 %v1805
    %v1901 = vunpack.c.l.b16 %v1806
    %v1902 = vunpack.c.h.b16 %v1806
    %v1903 = vpack.c.b16 %v1843, %v1839
    %v1904 = vpack.c.b16 %v1844, %v1840
    %v1905 = vpack.c.b16 %v1845, %v1841
    %v1906 = vpack.c.b16 %v1846, %v1842
    %v1907 = vpack.c.b16 %v1851, %v1847
    %v1908 = vpack.c.b16 %v1852, %v1848
    %v1909 = vpack.c.b16 %v1853, %v1849
    %v1910 = vpack.c.b16 %v1854, %v1850
    %v1911 = vpack.c.b16 %v1859, %v1855
    %v1912 = vpack.c.b16 %v1860, %v1856
    %v1913 = vpack.c.b16 %v1861, %v1857
    %v1914 = vpack.c.b16 %v1862, %v1858
    %v1915 = vpack.c.b16 %v1867, %v1863
    %v1916 = vpack.c.b16 %v1868, %v1864
    %v1917 = vpack.c.b16 %v1869, %v1865
    %v1918 = vpack.c.b16 %v1870, %v1866
    %v1919 = vpack.c.b16 %v1875, %v1871
    %v1920 = vpack.c.b16 %v1876, %v1872
    %v1921 = vpack.c.b16 %v1877, %v1873
    %v1922 = vpack.c.b16 %v1878, %v1874
    %v1923 = vpack.c.b16 %v1883, %v1879
    %v1924 = vpack.c.b16 %v1884, %v1880
    %v1925 = vpack.c.b16 %v1885, %v1881
    %v1926 = vpack.c.b16 %v1886, %v1882
    %v1927 = vpack.c.b16 %v1891, %v1887
    %v1928 = vpack.c.b16 %v1892, %v1888
    %v1929 = vpack.c.b16 %v1893, %v1889
    %v1930 = vpack.c.b16 %v1894, %v1890
    %v1931 = vpack.c.b16 %v1899, %v1895
    %v1932 = vpack.c.b16 %v1900, %v1896
    %v1933 = vpack.c.b16 %v1901, %v1897
    %v1934 = vpack.c.b16 %v1902, %v1898
    %1967 = vmatprep.subr.bf16.mxu0 %v1904
    %1968 = vmatpush1.bf16.msra.mxu0 %v1903
    %1969 = vmatprep.subr.bf16.mxu0 %v1908
    %1970 = vmatpush1.bf16.msra.mxu0 %v1907
    %1971 = vmatprep.subr.bf16.mxu0 %v1912
    %1972 = vmatpush1.bf16.msra.mxu0 %v1911
    %1973 = vmatprep.subr.bf16.mxu0 %v1916
    %1974 = vmatpush1.bf16.msra.mxu0 %v1915
    %1975 = vmatprep.subr.bf16.mxu0 %v1920
    %1976 = vmatpush1.bf16.msra.mxu0 %v1919
    %1977 = vmatprep.subr.bf16.mxu0 %v1924
    %1978 = vmatpush1.bf16.msra.mxu0 %v1923
    %1979 = vmatprep.subr.bf16.mxu0 %v1928
    %1980 = vmatpush1.bf16.msra.mxu0 %v1927
    %1981 = vmatprep.subr.bf16.mxu0 %v1932
    %1982 = vmatpush1.bf16.msra.mxu0 %v1931
    %1983 = vmatprep.subr.bf16.mxu0 0
    %1984 = vmatpush1.bf16.msra.mxu0 0
    %1985 = vmatprep.subr.bf16.mxu0 0
    %1986 = vmatpush1.bf16.msra.mxu0 0
    %1987 = vmatprep.subr.bf16.mxu0 0
    %1988 = vmatpush1.bf16.msra.mxu0 0
    %1989 = vmatprep.subr.bf16.mxu0 0
    %1990 = vmatpush1.bf16.msra.mxu0 0
    %1991 = vmatprep.subr.bf16.mxu0 0
    %1992 = vmatpush1.bf16.msra.mxu0 0
    %1993 = vmatprep.subr.bf16.mxu0 0
    %1994 = vmatpush1.bf16.msra.mxu0 0
    %1995 = vmatprep.subr.bf16.mxu0 0
    %1996 = vmatpush1.bf16.msra.mxu0 0
    %1997 = vmatprep.subr.bf16.mxu0 0
    %1998 = vmatpush1.bf16.msra.mxu0 0
    %1999 = vmatprep.mubr.bf16.mxu0 0
    %2000 = vmatmul.mubr.bf16.gmra.mrb[0].mxu0 %v300
    %v2001 = vpop.f32.mrb[0].mxu0
    %v2002 = vadd.f32 0.0, %v2001
    %v2003 = vpop.f32.mrb[0].mxu0
    %v2004 = vadd.f32 0.0, %v2003
    %v2005 = vpop.f32.mrb[0].mxu0
    %v2006 = vadd.f32 0.0, %v2005
    %v2007 = vpop.f32.mrb[0].mxu0
    %v2008 = vadd.f32 0.0, %v2007
    %2009 = vmatprep.mubr.bf16.mxu0 0
    %2010 = vmatmul.mubr.bf16.gmra.mrb[0].mxu0 %v301
    %v2011 = vpop.f32.mrb[0].mxu0
    %v2012 = vadd.f32 0.0, %v2011
    %v2013 = vpop.f32.mrb[0].mxu0
    %v2014 = vadd.f32 0.0, %v2013
    %v2015 = vpop.f32.mrb[0].mxu0
    %v2016 = vadd.f32 0.0, %v2015
    %v2017 = vpop.f32.mrb[0].mxu0
    %v2018 = vadd.f32 0.0, %v2017
    %2019 = vmatprep.mubr.bf16.mxu0 0
    %2020 = vmatmul.mubr.bf16.gmra.mrb[0].mxu0 %v302
    %v2021 = vpop.f32.mrb[0].mxu0
    %v2022 = vadd.f32 0.0, %v2021
    %v2023 = vpop.f32.mrb[0].mxu0
    %v2024 = vadd.f32 0.0, %v2023
    %v2025 = vpop.f32.mrb[0].mxu0
    %v2026 = vadd.f32 0.0, %v2025
    %v2027 = vpop.f32.mrb[0].mxu0
    %v2028 = vadd.f32 0.0, %v2027
    %2029 = vmatprep.mubr.bf16.mxu0 0
    %2030 = vmatmul.mubr.bf16.gmra.mrb[0].mxu0 %v303
    %v2031 = vpop.f32.mrb[0].mxu0
    %v2032 = vadd.f32 0.0, %v2031
    %v2033 = vpop.f32.mrb[0].mxu0
    %v2034 = vadd.f32 0.0, %v2033
    %v2035 = vpop.f32.mrb[0].mxu0
    %v2036 = vadd.f32 0.0, %v2035
    %v2037 = vpop.f32.mrb[0].mxu0
    %v2038 = vadd.f32 0.0, %v2037
    %2039 = vmatprep.mubr.bf16.mxu0 0
    %2040 = vmatmul.mubr.bf16.gmra.mrb[0].mxu0 %v304
    %v2041 = vpop.f32.mrb[0].mxu0
    %v2042 = vadd.f32 0.0, %v2041
    %v2043 = vpop.f32.mrb[0].mxu0
    %v2044 = vadd.f32 0.0, %v2043
    %v2045 = vpop.f32.mrb[0].mxu0
    %v2046 = vadd.f32 0.0, %v2045
    %v2047 = vpop.f32.mrb[0].mxu0
    %v2048 = vadd.f32 0.0, %v2047
    %2049 = vmatprep.mubr.bf16.mxu0 0
    %2050 = vmatmul.mubr.bf16.gmra.mrb[0].mxu0 %v305
    %v2051 = vpop.f32.mrb[0].mxu0
    %v2052 = vadd.f32 0.0, %v2051
    %v2053 = vpop.f32.mrb[0].mxu0
    %v2054 = vadd.f32 0.0, %v2053
    %v2055 = vpop.f32.mrb[0].mxu0
    %v2056 = vadd.f32 0.0, %v2055
    %v2057 = vpop.f32.mrb[0].mxu0
    %v2058 = vadd.f32 0.0, %v2057
    %2059 = vmatprep.mubr.bf16.mxu0 0
    %2060 = vmatmul.mubr.bf16.gmra.mrb[0].mxu0 %v306
    %v2061 = vpop.f32.mrb[0].mxu0
    %v2062 = vadd.f32 0.0, %v2061
    %v2063 = vpop.f32.mrb[0].mxu0
    %v2064 = vadd.f32 0.0, %v2063
    %v2065 = vpop.f32.mrb[0].mxu0
    %v2066 = vadd.f32 0.0, %v2065
    %v2067 = vpop.f32.mrb[0].mxu0
    %v2068 = vadd.f32 0.0, %v2067
    %2069 = vmatprep.mubr.bf16.mxu0 0
    %2070 = vmatmul.mubr.bf16.gmra.mrb[0].mxu0 %v307
    %v2071 = vpop.f32.mrb[0].mxu0
    %v2072 = vadd.f32 0.0, %v2071
    %v2073 = vpop.f32.mrb[0].mxu0
    %v2074 = vadd.f32 0.0, %v2073
    %v2075 = vpop.f32.mrb[0].mxu0
    %v2076 = vadd.f32 0.0, %v2075
    %v2077 = vpop.f32.mrb[0].mxu0
    %v2078 = vadd.f32 0.0, %v2077
    %2079 = vmatprep.mubr.bf16.mxu0 0
    %2080 = vmatmul.mubr.bf16.gmra.mrb[0].mxu0 %v308
    %v2081 = vpop.f32.mrb[0].mxu0
    %v2082 = vadd.f32 0.0, %v2081
    %v2083 = vpop.f32.mrb[0].mxu0
    %v2084 = vadd.f32 0.0, %v2083
    %v2085 = vpop.f32.mrb[0].mxu0
    %v2086 = vadd.f32 0.0, %v2085
    %v2087 = vpop.f32.mrb[0].mxu0
    %v2088 = vadd.f32 0.0, %v2087
    %2089 = vmatprep.mubr.bf16.mxu0 0
    %2090 = vmatmul.mubr.bf16.gmra.mrb[0].mxu0 %v309
    %v2091 = vpop.f32.mrb[0].mxu0
    %v2092 = vadd.f32 0.0, %v2091
    %v2093 = vpop.f32.mrb[0].mxu0
    %v2094 = vadd.f32 0.0, %v2093
    %v2095 = vpop.f32.mrb[0].mxu0
    %v2096 = vadd.f32 0.0, %v2095
    %v2097 = vpop.f32.mrb[0].mxu0
    %v2098 = vadd.f32 0.0, %v2097
    %2099 = vmatprep.mubr.bf16.mxu0 0
    %2100 = vmatmul.mubr.bf16.gmra.mrb[0].mxu0 %v310
    %v2101 = vpop.f32.mrb[0].mxu0
    %v2102 = vadd.f32 0.0, %v2101
    %v2103 = vpop.f32.mrb[0].mxu0
    %v2104 = vadd.f32 0.0, %v2103
    %v2105 = vpop.f32.mrb[0].mxu0
    %v2106 = vadd.f32 0.0, %v2105
    %v2107 = vpop.f32.mrb[0].mxu0
    %v2108 = vadd.f32 0.0, %v2107
    %2109 = vmatprep.mubr.bf16.mxu0 0
    %2110 = vmatmul.mubr.bf16.gmra.mrb[0].mxu0 %v311
    %v2111 = vpop.f32.mrb[0].mxu0
    %v2112 = vadd.f32 0.0, %v2111
    %v2113 = vpop.f32.mrb[0].mxu0
    %v2114 = vadd.f32 0.0, %v2113
    %v2115 = vpop.f32.mrb[0].mxu0
    %v2116 = vadd.f32 0.0, %v2115
    %v2117 = vpop.f32.mrb[0].mxu0
    %v2118 = vadd.f32 0.0, %v2117
    %2119 = vmatprep.mubr.bf16.mxu0 0
    %2120 = vmatmul.mubr.bf16.gmra.mrb[0].mxu0 %v312
    %v2121 = vpop.f32.mrb[0].mxu0
    %v2122 = vadd.f32 0.0, %v2121
    %v2123 = vpop.f32.mrb[0].mxu0
    %v2124 = vadd.f32 0.0, %v2123
    %v2125 = vpop.f32.mrb[0].mxu0
    %v2126 = vadd.f32 0.0, %v2125
    %v2127 = vpop.f32.mrb[0].mxu0
    %v2128 = vadd.f32 0.0, %v2127
    %2129 = vmatprep.mubr.bf16.mxu0 0
    %2130 = vmatmul.mubr.bf16.gmra.mrb[0].mxu0 %v313
    %v2131 = vpop.f32.mrb[0].mxu0
    %v2132 = vadd.f32 0.0, %v2131
    %v2133 = vpop.f32.mrb[0].mxu0
    %v2134 = vadd.f32 0.0, %v2133
    %v2135 = vpop.f32.mrb[0].mxu0
    %v2136 = vadd.f32 0.0, %v2135
    %v2137 = vpop.f32.mrb[0].mxu0
    %v2138 = vadd.f32 0.0, %v2137
    %2139 = vmatprep.mubr.bf16.mxu0 0
    %2140 = vmatmul.mubr.bf16.gmra.mrb[0].mxu0 %v314
    %v2141 = vpop.f32.mrb[0].mxu0
    %v2142 = vadd.f32 0.0, %v2141
    %v2143 = vpop.f32.mrb[0].mxu0
    %v2144 = vadd.f32 0.0, %v2143
    %v2145 = vpop.f32.mrb[0].mxu0
    %v2146 = vadd.f32 0.0, %v2145
    %v2147 = vpop.f32.mrb[0].mxu0
    %v2148 = vadd.f32 0.0, %v2147
    %2149 = vmatprep.mubr.bf16.mxu0 0
    %2150 = vmatmul.mubr.bf16.gmra.mrb[0].mxu0 %v315
    %v2151 = vpop.f32.mrb[0].mxu0
    %v2152 = vadd.f32 0.0, %v2151
    %v2153 = vpop.f32.mrb[0].mxu0
    %v2154 = vadd.f32 0.0, %v2153
    %v2155 = vpop.f32.mrb[0].mxu0
    %v2156 = vadd.f32 0.0, %v2155
    %v2157 = vpop.f32.mrb[0].mxu0
    %v2158 = vadd.f32 0.0, %v2157
    %2159 = vmatprep.mubr.bf16.mxu0 0
    %2160 = vmatmul.mubr.bf16.gmra.mrb[0].mxu0 %v316
    %v2161 = vpop.f32.mrb[0].mxu0
    %v2162 = vadd.f32 0.0, %v2161
    %v2163 = vpop.f32.mrb[0].mxu0
    %v2164 = vadd.f32 0.0, %v2163
    %v2165 = vpop.f32.mrb[0].mxu0
    %v2166 = vadd.f32 0.0, %v2165
    %v2167 = vpop.f32.mrb[0].mxu0
    %v2168 = vadd.f32 0.0, %v2167
    %2169 = vmatprep.mubr.bf16.mxu0 0
    %2170 = vmatmul.mubr.bf16.gmra.mrb[0].mxu0 %v317
    %v2171 = vpop.f32.mrb[0].mxu0
    %v2172 = vadd.f32 0.0, %v2171
    %v2173 = vpop.f32.mrb[0].mxu0
    %v2174 = vadd.f32 0.0, %v2173
    %v2175 = vpop.f32.mrb[0].mxu0
    %v2176 = vadd.f32 0.0, %v2175
    %v2177 = vpop.f32.mrb[0].mxu0
    %v2178 = vadd.f32 0.0, %v2177
    %2179 = vmatprep.mubr.bf16.mxu0 0
    %2180 = vmatmul.mubr.bf16.gmra.mrb[0].mxu0 %v318
    %v2181 = vpop.f32.mrb[0].mxu0
    %v2182 = vadd.f32 0.0, %v2181
    %v2183 = vpop.f32.mrb[0].mxu0
    %v2184 = vadd.f32 0.0, %v2183
    %v2185 = vpop.f32.mrb[0].mxu0
    %v2186 = vadd.f32 0.0, %v2185
    %v2187 = vpop.f32.mrb[0].mxu0
    %v2188 = vadd.f32 0.0, %v2187
    %2189 = vmatprep.mubr.bf16.mxu0 0
    %2190 = vmatmul.mubr.bf16.gmra.mrb[0].mxu0 %v319
    %v2191 = vpop.f32.mrb[0].mxu0
    %v2192 = vadd.f32 0.0, %v2191
    %v2193 = vpop.f32.mrb[0].mxu0
    %v2194 = vadd.f32 0.0, %v2193
    %v2195 = vpop.f32.mrb[0].mxu0
    %v2196 = vadd.f32 0.0, %v2195
    %v2197 = vpop.f32.mrb[0].mxu0
    %v2198 = vadd.f32 0.0, %v2197
    %2199 = vmatprep.mubr.bf16.mxu0 0
    %2200 = vmatmul.mubr.bf16.gmra.mrb[0].mxu0 %v320
    %v2201 = vpop.f32.mrb[0].mxu0
    %v2202 = vadd.f32 0.0, %v2201
    %v2203 = vpop.f32.mrb[0].mxu0
    %v2204 = vadd.f32 0.0, %v2203
    %v2205 = vpop.f32.mrb[0].mxu0
    %v2206 = vadd.f32 0.0, %v2205
    %v2207 = vpop.f32.mrb[0].mxu0
    %v2208 = vadd.f32 0.0, %v2207
    %2209 = vmatprep.mubr.bf16.mxu0 0
    %2210 = vmatmul.mubr.bf16.gmra.mrb[0].mxu0 %v321
    %v2211 = vpop.f32.mrb[0].mxu0
    %v2212 = vadd.f32 0.0, %v2211
    %v2213 = vpop.f32.mrb[0].mxu0
    %v2214 = vadd.f32 0.0, %v2213
    %v2215 = vpop.f32.mrb[0].mxu0
    %v2216 = vadd.f32 0.0, %v2215
    %v2217 = vpop.f32.mrb[0].mxu0
    %v2218 = vadd.f32 0.0, %v2217
    %2219 = vmatprep.mubr.bf16.mxu0 0
    %2220 = vmatmul.mubr.bf16.gmra.mrb[0].mxu0 %v322
    %v2221 = vpop.f32.mrb[0].mxu0
    %v2222 = vadd.f32 0.0, %v2221
    %v2223 = vpop.f32.mrb[0].mxu0
    %v2224 = vadd.f32 0.0, %v2223
    %v2225 = vpop.f32.mrb[0].mxu0
    %v2226 = vadd.f32 0.0, %v2225
    %v2227 = vpop.f32.mrb[0].mxu0
    %v2228 = vadd.f32 0.0, %v2227
    %2229 = vmatprep.mubr.bf16.mxu0 0
    %2230 = vmatmul.mubr.bf16.gmra.mrb[0].mxu0 %v323
    %v2231 = vpop.f32.mrb[0].mxu0
    %v2232 = vadd.f32 0.0, %v2231
    %v2233 = vpop.f32.mrb[0].mxu0
    %v2234 = vadd.f32 0.0, %v2233
    %v2235 = vpop.f32.mrb[0].mxu0
    %v2236 = vadd.f32 0.0, %v2235
    %v2237 = vpop.f32.mrb[0].mxu0
    %v2238 = vadd.f32 0.0, %v2237
    %2239 = vmatprep.mubr.bf16.mxu0 0
    %2240 = vmatmul.mubr.bf16.gmra.mrb[0].mxu0 %v324
    %v2241 = vpop.f32.mrb[0].mxu0
    %v2242 = vadd.f32 0.0, %v2241
    %v2243 = vpop.f32.mrb[0].mxu0
    %v2244 = vadd.f32 0.0, %v2243
    %v2245 = vpop.f32.mrb[0].mxu0
    %v2246 = vadd.f32 0.0, %v2245
    %v2247 = vpop.f32.mrb[0].mxu0
    %v2248 = vadd.f32 0.0, %v2247
    %2249 = vmatprep.mubr.bf16.mxu0 0
    %2250 = vmatmul.mubr.bf16.gmra.mrb[0].mxu0 %v325
    %v2251 = vpop.f32.mrb[0].mxu0
    %v2252 = vadd.f32 0.0, %v2251
    %v2253 = vpop.f32.mrb[0].mxu0
    %v2254 = vadd.f32 0.0, %v2253
    %v2255 = vpop.f32.mrb[0].mxu0
    %v2256 = vadd.f32 0.0, %v2255
    %v2257 = vpop.f32.mrb[0].mxu0
    %v2258 = vadd.f32 0.0, %v2257
    %2259 = vmatprep.mubr.bf16.mxu0 0
    %2260 = vmatmul.mubr.bf16.gmra.mrb[0].mxu0 %v326
    %v2261 = vpop.f32.mrb[0].mxu0
    %v2262 = vadd.f32 0.0, %v2261
    %v2263 = vpop.f32.mrb[0].mxu0
    %v2264 = vadd.f32 0.0, %v2263
    %v2265 = vpop.f32.mrb[0].mxu0
    %v2266 = vadd.f32 0.0, %v2265
    %v2267 = vpop.f32.mrb[0].mxu0
    %v2268 = vadd.f32 0.0, %v2267
    %2269 = vmatprep.mubr.bf16.mxu0 0
    %2270 = vmatmul.mubr.bf16.gmra.mrb[0].mxu0 %v327
    %v2271 = vpop.f32.mrb[0].mxu0
    %v2272 = vadd.f32 0.0, %v2271
    %v2273 = vpop.f32.mrb[0].mxu0
    %v2274 = vadd.f32 0.0, %v2273
    %v2275 = vpop.f32.mrb[0].mxu0
    %v2276 = vadd.f32 0.0, %v2275
    %v2277 = vpop.f32.mrb[0].mxu0
    %v2278 = vadd.f32 0.0, %v2277
    %2279 = vmatprep.mubr.bf16.mxu0 0
    %2280 = vmatmul.mubr.bf16.gmra.mrb[0].mxu0 %v328
    %v2281 = vpop.f32.mrb[0].mxu0
    %v2282 = vadd.f32 0.0, %v2281
    %v2283 = vpop.f32.mrb[0].mxu0
    %v2284 = vadd.f32 0.0, %v2283
    %v2285 = vpop.f32.mrb[0].mxu0
    %v2286 = vadd.f32 0.0, %v2285
    %v2287 = vpop.f32.mrb[0].mxu0
    %v2288 = vadd.f32 0.0, %v2287
    %2289 = vmatprep.mubr.bf16.mxu0 0
    %2290 = vmatmul.mubr.bf16.gmra.mrb[0].mxu0 %v329
    %v2291 = vpop.f32.mrb[0].mxu0
    %v2292 = vadd.f32 0.0, %v2291
    %v2293 = vpop.f32.mrb[0].mxu0
    %v2294 = vadd.f32 0.0, %v2293
    %v2295 = vpop.f32.mrb[0].mxu0
    %v2296 = vadd.f32 0.0, %v2295
    %v2297 = vpop.f32.mrb[0].mxu0
    %v2298 = vadd.f32 0.0, %v2297
    %2299 = vmatprep.mubr.bf16.mxu0 0
    %2300 = vmatmul.mubr.bf16.gmra.mrb[0].mxu0 %v330
    %v2301 = vpop.f32.mrb[0].mxu0
    %v2302 = vadd.f32 0.0, %v2301
    %v2303 = vpop.f32.mrb[0].mxu0
    %v2304 = vadd.f32 0.0, %v2303
    %v2305 = vpop.f32.mrb[0].mxu0
    %v2306 = vadd.f32 0.0, %v2305
    %v2307 = vpop.f32.mrb[0].mxu0
    %v2308 = vadd.f32 0.0, %v2307
    %2309 = vmatprep.mubr.bf16.mxu0 0
    %2310 = vmatmul.mubr.bf16.gmra.mrb[0].mxu0 %v331
    %v2311 = vpop.f32.mrb[0].mxu0
    %v2312 = vadd.f32 0.0, %v2311
    %v2313 = vpop.f32.mrb[0].mxu0
    %v2314 = vadd.f32 0.0, %v2313
    %v2315 = vpop.f32.mrb[0].mxu0
    %v2316 = vadd.f32 0.0, %v2315
    %v2317 = vpop.f32.mrb[0].mxu0
    %v2318 = vadd.f32 0.0, %v2317
    %2319 = vdwg.mxu0
    %2320 = vmatprep.subr.bf16.mxu0 %v1906
    %2321 = vmatpush1.bf16.msra.mxu0 %v1905
    %2322 = vmatprep.subr.bf16.mxu0 %v1910
    %2323 = vmatpush1.bf16.msra.mxu0 %v1909
    %2324 = vmatprep.subr.bf16.mxu0 %v1914
    %2325 = vmatpush1.bf16.msra.mxu0 %v1913
    %2326 = vmatprep.subr.bf16.mxu0 %v1918
    %2327 = vmatpush1.bf16.msra.mxu0 %v1917
    %2328 = vmatprep.subr.bf16.mxu0 %v1922
    %2329 = vmatpush1.bf16.msra.mxu0 %v1921
    %2330 = vmatprep.subr.bf16.mxu0 %v1926
    %2331 = vmatpush1.bf16.msra.mxu0 %v1925
    %2332 = vmatprep.subr.bf16.mxu0 %v1930
    %2333 = vmatpush1.bf16.msra.mxu0 %v1929
    %2334 = vmatprep.subr.bf16.mxu0 %v1934
    %2335 = vmatpush1.bf16.msra.mxu0 %v1933
    %2336 = vmatprep.subr.bf16.mxu0 0
    %2337 = vmatpush1.bf16.msra.mxu0 0
    %2338 = vmatprep.subr.bf16.mxu0 0
    %2339 = vmatpush1.bf16.msra.mxu0 0
    %2340 = vmatprep.subr.bf16.mxu0 0
    %2341 = vmatpush1.bf16.msra.mxu0 0
    %2342 = vmatprep.subr.bf16.mxu0 0
    %2343 = vmatpush1.bf16.msra.mxu0 0
    %2344 = vmatprep.subr.bf16.mxu0 0
    %2345 = vmatpush1.bf16.msra.mxu0 0
    %2346 = vmatprep.subr.bf16.mxu0 0
    %2347 = vmatpush1.bf16.msra.mxu0 0
    %2348 = vmatprep.subr.bf16.mxu0 0
    %2349 = vmatpush1.bf16.msra.mxu0 0
    %2350 = vmatprep.subr.bf16.mxu0 0
    %2351 = vmatpush1.bf16.msra.mxu0 0
    %2352 = vmatprep.mubr.bf16.mxu0 0
    %2353 = vmatmul.mubr.bf16.gmra.mrb[0].mxu0 %v300
    %v2354 = vpop.f32.mrb[0].mxu0
    %v2355 = vadd.f32 0.0, %v2354
    %v2356 = vpop.f32.mrb[0].mxu0
    %v2357 = vadd.f32 0.0, %v2356
    %v2358 = vpop.f32.mrb[0].mxu0
    %v2359 = vadd.f32 0.0, %v2358
    %v2360 = vpop.f32.mrb[0].mxu0
    %v2361 = vadd.f32 0.0, %v2360
    %2362 = vmatprep.mubr.bf16.mxu0 0
    %2363 = vmatmul.mubr.bf16.gmra.mrb[0].mxu0 %v301
    %v2364 = vpop.f32.mrb[0].mxu0
    %v2365 = vadd.f32 0.0, %v2364
    %v2366 = vpop.f32.mrb[0].mxu0
    %v2367 = vadd.f32 0.0, %v2366
    %v2368 = vpop.f32.mrb[0].mxu0
    %v2369 = vadd.f32 0.0, %v2368
    %v2370 = vpop.f32.mrb[0].mxu0
    %v2371 = vadd.f32 0.0, %v2370
    %2372 = vmatprep.mubr.bf16.mxu0 0
    %2373 = vmatmul.mubr.bf16.gmra.mrb[0].mxu0 %v302
    %v2374 = vpop.f32.mrb[0].mxu0
    %v2375 = vadd.f32 0.0, %v2374
    %v2376 = vpop.f32.mrb[0].mxu0
    %v2377 = vadd.f32 0.0, %v2376
    %v2378 = vpop.f32.mrb[0].mxu0
    %v2379 = vadd.f32 0.0, %v2378
    %v2380 = vpop.f32.mrb[0].mxu0
    %v2381 = vadd.f32 0.0, %v2380
    %2382 = vmatprep.mubr.bf16.mxu0 0
    %2383 = vmatmul.mubr.bf16.gmra.mrb[0].mxu0 %v303
    %v2384 = vpop.f32.mrb[0].mxu0
    %v2385 = vadd.f32 0.0, %v2384
    %v2386 = vpop.f32.mrb[0].mxu0
    %v2387 = vadd.f32 0.0, %v2386
    %v2388 = vpop.f32.mrb[0].mxu0
    %v2389 = vadd.f32 0.0, %v2388
    %v2390 = vpop.f32.mrb[0].mxu0
    %v2391 = vadd.f32 0.0, %v2390
    %2392 = vmatprep.mubr.bf16.mxu0 0
    %2393 = vmatmul.mubr.bf16.gmra.mrb[0].mxu0 %v304
    %v2394 = vpop.f32.mrb[0].mxu0
    %v2395 = vadd.f32 0.0, %v2394
    %v2396 = vpop.f32.mrb[0].mxu0
    %v2397 = vadd.f32 0.0, %v2396
    %v2398 = vpop.f32.mrb[0].mxu0
    %v2399 = vadd.f32 0.0, %v2398
    %v2400 = vpop.f32.mrb[0].mxu0
    %v2401 = vadd.f32 0.0, %v2400
    %2402 = vmatprep.mubr.bf16.mxu0 0
    %2403 = vmatmul.mubr.bf16.gmra.mrb[0].mxu0 %v305
    %v2404 = vpop.f32.mrb[0].mxu0
    %v2405 = vadd.f32 0.0, %v2404
    %v2406 = vpop.f32.mrb[0].mxu0
    %v2407 = vadd.f32 0.0, %v2406
    %v2408 = vpop.f32.mrb[0].mxu0
    %v2409 = vadd.f32 0.0, %v2408
    %v2410 = vpop.f32.mrb[0].mxu0
    %v2411 = vadd.f32 0.0, %v2410
    %2412 = vmatprep.mubr.bf16.mxu0 0
    %2413 = vmatmul.mubr.bf16.gmra.mrb[0].mxu0 %v306
    %v2414 = vpop.f32.mrb[0].mxu0
    %v2415 = vadd.f32 0.0, %v2414
    %v2416 = vpop.f32.mrb[0].mxu0
    %v2417 = vadd.f32 0.0, %v2416
    %v2418 = vpop.f32.mrb[0].mxu0
    %v2419 = vadd.f32 0.0, %v2418
    %v2420 = vpop.f32.mrb[0].mxu0
    %v2421 = vadd.f32 0.0, %v2420
    %2422 = vmatprep.mubr.bf16.mxu0 0
    %2423 = vmatmul.mubr.bf16.gmra.mrb[0].mxu0 %v307
    %v2424 = vpop.f32.mrb[0].mxu0
    %v2425 = vadd.f32 0.0, %v2424
    %v2426 = vpop.f32.mrb[0].mxu0
    %v2427 = vadd.f32 0.0, %v2426
    %v2428 = vpop.f32.mrb[0].mxu0
    %v2429 = vadd.f32 0.0, %v2428
    %v2430 = vpop.f32.mrb[0].mxu0
    %v2431 = vadd.f32 0.0, %v2430
    %2432 = vmatprep.mubr.bf16.mxu0 0
    %2433 = vmatmul.mubr.bf16.gmra.mrb[0].mxu0 %v308
    %v2434 = vpop.f32.mrb[0].mxu0
    %v2435 = vadd.f32 0.0, %v2434
    %v2436 = vpop.f32.mrb[0].mxu0
    %v2437 = vadd.f32 0.0, %v2436
    %v2438 = vpop.f32.mrb[0].mxu0
    %v2439 = vadd.f32 0.0, %v2438
    %v2440 = vpop.f32.mrb[0].mxu0
    %v2441 = vadd.f32 0.0, %v2440
    %2442 = vmatprep.mubr.bf16.mxu0 0
    %2443 = vmatmul.mubr.bf16.gmra.mrb[0].mxu0 %v309
    %v2444 = vpop.f32.mrb[0].mxu0
    %v2445 = vadd.f32 0.0, %v2444
    %v2446 = vpop.f32.mrb[0].mxu0
    %v2447 = vadd.f32 0.0, %v2446
    %v2448 = vpop.f32.mrb[0].mxu0
    %v2449 = vadd.f32 0.0, %v2448
    %v2450 = vpop.f32.mrb[0].mxu0
    %v2451 = vadd.f32 0.0, %v2450
    %2452 = vmatprep.mubr.bf16.mxu0 0
    %2453 = vmatmul.mubr.bf16.gmra.mrb[0].mxu0 %v310
    %v2454 = vpop.f32.mrb[0].mxu0
    %v2455 = vadd.f32 0.0, %v2454
    %v2456 = vpop.f32.mrb[0].mxu0
    %v2457 = vadd.f32 0.0, %v2456
    %v2458 = vpop.f32.mrb[0].mxu0
    %v2459 = vadd.f32 0.0, %v2458
    %v2460 = vpop.f32.mrb[0].mxu0
    %v2461 = vadd.f32 0.0, %v2460
    %2462 = vmatprep.mubr.bf16.mxu0 0
    %2463 = vmatmul.mubr.bf16.gmra.mrb[0].mxu0 %v311
    %v2464 = vpop.f32.mrb[0].mxu0
    %v2465 = vadd.f32 0.0, %v2464
    %v2466 = vpop.f32.mrb[0].mxu0
    %v2467 = vadd.f32 0.0, %v2466
    %v2468 = vpop.f32.mrb[0].mxu0
    %v2469 = vadd.f32 0.0, %v2468
    %v2470 = vpop.f32.mrb[0].mxu0
    %v2471 = vadd.f32 0.0, %v2470
    %2472 = vmatprep.mubr.bf16.mxu0 0
    %2473 = vmatmul.mubr.bf16.gmra.mrb[0].mxu0 %v312
    %v2474 = vpop.f32.mrb[0].mxu0
    %v2475 = vadd.f32 0.0, %v2474
    %v2476 = vpop.f32.mrb[0].mxu0
    %v2477 = vadd.f32 0.0, %v2476
    %v2478 = vpop.f32.mrb[0].mxu0
    %v2479 = vadd.f32 0.0, %v2478
    %v2480 = vpop.f32.mrb[0].mxu0
    %v2481 = vadd.f32 0.0, %v2480
    %2482 = vmatprep.mubr.bf16.mxu0 0
    %2483 = vmatmul.mubr.bf16.gmra.mrb[0].mxu0 %v313
    %v2484 = vpop.f32.mrb[0].mxu0
    %v2485 = vadd.f32 0.0, %v2484
    %v2486 = vpop.f32.mrb[0].mxu0
    %v2487 = vadd.f32 0.0, %v2486
    %v2488 = vpop.f32.mrb[0].mxu0
    %v2489 = vadd.f32 0.0, %v2488
    %v2490 = vpop.f32.mrb[0].mxu0
    %v2491 = vadd.f32 0.0, %v2490
    %2492 = vmatprep.mubr.bf16.mxu0 0
    %2493 = vmatmul.mubr.bf16.gmra.mrb[0].mxu0 %v314
    %v2494 = vpop.f32.mrb[0].mxu0
    %v2495 = vadd.f32 0.0, %v2494
    %v2496 = vpop.f32.mrb[0].mxu0
    %v2497 = vadd.f32 0.0, %v2496
    %v2498 = vpop.f32.mrb[0].mxu0
    %v2499 = vadd.f32 0.0, %v2498
    %v2500 = vpop.f32.mrb[0].mxu0
    %v2501 = vadd.f32 0.0, %v2500
    %2502 = vmatprep.mubr.bf16.mxu0 0
    %2503 = vmatmul.mubr.bf16.gmra.mrb[0].mxu0 %v315
    %v2504 = vpop.f32.mrb[0].mxu0
    %v2505 = vadd.f32 0.0, %v2504
    %v2506 = vpop.f32.mrb[0].mxu0
    %v2507 = vadd.f32 0.0, %v2506
    %v2508 = vpop.f32.mrb[0].mxu0
    %v2509 = vadd.f32 0.0, %v2508
    %v2510 = vpop.f32.mrb[0].mxu0
    %v2511 = vadd.f32 0.0, %v2510
    %2512 = vmatprep.mubr.bf16.mxu0 0
    %2513 = vmatmul.mubr.bf16.gmra.mrb[0].mxu0 %v316
    %v2514 = vpop.f32.mrb[0].mxu0
    %v2515 = vadd.f32 0.0, %v2514
    %v2516 = vpop.f32.mrb[0].mxu0
    %v2517 = vadd.f32 0.0, %v2516
    %v2518 = vpop.f32.mrb[0].mxu0
    %v2519 = vadd.f32 0.0, %v2518
    %v2520 = vpop.f32.mrb[0].mxu0
    %v2521 = vadd.f32 0.0, %v2520
    %2522 = vmatprep.mubr.bf16.mxu0 0
    %2523 = vmatmul.mubr.bf16.gmra.mrb[0].mxu0 %v317
    %v2524 = vpop.f32.mrb[0].mxu0
    %v2525 = vadd.f32 0.0, %v2524
    %v2526 = vpop.f32.mrb[0].mxu0
    %v2527 = vadd.f32 0.0, %v2526
    %v2528 = vpop.f32.mrb[0].mxu0
    %v2529 = vadd.f32 0.0, %v2528
    %v2530 = vpop.f32.mrb[0].mxu0
    %v2531 = vadd.f32 0.0, %v2530
    %2532 = vmatprep.mubr.bf16.mxu0 0
    %2533 = vmatmul.mubr.bf16.gmra.mrb[0].mxu0 %v318
    %v2534 = vpop.f32.mrb[0].mxu0
    %v2535 = vadd.f32 0.0, %v2534
    %v2536 = vpop.f32.mrb[0].mxu0
    %v2537 = vadd.f32 0.0, %v2536
    %v2538 = vpop.f32.mrb[0].mxu0
    %v2539 = vadd.f32 0.0, %v2538
    %v2540 = vpop.f32.mrb[0].mxu0
    %v2541 = vadd.f32 0.0, %v2540
    %2542 = vmatprep.mubr.bf16.mxu0 0
    %2543 = vmatmul.mubr.bf16.gmra.mrb[0].mxu0 %v319
    %v2544 = vpop.f32.mrb[0].mxu0
    %v2545 = vadd.f32 0.0, %v2544
    %v2546 = vpop.f32.mrb[0].mxu0
    %v2547 = vadd.f32 0.0, %v2546
    %v2548 = vpop.f32.mrb[0].mxu0
    %v2549 = vadd.f32 0.0, %v2548
    %v2550 = vpop.f32.mrb[0].mxu0
    %v2551 = vadd.f32 0.0, %v2550
    %2552 = vmatprep.mubr.bf16.mxu0 0
    %2553 = vmatmul.mubr.bf16.gmra.mrb[0].mxu0 %v320
    %v2554 = vpop.f32.mrb[0].mxu0
    %v2555 = vadd.f32 0.0, %v2554
    %v2556 = vpop.f32.mrb[0].mxu0
    %v2557 = vadd.f32 0.0, %v2556
    %v2558 = vpop.f32.mrb[0].mxu0
    %v2559 = vadd.f32 0.0, %v2558
    %v2560 = vpop.f32.mrb[0].mxu0
    %v2561 = vadd.f32 0.0, %v2560
    %2562 = vmatprep.mubr.bf16.mxu0 0
    %2563 = vmatmul.mubr.bf16.gmra.mrb[0].mxu0 %v321
    %v2564 = vpop.f32.mrb[0].mxu0
    %v2565 = vadd.f32 0.0, %v2564
    %v2566 = vpop.f32.mrb[0].mxu0
    %v2567 = vadd.f32 0.0, %v2566
    %v2568 = vpop.f32.mrb[0].mxu0
    %v2569 = vadd.f32 0.0, %v2568
    %v2570 = vpop.f32.mrb[0].mxu0
    %v2571 = vadd.f32 0.0, %v2570
    %2572 = vmatprep.mubr.bf16.mxu0 0
    %2573 = vmatmul.mubr.bf16.gmra.mrb[0].mxu0 %v322
    %v2574 = vpop.f32.mrb[0].mxu0
    %v2575 = vadd.f32 0.0, %v2574
    %v2576 = vpop.f32.mrb[0].mxu0
    %v2577 = vadd.f32 0.0, %v2576
    %v2578 = vpop.f32.mrb[0].mxu0
    %v2579 = vadd.f32 0.0, %v2578
    %v2580 = vpop.f32.mrb[0].mxu0
    %v2581 = vadd.f32 0.0, %v2580
    %2582 = vmatprep.mubr.bf16.mxu0 0
    %2583 = vmatmul.mubr.bf16.gmra.mrb[0].mxu0 %v323
    %v2584 = vpop.f32.mrb[0].mxu0
    %v2585 = vadd.f32 0.0, %v2584
    %v2586 = vpop.f32.mrb[0].mxu0
    %v2587 = vadd.f32 0.0, %v2586
    %v2588 = vpop.f32.mrb[0].mxu0
    %v2589 = vadd.f32 0.0, %v2588
    %v2590 = vpop.f32.mrb[0].mxu0
    %v2591 = vadd.f32 0.0, %v2590
    %2592 = vmatprep.mubr.bf16.mxu0 0
    %2593 = vmatmul.mubr.bf16.gmra.mrb[0].mxu0 %v324
    %v2594 = vpop.f32.mrb[0].mxu0
    %v2595 = vadd.f32 0.0, %v2594
    %v2596 = vpop.f32.mrb[0].mxu0
    %v2597 = vadd.f32 0.0, %v2596
    %v2598 = vpop.f32.mrb[0].mxu0
    %v2599 = vadd.f32 0.0, %v2598
    %v2600 = vpop.f32.mrb[0].mxu0
    %v2601 = vadd.f32 0.0, %v2600
    %2602 = vmatprep.mubr.bf16.mxu0 0
    %2603 = vmatmul.mubr.bf16.gmra.mrb[0].mxu0 %v325
    %v2604 = vpop.f32.mrb[0].mxu0
    %v2605 = vadd.f32 0.0, %v2604
    %v2606 = vpop.f32.mrb[0].mxu0
    %v2607 = vadd.f32 0.0, %v2606
    %v2608 = vpop.f32.mrb[0].mxu0
    %v2609 = vadd.f32 0.0, %v2608
    %v2610 = vpop.f32.mrb[0].mxu0
    %v2611 = vadd.f32 0.0, %v2610
    %2612 = vmatprep.mubr.bf16.mxu0 0
    %2613 = vmatmul.mubr.bf16.gmra.mrb[0].mxu0 %v326
    %v2614 = vpop.f32.mrb[0].mxu0
    %v2615 = vadd.f32 0.0, %v2614
    %v2616 = vpop.f32.mrb[0].mxu0
    %v2617 = vadd.f32 0.0, %v2616
    %v2618 = vpop.f32.mrb[0].mxu0
    %v2619 = vadd.f32 0.0, %v2618
    %v2620 = vpop.f32.mrb[0].mxu0
    %v2621 = vadd.f32 0.0, %v2620
    %2622 = vmatprep.mubr.bf16.mxu0 0
    %2623 = vmatmul.mubr.bf16.gmra.mrb[0].mxu0 %v327
    %v2624 = vpop.f32.mrb[0].mxu0
    %v2625 = vadd.f32 0.0, %v2624
    %v2626 = vpop.f32.mrb[0].mxu0
    %v2627 = vadd.f32 0.0, %v2626
    %v2628 = vpop.f32.mrb[0].mxu0
    %v2629 = vadd.f32 0.0, %v2628
    %v2630 = vpop.f32.mrb[0].mxu0
    %v2631 = vadd.f32 0.0, %v2630
    %2632 = vmatprep.mubr.bf16.mxu0 0
    %2633 = vmatmul.mubr.bf16.gmra.mrb[0].mxu0 %v328
    %v2634 = vpop.f32.mrb[0].mxu0
    %v2635 = vadd.f32 0.0, %v2634
    %v2636 = vpop.f32.mrb[0].mxu0
    %v2637 = vadd.f32 0.0, %v2636
    %v2638 = vpop.f32.mrb[0].mxu0
    %v2639 = vadd.f32 0.0, %v2638
    %v2640 = vpop.f32.mrb[0].mxu0
    %v2641 = vadd.f32 0.0, %v2640
    %2642 = vmatprep.mubr.bf16.mxu0 0
    %2643 = vmatmul.mubr.bf16.gmra.mrb[0].mxu0 %v329
    %v2644 = vpop.f32.mrb[0].mxu0
    %v2645 = vadd.f32 0.0, %v2644
    %v2646 = vpop.f32.mrb[0].mxu0
    %v2647 = vadd.f32 0.0, %v2646
    %v2648 = vpop.f32.mrb[0].mxu0
    %v2649 = vadd.f32 0.0, %v2648
    %v2650 = vpop.f32.mrb[0].mxu0
    %v2651 = vadd.f32 0.0, %v2650
    %2652 = vmatprep.mubr.bf16.mxu0 0
    %2653 = vmatmul.mubr.bf16.gmra.mrb[0].mxu0 %v330
    %v2654 = vpop.f32.mrb[0].mxu0
    %v2655 = vadd.f32 0.0, %v2654
    %v2656 = vpop.f32.mrb[0].mxu0
    %v2657 = vadd.f32 0.0, %v2656
    %v2658 = vpop.f32.mrb[0].mxu0
    %v2659 = vadd.f32 0.0, %v2658
    %v2660 = vpop.f32.mrb[0].mxu0
    %v2661 = vadd.f32 0.0, %v2660
    %2662 = vmatprep.mubr.bf16.mxu0 0
    %2663 = vmatmul.mubr.bf16.gmra.mrb[0].mxu0 %v331
    %v2664 = vpop.f32.mrb[0].mxu0
    %v2665 = vadd.f32 0.0, %v2664
    %v2666 = vpop.f32.mrb[0].mxu0
    %v2667 = vadd.f32 0.0, %v2666
    %v2668 = vpop.f32.mrb[0].mxu0
    %v2669 = vadd.f32 0.0, %v2668
    %v2670 = vpop.f32.mrb[0].mxu0
    %v2671 = vadd.f32 0.0, %v2670
    %2672 = vdwg.mxu0
    %v2673 = vld [vmem:[#allocation13] sm:$0xff]
    %v2674 = vld [vmem:[#allocation13 + $0x8] sm:$0xf]
    %v2675 = vld [vmem:[#allocation13 + $0xc] sm:$0xff]
    %v2676 = vld [vmem:[#allocation13 + $0x14] sm:$0xf]
    %v2677 = vld [vmem:[#allocation13 + $0x18] sm:$0xff]
    %v2678 = vld [vmem:[#allocation13 + $0x20] sm:$0xf]
    %v2679 = vld [vmem:[#allocation13 + $0x24] sm:$0xff]
    %v2680 = vld [vmem:[#allocation13 + $0x2c] sm:$0xf]
    %v2681 = vld [vmem:[#allocation13 + $0x30] sm:$0xff]
    %v2682 = vld [vmem:[#allocation13 + $0x38] sm:$0xf]
    %v2683 = vld [vmem:[#allocation13 + $0x3c] sm:$0xff]
    %v2684 = vld [vmem:[#allocation13 + $0x44] sm:$0xf]
    %v2685 = vld [vmem:[#allocation13 + $0x48] sm:$0xff]
    %v2686 = vld [vmem:[#allocation13 + $0x50] sm:$0xf]
    %v2687 = vld [vmem:[#allocation13 + $0x54] sm:$0xff]
    %v2688 = vld [vmem:[#allocation13 + $0x5c] sm:$0xf]
    %v2689 = vld [vmem:[#allocation13 + $0x60] sm:$0xff]
    %v2690 = vld [vmem:[#allocation13 + $0x68] sm:$0xf]
    %v2691 = vld [vmem:[#allocation13 + $0x6c] sm:$0xff]
    %v2692 = vld [vmem:[#allocation13 + $0x74] sm:$0xf]
    %v2693 = vld [vmem:[#allocation13 + $0x78] sm:$0xff]
    %v2694 = vld [vmem:[#allocation13 + $0x80] sm:$0xf]
    %v2695 = vld [vmem:[#allocation13 + $0x84] sm:$0xff]
    %v2696 = vld [vmem:[#allocation13 + $0x8c] sm:$0xf]
    %v2697 = vld [vmem:[#allocation13 + $0x90] sm:$0xff]
    %v2698 = vld [vmem:[#allocation13 + $0x98] sm:$0xf]
    %v2699 = vld [vmem:[#allocation13 + $0x9c] sm:$0xff]
    %v2700 = vld [vmem:[#allocation13 + $0xa4] sm:$0xf]
    %v2701 = vld [vmem:[#allocation13 + $0xa8] sm:$0xff]
    %v2702 = vld [vmem:[#allocation13 + $0xb0] sm:$0xf]
    %v2703 = vld [vmem:[#allocation13 + $0xb4] sm:$0xff]
    %v2704 = vld [vmem:[#allocation13 + $0xbc] sm:$0xf]
    %v2737 = vunpack.c.l.b16 %v2673
    %v2738 = vunpack.c.h.b16 %v2673
    %v2739 = vunpack.c.l.b16 %v2674
    %v2740 = vunpack.c.l.b16 %v2675
    %v2741 = vunpack.c.h.b16 %v2675
    %v2742 = vunpack.c.l.b16 %v2676
    %v2743 = vunpack.c.l.b16 %v2677
    %v2744 = vunpack.c.h.b16 %v2677
    %v2745 = vunpack.c.l.b16 %v2678
    %v2746 = vunpack.c.l.b16 %v2679
    %v2747 = vunpack.c.h.b16 %v2679
    %v2748 = vunpack.c.l.b16 %v2680
    %v2749 = vunpack.c.l.b16 %v2681
    %v2750 = vunpack.c.h.b16 %v2681
    %v2751 = vunpack.c.l.b16 %v2682
    %v2752 = vunpack.c.l.b16 %v2683
    %v2753 = vunpack.c.h.b16 %v2683
    %v2754 = vunpack.c.l.b16 %v2684
    %v2755 = vunpack.c.l.b16 %v2685
    %v2756 = vunpack.c.h.b16 %v2685
    %v2757 = vunpack.c.l.b16 %v2686
    %v2758 = vunpack.c.l.b16 %v2687
    %v2759 = vunpack.c.h.b16 %v2687
    %v2760 = vunpack.c.l.b16 %v2688
    %v2761 = vunpack.c.l.b16 %v2689
    %v2762 = vunpack.c.h.b16 %v2689
    %v2763 = vunpack.c.l.b16 %v2690
    %v2764 = vunpack.c.l.b16 %v2691
    %v2765 = vunpack.c.h.b16 %v2691
    %v2766 = vunpack.c.l.b16 %v2692
    %v2767 = vunpack.c.l.b16 %v2693
    %v2768 = vunpack.c.h.b16 %v2693
    %v2769 = vunpack.c.l.b16 %v2694
    %v2770 = vunpack.c.l.b16 %v2695
    %v2771 = vunpack.c.h.b16 %v2695
    %v2772 = vunpack.c.l.b16 %v2696
    %v2773 = vunpack.c.l.b16 %v2697
    %v2774 = vunpack.c.h.b16 %v2697
    %v2775 = vunpack.c.l.b16 %v2698
    %v2776 = vunpack.c.l.b16 %v2699
    %v2777 = vunpack.c.h.b16 %v2699
    %v2778 = vunpack.c.l.b16 %v2700
    %v2779 = vunpack.c.l.b16 %v2701
    %v2780 = vunpack.c.h.b16 %v2701
    %v2781 = vunpack.c.l.b16 %v2702
    %v2782 = vunpack.c.l.b16 %v2703
    %v2783 = vunpack.c.h.b16 %v2703
    %v2784 = vunpack.c.l.b16 %v2704
    %v2785 = vpack.c.b16 %v2740, %v2737
    %v2786 = vpack.c.b16 %v2741, %v2738
    %v2787 = vpack.c.b16 %v2742, %v2739
    %v2788 = vpack.c.b16 %v2746, %v2743
    %v2789 = vpack.c.b16 %v2747, %v2744
    %v2790 = vpack.c.b16 %v2748, %v2745
    %v2791 = vpack.c.b16 %v2752, %v2749
    %v2792 = vpack.c.b16 %v2753, %v2750
    %v2793 = vpack.c.b16 %v2754, %v2751
    %v2794 = vpack.c.b16 %v2758, %v2755
    %v2795 = vpack.c.b16 %v2759, %v2756
    %v2796 = vpack.c.b16 %v2760, %v2757
    %v2797 = vpack.c.b16 %v2764, %v2761
    %v2798 = vpack.c.b16 %v2765, %v2762
    %v2799 = vpack.c.b16 %v2766, %v2763
    %v2800 = vpack.c.b16 %v2770, %v2767
    %v2801 = vpack.c.b16 %v2771, %v2768
    %v2802 = vpack.c.b16 %v2772, %v2769
    %v2803 = vpack.c.b16 %v2776, %v2773
    %v2804 = vpack.c.b16 %v2777, %v2774
    %v2805 = vpack.c.b16 %v2778, %v2775
    %v2806 = vpack.c.b16 %v2782, %v2779
    %v2807 = vpack.c.b16 %v2783, %v2780
    %v2808 = vpack.c.b16 %v2784, %v2781
    %2833 = vmatprep.subr.bf16.mxu0 %v2786
    %2834 = vmatpush1.bf16.msra.mxu0 %v2785
    %2835 = vmatprep.subr.bf16.mxu0 %v2789
    %2836 = vmatpush1.bf16.msra.mxu0 %v2788
    %2837 = vmatprep.subr.bf16.mxu0 %v2792
    %2838 = vmatpush1.bf16.msra.mxu0 %v2791
    %2839 = vmatprep.subr.bf16.mxu0 %v2795
    %2840 = vmatpush1.bf16.msra.mxu0 %v2794
    %2841 = vmatprep.subr.bf16.mxu0 %v2798
    %2842 = vmatpush1.bf16.msra.mxu0 %v2797
    %2843 = vmatprep.subr.bf16.mxu0 %v2801
    %2844 = vmatpush1.bf16.msra.mxu0 %v2800
    %2845 = vmatprep.subr.bf16.mxu0 %v2804
    %2846 = vmatpush1.bf16.msra.mxu0 %v2803
    %2847 = vmatprep.subr.bf16.mxu0 %v2807
    %2848 = vmatpush1.bf16.msra.mxu0 %v2806
    %2849 = vmatprep.subr.bf16.mxu0 0
    %2850 = vmatpush1.bf16.msra.mxu0 0
    %2851 = vmatprep.subr.bf16.mxu0 0
    %2852 = vmatpush1.bf16.msra.mxu0 0
    %2853 = vmatprep.subr.bf16.mxu0 0
    %2854 = vmatpush1.bf16.msra.mxu0 0
    %2855 = vmatprep.subr.bf16.mxu0 0
    %2856 = vmatpush1.bf16.msra.mxu0 0
    %2857 = vmatprep.subr.bf16.mxu0 0
    %2858 = vmatpush1.bf16.msra.mxu0 0
    %2859 = vmatprep.subr.bf16.mxu0 0
    %2860 = vmatpush1.bf16.msra.mxu0 0
    %2861 = vmatprep.subr.bf16.mxu0 0
    %2862 = vmatpush1.bf16.msra.mxu0 0
    %2863 = vmatprep.subr.bf16.mxu0 0
    %2864 = vmatpush1.bf16.msra.mxu0 0
    %2865 = vmatprep.mubr.bf16.mxu0 0
    %2866 = vmatmul.mubr.bf16.gmra.mrb[0].mxu0 %v396
    %v2867 = vpop.f32.mrb[0].mxu0
    %v2868 = vadd.f32 0.0, %v2867
    %v2869 = vpop.f32.mrb[0].mxu0
    %v2870 = vadd.f32 0.0, %v2869
    %v2871 = vpop.f32.mrb[0].mxu0
    %v2872 = vadd.f32 0.0, %v2871
    %v2873 = vpop.f32.mrb[0].mxu0
    %v2874 = vadd.f32 0.0, %v2873
    %2875 = vmatprep.mubr.bf16.mxu0 0
    %2876 = vmatmul.mubr.bf16.gmra.mrb[0].mxu0 %v397
    %v2877 = vpop.f32.mrb[0].mxu0
    %v2878 = vadd.f32 0.0, %v2877
    %v2879 = vpop.f32.mrb[0].mxu0
    %v2880 = vadd.f32 0.0, %v2879
    %v2881 = vpop.f32.mrb[0].mxu0
    %v2882 = vadd.f32 0.0, %v2881
    %v2883 = vpop.f32.mrb[0].mxu0
    %v2884 = vadd.f32 0.0, %v2883
    %2885 = vmatprep.mubr.bf16.mxu0 0
    %2886 = vmatmul.mubr.bf16.gmra.mrb[0].mxu0 %v398
    %v2887 = vpop.f32.mrb[0].mxu0
    %v2888 = vadd.f32 0.0, %v2887
    %v2889 = vpop.f32.mrb[0].mxu0
    %v2890 = vadd.f32 0.0, %v2889
    %v2891 = vpop.f32.mrb[0].mxu0
    %v2892 = vadd.f32 0.0, %v2891
    %v2893 = vpop.f32.mrb[0].mxu0
    %v2894 = vadd.f32 0.0, %v2893
    %2895 = vmatprep.mubr.bf16.mxu0 0
    %2896 = vmatmul.mubr.bf16.gmra.mrb[0].mxu0 %v399
    %v2897 = vpop.f32.mrb[0].mxu0
    %v2898 = vadd.f32 0.0, %v2897
    %v2899 = vpop.f32.mrb[0].mxu0
    %v2900 = vadd.f32 0.0, %v2899
    %v2901 = vpop.f32.mrb[0].mxu0
    %v2902 = vadd.f32 0.0, %v2901
    %v2903 = vpop.f32.mrb[0].mxu0
    %v2904 = vadd.f32 0.0, %v2903
    %2905 = vmatprep.mubr.bf16.mxu0 0
    %2906 = vmatmul.mubr.bf16.gmra.mrb[0].mxu0 %v400
    %v2907 = vpop.f32.mrb[0].mxu0
    %v2908 = vadd.f32 0.0, %v2907
    %v2909 = vpop.f32.mrb[0].mxu0
    %v2910 = vadd.f32 0.0, %v2909
    %v2911 = vpop.f32.mrb[0].mxu0
    %v2912 = vadd.f32 0.0, %v2911
    %v2913 = vpop.f32.mrb[0].mxu0
    %v2914 = vadd.f32 0.0, %v2913
    %2915 = vmatprep.mubr.bf16.mxu0 0
    %2916 = vmatmul.mubr.bf16.gmra.mrb[0].mxu0 %v401
    %v2917 = vpop.f32.mrb[0].mxu0
    %v2918 = vadd.f32 0.0, %v2917
    %v2919 = vpop.f32.mrb[0].mxu0
    %v2920 = vadd.f32 0.0, %v2919
    %v2921 = vpop.f32.mrb[0].mxu0
    %v2922 = vadd.f32 0.0, %v2921
    %v2923 = vpop.f32.mrb[0].mxu0
    %v2924 = vadd.f32 0.0, %v2923
    %2925 = vmatprep.mubr.bf16.mxu0 0
    %2926 = vmatmul.mubr.bf16.gmra.mrb[0].mxu0 %v402
    %v2927 = vpop.f32.mrb[0].mxu0
    %v2928 = vadd.f32 0.0, %v2927
    %v2929 = vpop.f32.mrb[0].mxu0
    %v2930 = vadd.f32 0.0, %v2929
    %v2931 = vpop.f32.mrb[0].mxu0
    %v2932 = vadd.f32 0.0, %v2931
    %v2933 = vpop.f32.mrb[0].mxu0
    %v2934 = vadd.f32 0.0, %v2933
    %2935 = vmatprep.mubr.bf16.mxu0 0
    %2936 = vmatmul.mubr.bf16.gmra.mrb[0].mxu0 %v403
    %v2937 = vpop.f32.mrb[0].mxu0
    %v2938 = vadd.f32 0.0, %v2937
    %v2939 = vpop.f32.mrb[0].mxu0
    %v2940 = vadd.f32 0.0, %v2939
    %v2941 = vpop.f32.mrb[0].mxu0
    %v2942 = vadd.f32 0.0, %v2941
    %v2943 = vpop.f32.mrb[0].mxu0
    %v2944 = vadd.f32 0.0, %v2943
    %2945 = vmatprep.mubr.bf16.mxu0 0
    %2946 = vmatmul.mubr.bf16.gmra.mrb[0].mxu0 %v404
    %v2947 = vpop.f32.mrb[0].mxu0
    %v2948 = vadd.f32 0.0, %v2947
    %v2949 = vpop.f32.mrb[0].mxu0
    %v2950 = vadd.f32 0.0, %v2949
    %v2951 = vpop.f32.mrb[0].mxu0
    %v2952 = vadd.f32 0.0, %v2951
    %v2953 = vpop.f32.mrb[0].mxu0
    %v2954 = vadd.f32 0.0, %v2953
    %2955 = vmatprep.mubr.bf16.mxu0 0
    %2956 = vmatmul.mubr.bf16.gmra.mrb[0].mxu0 %v405
    %v2957 = vpop.f32.mrb[0].mxu0
    %v2958 = vadd.f32 0.0, %v2957
    %v2959 = vpop.f32.mrb[0].mxu0
    %v2960 = vadd.f32 0.0, %v2959
    %v2961 = vpop.f32.mrb[0].mxu0
    %v2962 = vadd.f32 0.0, %v2961
    %v2963 = vpop.f32.mrb[0].mxu0
    %v2964 = vadd.f32 0.0, %v2963
    %2965 = vmatprep.mubr.bf16.mxu0 0
    %2966 = vmatmul.mubr.bf16.gmra.mrb[0].mxu0 %v406
    %v2967 = vpop.f32.mrb[0].mxu0
    %v2968 = vadd.f32 0.0, %v2967
    %v2969 = vpop.f32.mrb[0].mxu0
    %v2970 = vadd.f32 0.0, %v2969
    %v2971 = vpop.f32.mrb[0].mxu0
    %v2972 = vadd.f32 0.0, %v2971
    %v2973 = vpop.f32.mrb[0].mxu0
    %v2974 = vadd.f32 0.0, %v2973
    %2975 = vmatprep.mubr.bf16.mxu0 0
    %2976 = vmatmul.mubr.bf16.gmra.mrb[0].mxu0 %v407
    %v2977 = vpop.f32.mrb[0].mxu0
    %v2978 = vadd.f32 0.0, %v2977
    %v2979 = vpop.f32.mrb[0].mxu0
    %v2980 = vadd.f32 0.0, %v2979
    %v2981 = vpop.f32.mrb[0].mxu0
    %v2982 = vadd.f32 0.0, %v2981
    %v2983 = vpop.f32.mrb[0].mxu0
    %v2984 = vadd.f32 0.0, %v2983
    %2985 = vmatprep.mubr.bf16.mxu0 0
    %2986 = vmatmul.mubr.bf16.gmra.mrb[0].mxu0 %v408
    %v2987 = vpop.f32.mrb[0].mxu0
    %v2988 = vadd.f32 0.0, %v2987
    %v2989 = vpop.f32.mrb[0].mxu0
    %v2990 = vadd.f32 0.0, %v2989
    %v2991 = vpop.f32.mrb[0].mxu0
    %v2992 = vadd.f32 0.0, %v2991
    %v2993 = vpop.f32.mrb[0].mxu0
    %v2994 = vadd.f32 0.0, %v2993
    %2995 = vmatprep.mubr.bf16.mxu0 0
    %2996 = vmatmul.mubr.bf16.gmra.mrb[0].mxu0 %v409
    %v2997 = vpop.f32.mrb[0].mxu0
    %v2998 = vadd.f32 0.0, %v2997
    %v2999 = vpop.f32.mrb[0].mxu0
    %v3000 = vadd.f32 0.0, %v2999
    %v3001 = vpop.f32.mrb[0].mxu0
    %v3002 = vadd.f32 0.0, %v3001
    %v3003 = vpop.f32.mrb[0].mxu0
    %v3004 = vadd.f32 0.0, %v3003
    %3005 = vmatprep.mubr.bf16.mxu0 0
    %3006 = vmatmul.mubr.bf16.gmra.mrb[0].mxu0 %v410
    %v3007 = vpop.f32.mrb[0].mxu0
    %v3008 = vadd.f32 0.0, %v3007
    %v3009 = vpop.f32.mrb[0].mxu0
    %v3010 = vadd.f32 0.0, %v3009
    %v3011 = vpop.f32.mrb[0].mxu0
    %v3012 = vadd.f32 0.0, %v3011
    %v3013 = vpop.f32.mrb[0].mxu0
    %v3014 = vadd.f32 0.0, %v3013
    %3015 = vmatprep.mubr.bf16.mxu0 0
    %3016 = vmatmul.mubr.bf16.gmra.mrb[0].mxu0 %v411
    %v3017 = vpop.f32.mrb[0].mxu0
    %v3018 = vadd.f32 0.0, %v3017
    %v3019 = vpop.f32.mrb[0].mxu0
    %v3020 = vadd.f32 0.0, %v3019
    %v3021 = vpop.f32.mrb[0].mxu0
    %v3022 = vadd.f32 0.0, %v3021
    %v3023 = vpop.f32.mrb[0].mxu0
    %v3024 = vadd.f32 0.0, %v3023
    %3025 = vmatprep.mubr.bf16.mxu0 0
    %3026 = vmatmul.mubr.bf16.gmra.mrb[0].mxu0 %v412
    %v3027 = vpop.f32.mrb[0].mxu0
    %v3028 = vadd.f32 0.0, %v3027
    %v3029 = vpop.f32.mrb[0].mxu0
    %v3030 = vadd.f32 0.0, %v3029
    %v3031 = vpop.f32.mrb[0].mxu0
    %v3032 = vadd.f32 0.0, %v3031
    %v3033 = vpop.f32.mrb[0].mxu0
    %v3034 = vadd.f32 0.0, %v3033
    %3035 = vmatprep.mubr.bf16.mxu0 0
    %3036 = vmatmul.mubr.bf16.gmra.mrb[0].mxu0 %v413
    %v3037 = vpop.f32.mrb[0].mxu0
    %v3038 = vadd.f32 0.0, %v3037
    %v3039 = vpop.f32.mrb[0].mxu0
    %v3040 = vadd.f32 0.0, %v3039
    %v3041 = vpop.f32.mrb[0].mxu0
    %v3042 = vadd.f32 0.0, %v3041
    %v3043 = vpop.f32.mrb[0].mxu0
    %v3044 = vadd.f32 0.0, %v3043
    %3045 = vmatprep.mubr.bf16.mxu0 0
    %3046 = vmatmul.mubr.bf16.gmra.mrb[0].mxu0 %v414
    %v3047 = vpop.f32.mrb[0].mxu0
    %v3048 = vadd.f32 0.0, %v3047
    %v3049 = vpop.f32.mrb[0].mxu0
    %v3050 = vadd.f32 0.0, %v3049
    %v3051 = vpop.f32.mrb[0].mxu0
    %v3052 = vadd.f32 0.0, %v3051
    %v3053 = vpop.f32.mrb[0].mxu0
    %v3054 = vadd.f32 0.0, %v3053
    %3055 = vmatprep.mubr.bf16.mxu0 0
    %3056 = vmatmul.mubr.bf16.gmra.mrb[0].mxu0 %v415
    %v3057 = vpop.f32.mrb[0].mxu0
    %v3058 = vadd.f32 0.0, %v3057
    %v3059 = vpop.f32.mrb[0].mxu0
    %v3060 = vadd.f32 0.0, %v3059
    %v3061 = vpop.f32.mrb[0].mxu0
    %v3062 = vadd.f32 0.0, %v3061
    %v3063 = vpop.f32.mrb[0].mxu0
    %v3064 = vadd.f32 0.0, %v3063
    %3065 = vmatprep.mubr.bf16.mxu0 0
    %3066 = vmatmul.mubr.bf16.gmra.mrb[0].mxu0 %v416
    %v3067 = vpop.f32.mrb[0].mxu0
    %v3068 = vadd.f32 0.0, %v3067
    %v3069 = vpop.f32.mrb[0].mxu0
    %v3070 = vadd.f32 0.0, %v3069
    %v3071 = vpop.f32.mrb[0].mxu0
    %v3072 = vadd.f32 0.0, %v3071
    %v3073 = vpop.f32.mrb[0].mxu0
    %v3074 = vadd.f32 0.0, %v3073
    %3075 = vmatprep.mubr.bf16.mxu0 0
    %3076 = vmatmul.mubr.bf16.gmra.mrb[0].mxu0 %v417
    %v3077 = vpop.f32.mrb[0].mxu0
    %v3078 = vadd.f32 0.0, %v3077
    %v3079 = vpop.f32.mrb[0].mxu0
    %v3080 = vadd.f32 0.0, %v3079
    %v3081 = vpop.f32.mrb[0].mxu0
    %v3082 = vadd.f32 0.0, %v3081
    %v3083 = vpop.f32.mrb[0].mxu0
    %v3084 = vadd.f32 0.0, %v3083
    %3085 = vmatprep.mubr.bf16.mxu0 0
    %3086 = vmatmul.mubr.bf16.gmra.mrb[0].mxu0 %v418
    %v3087 = vpop.f32.mrb[0].mxu0
    %v3088 = vadd.f32 0.0, %v3087
    %v3089 = vpop.f32.mrb[0].mxu0
    %v3090 = vadd.f32 0.0, %v3089
    %v3091 = vpop.f32.mrb[0].mxu0
    %v3092 = vadd.f32 0.0, %v3091
    %v3093 = vpop.f32.mrb[0].mxu0
    %v3094 = vadd.f32 0.0, %v3093
    %3095 = vmatprep.mubr.bf16.mxu0 0
    %3096 = vmatmul.mubr.bf16.gmra.mrb[0].mxu0 %v419
    %v3097 = vpop.f32.mrb[0].mxu0
    %v3098 = vadd.f32 0.0, %v3097
    %v3099 = vpop.f32.mrb[0].mxu0
    %v3100 = vadd.f32 0.0, %v3099
    %v3101 = vpop.f32.mrb[0].mxu0
    %v3102 = vadd.f32 0.0, %v3101
    %v3103 = vpop.f32.mrb[0].mxu0
    %v3104 = vadd.f32 0.0, %v3103
    %3105 = vmatprep.mubr.bf16.mxu0 0
    %3106 = vmatmul.mubr.bf16.gmra.mrb[0].mxu0 %v420
    %v3107 = vpop.f32.mrb[0].mxu0
    %v3108 = vadd.f32 0.0, %v3107
    %v3109 = vpop.f32.mrb[0].mxu0
    %v3110 = vadd.f32 0.0, %v3109
    %v3111 = vpop.f32.mrb[0].mxu0
    %v3112 = vadd.f32 0.0, %v3111
    %v3113 = vpop.f32.mrb[0].mxu0
    %v3114 = vadd.f32 0.0, %v3113
    %3115 = vmatprep.mubr.bf16.mxu0 0
    %3116 = vmatmul.mubr.bf16.gmra.mrb[0].mxu0 %v421
    %v3117 = vpop.f32.mrb[0].mxu0
    %v3118 = vadd.f32 0.0, %v3117
    %v3119 = vpop.f32.mrb[0].mxu0
    %v3120 = vadd.f32 0.0, %v3119
    %v3121 = vpop.f32.mrb[0].mxu0
    %v3122 = vadd.f32 0.0, %v3121
    %v3123 = vpop.f32.mrb[0].mxu0
    %v3124 = vadd.f32 0.0, %v3123
    %3125 = vmatprep.mubr.bf16.mxu0 0
    %3126 = vmatmul.mubr.bf16.gmra.mrb[0].mxu0 %v422
    %v3127 = vpop.f32.mrb[0].mxu0
    %v3128 = vadd.f32 0.0, %v3127
    %v3129 = vpop.f32.mrb[0].mxu0
    %v3130 = vadd.f32 0.0, %v3129
    %v3131 = vpop.f32.mrb[0].mxu0
    %v3132 = vadd.f32 0.0, %v3131
    %v3133 = vpop.f32.mrb[0].mxu0
    %v3134 = vadd.f32 0.0, %v3133
    %3135 = vmatprep.mubr.bf16.mxu0 0
    %3136 = vmatmul.mubr.bf16.gmra.mrb[0].mxu0 %v423
    %v3137 = vpop.f32.mrb[0].mxu0
    %v3138 = vadd.f32 0.0, %v3137
    %v3139 = vpop.f32.mrb[0].mxu0
    %v3140 = vadd.f32 0.0, %v3139
    %v3141 = vpop.f32.mrb[0].mxu0
    %v3142 = vadd.f32 0.0, %v3141
    %v3143 = vpop.f32.mrb[0].mxu0
    %v3144 = vadd.f32 0.0, %v3143
    %3145 = vmatprep.mubr.bf16.mxu0 0
    %3146 = vmatmul.mubr.bf16.gmra.mrb[0].mxu0 %v424
    %v3147 = vpop.f32.mrb[0].mxu0
    %v3148 = vadd.f32 0.0, %v3147
    %v3149 = vpop.f32.mrb[0].mxu0
    %v3150 = vadd.f32 0.0, %v3149
    %v3151 = vpop.f32.mrb[0].mxu0
    %v3152 = vadd.f32 0.0, %v3151
    %v3153 = vpop.f32.mrb[0].mxu0
    %v3154 = vadd.f32 0.0, %v3153
    %3155 = vmatprep.mubr.bf16.mxu0 0
    %3156 = vmatmul.mubr.bf16.gmra.mrb[0].mxu0 %v425
    %v3157 = vpop.f32.mrb[0].mxu0
    %v3158 = vadd.f32 0.0, %v3157
    %v3159 = vpop.f32.mrb[0].mxu0
    %v3160 = vadd.f32 0.0, %v3159
    %v3161 = vpop.f32.mrb[0].mxu0
    %v3162 = vadd.f32 0.0, %v3161
    %v3163 = vpop.f32.mrb[0].mxu0
    %v3164 = vadd.f32 0.0, %v3163
    %3165 = vmatprep.mubr.bf16.mxu0 0
    %3166 = vmatmul.mubr.bf16.gmra.mrb[0].mxu0 %v426
    %v3167 = vpop.f32.mrb[0].mxu0
    %v3168 = vadd.f32 0.0, %v3167
    %v3169 = vpop.f32.mrb[0].mxu0
    %v3170 = vadd.f32 0.0, %v3169
    %v3171 = vpop.f32.mrb[0].mxu0
    %v3172 = vadd.f32 0.0, %v3171
    %v3173 = vpop.f32.mrb[0].mxu0
    %v3174 = vadd.f32 0.0, %v3173
    %3175 = vmatprep.mubr.bf16.mxu0 0
    %3176 = vmatmul.mubr.bf16.gmra.mrb[0].mxu0 %v427
    %v3177 = vpop.f32.mrb[0].mxu0
    %v3178 = vadd.f32 0.0, %v3177
    %v3179 = vpop.f32.mrb[0].mxu0
    %v3180 = vadd.f32 0.0, %v3179
    %v3181 = vpop.f32.mrb[0].mxu0
    %v3182 = vadd.f32 0.0, %v3181
    %v3183 = vpop.f32.mrb[0].mxu0
    %v3184 = vadd.f32 0.0, %v3183
    %3185 = vdwg.mxu0
    %3186 = vmatprep.subr.bf16.mxu0 0
    %3187 = vmatpush1.bf16.msra.mxu0 %v2787
    %3188 = vmatprep.subr.bf16.mxu0 0
    %3189 = vmatpush1.bf16.msra.mxu0 %v2790
    %3190 = vmatprep.subr.bf16.mxu0 0
    %3191 = vmatpush1.bf16.msra.mxu0 %v2793
    %3192 = vmatprep.subr.bf16.mxu0 0
    %3193 = vmatpush1.bf16.msra.mxu0 %v2796
    %3194 = vmatprep.subr.bf16.mxu0 0
    %3195 = vmatpush1.bf16.msra.mxu0 %v2799
    %3196 = vmatprep.subr.bf16.mxu0 0
    %3197 = vmatpush1.bf16.msra.mxu0 %v2802
    %3198 = vmatprep.subr.bf16.mxu0 0
    %3199 = vmatpush1.bf16.msra.mxu0 %v2805
    %3200 = vmatprep.subr.bf16.mxu0 0
    %3201 = vmatpush1.bf16.msra.mxu0 %v2808
    %3202 = vmatprep.subr.bf16.mxu0 0
    %3203 = vmatpush1.bf16.msra.mxu0 0
    %3204 = vmatprep.subr.bf16.mxu0 0
    %3205 = vmatpush1.bf16.msra.mxu0 0
    %3206 = vmatprep.subr.bf16.mxu0 0
    %3207 = vmatpush1.bf16.msra.mxu0 0
    %3208 = vmatprep.subr.bf16.mxu0 0
    %3209 = vmatpush1.bf16.msra.mxu0 0
    %3210 = vmatprep.subr.bf16.mxu0 0
    %3211 = vmatpush1.bf16.msra.mxu0 0
    %3212 = vmatprep.subr.bf16.mxu0 0
    %3213 = vmatpush1.bf16.msra.mxu0 0
    %3214 = vmatprep.subr.bf16.mxu0 0
    %3215 = vmatpush1.bf16.msra.mxu0 0
    %3216 = vmatprep.subr.bf16.mxu0 0
    %3217 = vmatpush1.bf16.msra.mxu0 0
    %3218 = vmatprep.mubr.bf16.mxu0 0
    %3219 = vmatmul.mubr.bf16.gmra.mrb[0].mxu0 %v396
    %v3220 = vpop.f32.mrb[0].mxu0
    %v3221 = vadd.f32 0.0, %v3220
    %v3222 = vpop.f32.mrb[0].mxu0
    %v3223 = vpop.f32.mrb[0].mxu0
    %v3224 = vadd.f32 0.0, %v3223
    %v3225 = vpop.f32.mrb[0].mxu0
    %3226 = vmatprep.mubr.bf16.mxu0 0
    %3227 = vmatmul.mubr.bf16.gmra.mrb[0].mxu0 %v397
    %v3228 = vpop.f32.mrb[0].mxu0
    %v3229 = vadd.f32 0.0, %v3228
    %v3230 = vpop.f32.mrb[0].mxu0
    %v3231 = vpop.f32.mrb[0].mxu0
    %v3232 = vadd.f32 0.0, %v3231
    %v3233 = vpop.f32.mrb[0].mxu0
    %3234 = vmatprep.mubr.bf16.mxu0 0
    %3235 = vmatmul.mubr.bf16.gmra.mrb[0].mxu0 %v398
    %v3236 = vpop.f32.mrb[0].mxu0
    %v3237 = vadd.f32 0.0, %v3236
    %v3238 = vpop.f32.mrb[0].mxu0
    %v3239 = vpop.f32.mrb[0].mxu0
    %v3240 = vadd.f32 0.0, %v3239
    %v3241 = vpop.f32.mrb[0].mxu0
    %3242 = vmatprep.mubr.bf16.mxu0 0
    %3243 = vmatmul.mubr.bf16.gmra.mrb[0].mxu0 %v399
    %v3244 = vpop.f32.mrb[0].mxu0
    %v3245 = vadd.f32 0.0, %v3244
    %v3246 = vpop.f32.mrb[0].mxu0
    %v3247 = vpop.f32.mrb[0].mxu0
    %v3248 = vadd.f32 0.0, %v3247
    %v3249 = vpop.f32.mrb[0].mxu0
    %3250 = vmatprep.mubr.bf16.mxu0 0
    %3251 = vmatmul.mubr.bf16.gmra.mrb[0].mxu0 %v400
    %v3252 = vpop.f32.mrb[0].mxu0
    %v3253 = vadd.f32 0.0, %v3252
    %v3254 = vpop.f32.mrb[0].mxu0
    %v3255 = vpop.f32.mrb[0].mxu0
    %v3256 = vadd.f32 0.0, %v3255
    %v3257 = vpop.f32.mrb[0].mxu0
    %3258 = vmatprep.mubr.bf16.mxu0 0
    %3259 = vmatmul.mubr.bf16.gmra.mrb[0].mxu0 %v401
    %v3260 = vpop.f32.mrb[0].mxu0
    %v3261 = vadd.f32 0.0, %v3260
    %v3262 = vpop.f32.mrb[0].mxu0
    %v3263 = vpop.f32.mrb[0].mxu0
    %v3264 = vadd.f32 0.0, %v3263
    %v3265 = vpop.f32.mrb[0].mxu0
    %3266 = vmatprep.mubr.bf16.mxu0 0
    %3267 = vmatmul.mubr.bf16.gmra.mrb[0].mxu0 %v402
    %v3268 = vpop.f32.mrb[0].mxu0
    %v3269 = vadd.f32 0.0, %v3268
    %v3270 = vpop.f32.mrb[0].mxu0
    %v3271 = vpop.f32.mrb[0].mxu0
    %v3272 = vadd.f32 0.0, %v3271
    %v3273 = vpop.f32.mrb[0].mxu0
    %3274 = vmatprep.mubr.bf16.mxu0 0
    %3275 = vmatmul.mubr.bf16.gmra.mrb[0].mxu0 %v403
    %v3276 = vpop.f32.mrb[0].mxu0
    %v3277 = vadd.f32 0.0, %v3276
    %v3278 = vpop.f32.mrb[0].mxu0
    %v3279 = vpop.f32.mrb[0].mxu0
    %v3280 = vadd.f32 0.0, %v3279
    %v3281 = vpop.f32.mrb[0].mxu0
    %3282 = vmatprep.mubr.bf16.mxu0 0
    %3283 = vmatmul.mubr.bf16.gmra.mrb[0].mxu0 %v404
    %v3284 = vpop.f32.mrb[0].mxu0
    %v3285 = vadd.f32 0.0, %v3284
    %v3286 = vpop.f32.mrb[0].mxu0
    %v3287 = vpop.f32.mrb[0].mxu0
    %v3288 = vadd.f32 0.0, %v3287
    %v3289 = vpop.f32.mrb[0].mxu0
    %3290 = vmatprep.mubr.bf16.mxu0 0
    %3291 = vmatmul.mubr.bf16.gmra.mrb[0].mxu0 %v405
    %v3292 = vpop.f32.mrb[0].mxu0
    %v3293 = vadd.f32 0.0, %v3292
    %v3294 = vpop.f32.mrb[0].mxu0
    %v3295 = vpop.f32.mrb[0].mxu0
    %v3296 = vadd.f32 0.0, %v3295
    %v3297 = vpop.f32.mrb[0].mxu0
    %3298 = vmatprep.mubr.bf16.mxu0 0
    %3299 = vmatmul.mubr.bf16.gmra.mrb[0].mxu0 %v406
    %v3300 = vpop.f32.mrb[0].mxu0
    %v3301 = vadd.f32 0.0, %v3300
    %v3302 = vpop.f32.mrb[0].mxu0
    %v3303 = vpop.f32.mrb[0].mxu0
    %v3304 = vadd.f32 0.0, %v3303
    %v3305 = vpop.f32.mrb[0].mxu0
    %3306 = vmatprep.mubr.bf16.mxu0 0
    %3307 = vmatmul.mubr.bf16.gmra.mrb[0].mxu0 %v407
    %v3308 = vpop.f32.mrb[0].mxu0
    %v3309 = vadd.f32 0.0, %v3308
    %v3310 = vpop.f32.mrb[0].mxu0
    %v3311 = vpop.f32.mrb[0].mxu0
    %v3312 = vadd.f32 0.0, %v3311
    %v3313 = vpop.f32.mrb[0].mxu0
    %3314 = vmatprep.mubr.bf16.mxu0 0
    %3315 = vmatmul.mubr.bf16.gmra.mrb[0].mxu0 %v408
    %v3316 = vpop.f32.mrb[0].mxu0
    %v3317 = vadd.f32 0.0, %v3316
    %v3318 = vpop.f32.mrb[0].mxu0
    %v3319 = vpop.f32.mrb[0].mxu0
    %v3320 = vadd.f32 0.0, %v3319
    %v3321 = vpop.f32.mrb[0].mxu0
    %3322 = vmatprep.mubr.bf16.mxu0 0
    %3323 = vmatmul.mubr.bf16.gmra.mrb[0].mxu0 %v409
    %v3324 = vpop.f32.mrb[0].mxu0
    %v3325 = vadd.f32 0.0, %v3324
    %v3326 = vpop.f32.mrb[0].mxu0
    %v3327 = vpop.f32.mrb[0].mxu0
    %v3328 = vadd.f32 0.0, %v3327
    %v3329 = vpop.f32.mrb[0].mxu0
    %3330 = vmatprep.mubr.bf16.mxu0 0
    %3331 = vmatmul.mubr.bf16.gmra.mrb[0].mxu0 %v410
    %v3332 = vpop.f32.mrb[0].mxu0
    %v3333 = vadd.f32 0.0, %v3332
    %v3334 = vpop.f32.mrb[0].mxu0
    %v3335 = vpop.f32.mrb[0].mxu0
    %v3336 = vadd.f32 0.0, %v3335
    %v3337 = vpop.f32.mrb[0].mxu0
    %3338 = vmatprep.mubr.bf16.mxu0 0
    %3339 = vmatmul.mubr.bf16.gmra.mrb[0].mxu0 %v411
    %v3340 = vpop.f32.mrb[0].mxu0
    %v3341 = vadd.f32 0.0, %v3340
    %v3342 = vpop.f32.mrb[0].mxu0
    %v3343 = vpop.f32.mrb[0].mxu0
    %v3344 = vadd.f32 0.0, %v3343
    %v3345 = vpop.f32.mrb[0].mxu0
    %3346 = vmatprep.mubr.bf16.mxu0 0
    %3347 = vmatmul.mubr.bf16.gmra.mrb[0].mxu0 %v412
    %v3348 = vpop.f32.mrb[0].mxu0
    %v3349 = vadd.f32 0.0, %v3348
    %v3350 = vpop.f32.mrb[0].mxu0
    %v3351 = vpop.f32.mrb[0].mxu0
    %v3352 = vadd.f32 0.0, %v3351
    %v3353 = vpop.f32.mrb[0].mxu0
    %3354 = vmatprep.mubr.bf16.mxu0 0
    %3355 = vmatmul.mubr.bf16.gmra.mrb[0].mxu0 %v413
    %v3356 = vpop.f32.mrb[0].mxu0
    %v3357 = vadd.f32 0.0, %v3356
    %v3358 = vpop.f32.mrb[0].mxu0
    %v3359 = vpop.f32.mrb[0].mxu0
    %v3360 = vadd.f32 0.0, %v3359
    %v3361 = vpop.f32.mrb[0].mxu0
    %3362 = vmatprep.mubr.bf16.mxu0 0
    %3363 = vmatmul.mubr.bf16.gmra.mrb[0].mxu0 %v414
    %v3364 = vpop.f32.mrb[0].mxu0
    %v3365 = vadd.f32 0.0, %v3364
    %v3366 = vpop.f32.mrb[0].mxu0
    %v3367 = vpop.f32.mrb[0].mxu0
    %v3368 = vadd.f32 0.0, %v3367
    %v3369 = vpop.f32.mrb[0].mxu0
    %3370 = vmatprep.mubr.bf16.mxu0 0
    %3371 = vmatmul.mubr.bf16.gmra.mrb[0].mxu0 %v415
    %v3372 = vpop.f32.mrb[0].mxu0
    %v3373 = vadd.f32 0.0, %v3372
    %v3374 = vpop.f32.mrb[0].mxu0
    %v3375 = vpop.f32.mrb[0].mxu0
    %v3376 = vadd.f32 0.0, %v3375
    %v3377 = vpop.f32.mrb[0].mxu0
    %3378 = vmatprep.mubr.bf16.mxu0 0
    %3379 = vmatmul.mubr.bf16.gmra.mrb[0].mxu0 %v416
    %v3380 = vpop.f32.mrb[0].mxu0
    %v3381 = vadd.f32 0.0, %v3380
    %v3382 = vpop.f32.mrb[0].mxu0
    %v3383 = vpop.f32.mrb[0].mxu0
    %v3384 = vadd.f32 0.0, %v3383
    %v3385 = vpop.f32.mrb[0].mxu0
    %3386 = vmatprep.mubr.bf16.mxu0 0
    %3387 = vmatmul.mubr.bf16.gmra.mrb[0].mxu0 %v417
    %v3388 = vpop.f32.mrb[0].mxu0
    %v3389 = vadd.f32 0.0, %v3388
    %v3390 = vpop.f32.mrb[0].mxu0
    %v3391 = vpop.f32.mrb[0].mxu0
    %v3392 = vadd.f32 0.0, %v3391
    %v3393 = vpop.f32.mrb[0].mxu0
    %3394 = vmatprep.mubr.bf16.mxu0 0
    %3395 = vmatmul.mubr.bf16.gmra.mrb[0].mxu0 %v418
    %v3396 = vpop.f32.mrb[0].mxu0
    %v3397 = vadd.f32 0.0, %v3396
    %v3398 = vpop.f32.mrb[0].mxu0
    %v3399 = vpop.f32.mrb[0].mxu0
    %v3400 = vadd.f32 0.0, %v3399
    %v3401 = vpop.f32.mrb[0].mxu0
    %3402 = vmatprep.mubr.bf16.mxu0 0
    %3403 = vmatmul.mubr.bf16.gmra.mrb[0].mxu0 %v419
    %v3404 = vpop.f32.mrb[0].mxu0
    %v3405 = vadd.f32 0.0, %v3404
    %v3406 = vpop.f32.mrb[0].mxu0
    %v3407 = vpop.f32.mrb[0].mxu0
    %v3408 = vadd.f32 0.0, %v3407
    %v3409 = vpop.f32.mrb[0].mxu0
    %3410 = vmatprep.mubr.bf16.mxu0 0
    %3411 = vmatmul.mubr.bf16.gmra.mrb[0].mxu0 %v420
    %v3412 = vpop.f32.mrb[0].mxu0
    %v3413 = vadd.f32 0.0, %v3412
    %v3414 = vpop.f32.mrb[0].mxu0
    %v3415 = vpop.f32.mrb[0].mxu0
    %v3416 = vadd.f32 0.0, %v3415
    %v3417 = vpop.f32.mrb[0].mxu0
    %3418 = vmatprep.mubr.bf16.mxu0 0
    %3419 = vmatmul.mubr.bf16.gmra.mrb[0].mxu0 %v421
    %v3420 = vpop.f32.mrb[0].mxu0
    %v3421 = vadd.f32 0.0, %v3420
    %v3422 = vpop.f32.mrb[0].mxu0
    %v3423 = vpop.f32.mrb[0].mxu0
    %v3424 = vadd.f32 0.0, %v3423
    %v3425 = vpop.f32.mrb[0].mxu0
    %3426 = vmatprep.mubr.bf16.mxu0 0
    %3427 = vmatmul.mubr.bf16.gmra.mrb[0].mxu0 %v422
    %v3428 = vpop.f32.mrb[0].mxu0
    %v3429 = vadd.f32 0.0, %v3428
    %v3430 = vpop.f32.mrb[0].mxu0
    %v3431 = vpop.f32.mrb[0].mxu0
    %v3432 = vadd.f32 0.0, %v3431
    %v3433 = vpop.f32.mrb[0].mxu0
    %3434 = vmatprep.mubr.bf16.mxu0 0
    %3435 = vmatmul.mubr.bf16.gmra.mrb[0].mxu0 %v423
    %v3436 = vpop.f32.mrb[0].mxu0
    %v3437 = vadd.f32 0.0, %v3436
    %v3438 = vpop.f32.mrb[0].mxu0
    %v3439 = vpop.f32.mrb[0].mxu0
    %v3440 = vadd.f32 0.0, %v3439
    %v3441 = vpop.f32.mrb[0].mxu0
    %3442 = vmatprep.mubr.bf16.mxu0 0
    %3443 = vmatmul.mubr.bf16.gmra.mrb[0].mxu0 %v424
    %v3444 = vpop.f32.mrb[0].mxu0
    %v3445 = vadd.f32 0.0, %v3444
    %v3446 = vpop.f32.mrb[0].mxu0
    %v3447 = vpop.f32.mrb[0].mxu0
    %v3448 = vadd.f32 0.0, %v3447
    %v3449 = vpop.f32.mrb[0].mxu0
    %3450 = vmatprep.mubr.bf16.mxu0 0
    %3451 = vmatmul.mubr.bf16.gmra.mrb[0].mxu0 %v425
    %v3452 = vpop.f32.mrb[0].mxu0
    %v3453 = vadd.f32 0.0, %v3452
    %v3454 = vpop.f32.mrb[0].mxu0
    %v3455 = vpop.f32.mrb[0].mxu0
    %v3456 = vadd.f32 0.0, %v3455
    %v3457 = vpop.f32.mrb[0].mxu0
    %3458 = vmatprep.mubr.bf16.mxu0 0
    %3459 = vmatmul.mubr.bf16.gmra.mrb[0].mxu0 %v426
    %v3460 = vpop.f32.mrb[0].mxu0
    %v3461 = vadd.f32 0.0, %v3460
    %v3462 = vpop.f32.mrb[0].mxu0
    %v3463 = vpop.f32.mrb[0].mxu0
    %v3464 = vadd.f32 0.0, %v3463
    %v3465 = vpop.f32.mrb[0].mxu0
    %3466 = vmatprep.mubr.bf16.mxu0 0
    %3467 = vmatmul.mubr.bf16.gmra.mrb[0].mxu0 %v427
    %v3468 = vpop.f32.mrb[0].mxu0
    %v3469 = vadd.f32 0.0, %v3468
    %v3470 = vpop.f32.mrb[0].mxu0
    %v3471 = vpop.f32.mrb[0].mxu0
    %v3472 = vadd.f32 0.0, %v3471
    %v3473 = vpop.f32.mrb[0].mxu0
    %3474 = vdwg.mxu0
    %v3475 = vld [vmem:[#allocation14] sm:$0xff]
    %v3476 = vld [vmem:[#allocation14 + $0x8] sm:$0xff]
    %v3477 = vld [vmem:[#allocation14 + $0x10] sm:$0xff]
    %v3478 = vld [vmem:[#allocation14 + $0x18] sm:$0xff]
    %v3479 = vld [vmem:[#allocation14 + $0x20] sm:$0xff]
    %v3480 = vld [vmem:[#allocation14 + $0x28] sm:$0xff]
    %v3481 = vld [vmem:[#allocation14 + $0x30] sm:$0xff]
    %v3482 = vld [vmem:[#allocation14 + $0x38] sm:$0xff]
    %v3483 = vld [vmem:[#allocation14 + $0x40] sm:$0xff]
    %v3484 = vld [vmem:[#allocation14 + $0x48] sm:$0xff]
    %v3485 = vld [vmem:[#allocation14 + $0x50] sm:$0xff]
    %v3486 = vld [vmem:[#allocation14 + $0x58] sm:$0xff]
    %v3487 = vld [vmem:[#allocation14 + $0x60] sm:$0xff]
    %v3488 = vld [vmem:[#allocation14 + $0x68] sm:$0xff]
    %v3489 = vld [vmem:[#allocation14 + $0x70] sm:$0xff]
    %v3490 = vld [vmem:[#allocation14 + $0x78] sm:$0xff]
    %v3507 = vunpack.c.l.b16 %v3475
    %v3508 = vunpack.c.h.b16 %v3475
    %v3509 = vunpack.c.l.b16 %v3476
    %v3510 = vunpack.c.h.b16 %v3476
    %v3511 = vunpack.c.l.b16 %v3477
    %v3512 = vunpack.c.h.b16 %v3477
    %v3513 = vunpack.c.l.b16 %v3478
    %v3514 = vunpack.c.h.b16 %v3478
    %v3515 = vunpack.c.l.b16 %v3479
    %v3516 = vunpack.c.h.b16 %v3479
    %v3517 = vunpack.c.l.b16 %v3480
    %v3518 = vunpack.c.h.b16 %v3480
    %v3519 = vunpack.c.l.b16 %v3481
    %v3520 = vunpack.c.h.b16 %v3481
    %v3521 = vunpack.c.l.b16 %v3482
    %v3522 = vunpack.c.h.b16 %v3482
    %v3523 = vunpack.c.l.b16 %v3483
    %v3524 = vunpack.c.h.b16 %v3483
    %v3525 = vunpack.c.l.b16 %v3484
    %v3526 = vunpack.c.h.b16 %v3484
    %v3527 = vunpack.c.l.b16 %v3485
    %v3528 = vunpack.c.h.b16 %v3485
    %v3529 = vunpack.c.l.b16 %v3486
    %v3530 = vunpack.c.h.b16 %v3486
    %v3531 = vunpack.c.l.b16 %v3487
    %v3532 = vunpack.c.h.b16 %v3487
    %v3533 = vunpack.c.l.b16 %v3488
    %v3534 = vunpack.c.h.b16 %v3488
    %v3535 = vunpack.c.l.b16 %v3489
    %v3536 = vunpack.c.h.b16 %v3489
    %v3537 = vunpack.c.l.b16 %v3490
    %v3538 = vunpack.c.h.b16 %v3490
    %v3539 = vpack.c.b16 %v3509, %v3507
    %v3540 = vpack.c.b16 %v3510, %v3508
    %v3541 = vpack.c.b16 %v3513, %v3511
    %v3542 = vpack.c.b16 %v3514, %v3512
    %v3543 = vpack.c.b16 %v3517, %v3515
    %v3544 = vpack.c.b16 %v3518, %v3516
    %v3545 = vpack.c.b16 %v3521, %v3519
    %v3546 = vpack.c.b16 %v3522, %v3520
    %v3547 = vpack.c.b16 %v3525, %v3523
    %v3548 = vpack.c.b16 %v3526, %v3524
    %v3549 = vpack.c.b16 %v3529, %v3527
    %v3550 = vpack.c.b16 %v3530, %v3528
    %v3551 = vpack.c.b16 %v3533, %v3531
    %v3552 = vpack.c.b16 %v3534, %v3532
    %v3553 = vpack.c.b16 %v3537, %v3535
    %v3554 = vpack.c.b16 %v3538, %v3536
    %3571 = vmatprep.subr.bf16.mxu0 %v3540
    %3572 = vmatpush1.bf16.msra.mxu0 %v3539
    %3573 = vmatprep.subr.bf16.mxu0 %v3542
    %3574 = vmatpush1.bf16.msra.mxu0 %v3541
    %3575 = vmatprep.subr.bf16.mxu0 %v3544
    %3576 = vmatpush1.bf16.msra.mxu0 %v3543
    %3577 = vmatprep.subr.bf16.mxu0 %v3546
    %3578 = vmatpush1.bf16.msra.mxu0 %v3545
    %3579 = vmatprep.subr.bf16.mxu0 %v3548
    %3580 = vmatpush1.bf16.msra.mxu0 %v3547
    %3581 = vmatprep.subr.bf16.mxu0 %v3550
    %3582 = vmatpush1.bf16.msra.mxu0 %v3549
    %3583 = vmatprep.subr.bf16.mxu0 %v3552
    %3584 = vmatpush1.bf16.msra.mxu0 %v3551
    %3585 = vmatprep.subr.bf16.mxu0 %v3554
    %3586 = vmatpush1.bf16.msra.mxu0 %v3553
    %3587 = vmatprep.subr.bf16.mxu0 0
    %3588 = vmatpush1.bf16.msra.mxu0 0
    %3589 = vmatprep.subr.bf16.mxu0 0
    %3590 = vmatpush1.bf16.msra.mxu0 0
    %3591 = vmatprep.subr.bf16.mxu0 0
    %3592 = vmatpush1.bf16.msra.mxu0 0
    %3593 = vmatprep.subr.bf16.mxu0 0
    %3594 = vmatpush1.bf16.msra.mxu0 0
    %3595 = vmatprep.subr.bf16.mxu0 0
    %3596 = vmatpush1.bf16.msra.mxu0 0
    %3597 = vmatprep.subr.bf16.mxu0 0
    %3598 = vmatpush1.bf16.msra.mxu0 0
    %3599 = vmatprep.subr.bf16.mxu0 0
    %3600 = vmatpush1.bf16.msra.mxu0 0
    %3601 = vmatprep.subr.bf16.mxu0 0
    %3602 = vmatpush1.bf16.msra.mxu0 0
    %3603 = vmatprep.mubr.bf16.mxu0 0
    %3604 = vmatmul.mubr.bf16.gmra.mrb[0].mxu0 %v492
    %v3605 = vpop.f32.mrb[0].mxu0
    %v3606 = vadd.f32 0.0, %v3605
    %v3607 = vpop.f32.mrb[0].mxu0
    %v3608 = vadd.f32 0.0, %v3607
    %v3609 = vpop.f32.mrb[0].mxu0
    %v3610 = vadd.f32 0.0, %v3609
    %v3611 = vpop.f32.mrb[0].mxu0
    %v3612 = vadd.f32 0.0, %v3611
    %3613 = vmatprep.mubr.bf16.mxu0 0
    %3614 = vmatmul.mubr.bf16.gmra.mrb[0].mxu0 %v493
    %v3615 = vpop.f32.mrb[0].mxu0
    %v3616 = vadd.f32 0.0, %v3615
    %v3617 = vpop.f32.mrb[0].mxu0
    %v3618 = vadd.f32 0.0, %v3617
    %v3619 = vpop.f32.mrb[0].mxu0
    %v3620 = vadd.f32 0.0, %v3619
    %v3621 = vpop.f32.mrb[0].mxu0
    %v3622 = vadd.f32 0.0, %v3621
    %3623 = vmatprep.mubr.bf16.mxu0 0
    %3624 = vmatmul.mubr.bf16.gmra.mrb[0].mxu0 %v494
    %v3625 = vpop.f32.mrb[0].mxu0
    %v3626 = vadd.f32 0.0, %v3625
    %v3627 = vpop.f32.mrb[0].mxu0
    %v3628 = vadd.f32 0.0, %v3627
    %v3629 = vpop.f32.mrb[0].mxu0
    %v3630 = vadd.f32 0.0, %v3629
    %v3631 = vpop.f32.mrb[0].mxu0
    %v3632 = vadd.f32 0.0, %v3631
    %3633 = vmatprep.mubr.bf16.mxu0 0
    %3634 = vmatmul.mubr.bf16.gmra.mrb[0].mxu0 %v495
    %v3635 = vpop.f32.mrb[0].mxu0
    %v3636 = vadd.f32 0.0, %v3635
    %v3637 = vpop.f32.mrb[0].mxu0
    %v3638 = vadd.f32 0.0, %v3637
    %v3639 = vpop.f32.mrb[0].mxu0
    %v3640 = vadd.f32 0.0, %v3639
    %v3641 = vpop.f32.mrb[0].mxu0
    %v3642 = vadd.f32 0.0, %v3641
    %3643 = vmatprep.mubr.bf16.mxu0 0
    %3644 = vmatmul.mubr.bf16.gmra.mrb[0].mxu0 %v496
    %v3645 = vpop.f32.mrb[0].mxu0
    %v3646 = vadd.f32 0.0, %v3645
    %v3647 = vpop.f32.mrb[0].mxu0
    %v3648 = vadd.f32 0.0, %v3647
    %v3649 = vpop.f32.mrb[0].mxu0
    %v3650 = vadd.f32 0.0, %v3649
    %v3651 = vpop.f32.mrb[0].mxu0
    %v3652 = vadd.f32 0.0, %v3651
    %3653 = vmatprep.mubr.bf16.mxu0 0
    %3654 = vmatmul.mubr.bf16.gmra.mrb[0].mxu0 %v497
    %v3655 = vpop.f32.mrb[0].mxu0
    %v3656 = vadd.f32 0.0, %v3655
    %v3657 = vpop.f32.mrb[0].mxu0
    %v3658 = vadd.f32 0.0, %v3657
    %v3659 = vpop.f32.mrb[0].mxu0
    %v3660 = vadd.f32 0.0, %v3659
    %v3661 = vpop.f32.mrb[0].mxu0
    %v3662 = vadd.f32 0.0, %v3661
    %3663 = vmatprep.mubr.bf16.mxu0 0
    %3664 = vmatmul.mubr.bf16.gmra.mrb[0].mxu0 %v498
    %v3665 = vpop.f32.mrb[0].mxu0
    %v3666 = vadd.f32 0.0, %v3665
    %v3667 = vpop.f32.mrb[0].mxu0
    %v3668 = vadd.f32 0.0, %v3667
    %v3669 = vpop.f32.mrb[0].mxu0
    %v3670 = vadd.f32 0.0, %v3669
    %v3671 = vpop.f32.mrb[0].mxu0
    %v3672 = vadd.f32 0.0, %v3671
    %3673 = vmatprep.mubr.bf16.mxu0 0
    %3674 = vmatmul.mubr.bf16.gmra.mrb[0].mxu0 %v499
    %v3675 = vpop.f32.mrb[0].mxu0
    %v3676 = vadd.f32 0.0, %v3675
    %v3677 = vpop.f32.mrb[0].mxu0
    %v3678 = vadd.f32 0.0, %v3677
    %v3679 = vpop.f32.mrb[0].mxu0
    %v3680 = vadd.f32 0.0, %v3679
    %v3681 = vpop.f32.mrb[0].mxu0
    %v3682 = vadd.f32 0.0, %v3681
    %3683 = vmatprep.mubr.bf16.mxu0 0
    %3684 = vmatmul.mubr.bf16.gmra.mrb[0].mxu0 %v500
    %v3685 = vpop.f32.mrb[0].mxu0
    %v3686 = vadd.f32 0.0, %v3685
    %v3687 = vpop.f32.mrb[0].mxu0
    %v3688 = vadd.f32 0.0, %v3687
    %v3689 = vpop.f32.mrb[0].mxu0
    %v3690 = vadd.f32 0.0, %v3689
    %v3691 = vpop.f32.mrb[0].mxu0
    %v3692 = vadd.f32 0.0, %v3691
    %3693 = vmatprep.mubr.bf16.mxu0 0
    %3694 = vmatmul.mubr.bf16.gmra.mrb[0].mxu0 %v501
    %v3695 = vpop.f32.mrb[0].mxu0
    %v3696 = vadd.f32 0.0, %v3695
    %v3697 = vpop.f32.mrb[0].mxu0
    %v3698 = vadd.f32 0.0, %v3697
    %v3699 = vpop.f32.mrb[0].mxu0
    %v3700 = vadd.f32 0.0, %v3699
    %v3701 = vpop.f32.mrb[0].mxu0
    %v3702 = vadd.f32 0.0, %v3701
    %3703 = vmatprep.mubr.bf16.mxu0 0
    %3704 = vmatmul.mubr.bf16.gmra.mrb[0].mxu0 %v502
    %v3705 = vpop.f32.mrb[0].mxu0
    %v3706 = vadd.f32 0.0, %v3705
    %v3707 = vpop.f32.mrb[0].mxu0
    %v3708 = vadd.f32 0.0, %v3707
    %v3709 = vpop.f32.mrb[0].mxu0
    %v3710 = vadd.f32 0.0, %v3709
    %v3711 = vpop.f32.mrb[0].mxu0
    %v3712 = vadd.f32 0.0, %v3711
    %3713 = vmatprep.mubr.bf16.mxu0 0
    %3714 = vmatmul.mubr.bf16.gmra.mrb[0].mxu0 %v503
    %v3715 = vpop.f32.mrb[0].mxu0
    %v3716 = vadd.f32 0.0, %v3715
    %v3717 = vpop.f32.mrb[0].mxu0
    %v3718 = vadd.f32 0.0, %v3717
    %v3719 = vpop.f32.mrb[0].mxu0
    %v3720 = vadd.f32 0.0, %v3719
    %v3721 = vpop.f32.mrb[0].mxu0
    %v3722 = vadd.f32 0.0, %v3721
    %3723 = vmatprep.mubr.bf16.mxu0 0
    %3724 = vmatmul.mubr.bf16.gmra.mrb[0].mxu0 %v504
    %v3725 = vpop.f32.mrb[0].mxu0
    %v3726 = vadd.f32 0.0, %v3725
    %v3727 = vpop.f32.mrb[0].mxu0
    %v3728 = vadd.f32 0.0, %v3727
    %v3729 = vpop.f32.mrb[0].mxu0
    %v3730 = vadd.f32 0.0, %v3729
    %v3731 = vpop.f32.mrb[0].mxu0
    %v3732 = vadd.f32 0.0, %v3731
    %3733 = vmatprep.mubr.bf16.mxu0 0
    %3734 = vmatmul.mubr.bf16.gmra.mrb[0].mxu0 %v505
    %v3735 = vpop.f32.mrb[0].mxu0
    %v3736 = vadd.f32 0.0, %v3735
    %v3737 = vpop.f32.mrb[0].mxu0
    %v3738 = vadd.f32 0.0, %v3737
    %v3739 = vpop.f32.mrb[0].mxu0
    %v3740 = vadd.f32 0.0, %v3739
    %v3741 = vpop.f32.mrb[0].mxu0
    %v3742 = vadd.f32 0.0, %v3741
    %3743 = vmatprep.mubr.bf16.mxu0 0
    %3744 = vmatmul.mubr.bf16.gmra.mrb[0].mxu0 %v506
    %v3745 = vpop.f32.mrb[0].mxu0
    %v3746 = vadd.f32 0.0, %v3745
    %v3747 = vpop.f32.mrb[0].mxu0
    %v3748 = vadd.f32 0.0, %v3747
    %v3749 = vpop.f32.mrb[0].mxu0
    %v3750 = vadd.f32 0.0, %v3749
    %v3751 = vpop.f32.mrb[0].mxu0
    %v3752 = vadd.f32 0.0, %v3751
    %3753 = vmatprep.mubr.bf16.mxu0 0
    %3754 = vmatmul.mubr.bf16.gmra.mrb[0].mxu0 %v507
    %v3755 = vpop.f32.mrb[0].mxu0
    %v3756 = vadd.f32 0.0, %v3755
    %v3757 = vpop.f32.mrb[0].mxu0
    %v3758 = vadd.f32 0.0, %v3757
    %v3759 = vpop.f32.mrb[0].mxu0
    %v3760 = vadd.f32 0.0, %v3759
    %v3761 = vpop.f32.mrb[0].mxu0
    %v3762 = vadd.f32 0.0, %v3761
    %3763 = vmatprep.mubr.bf16.mxu0 0
    %3764 = vmatmul.mubr.bf16.gmra.mrb[0].mxu0 %v508
    %v3765 = vpop.f32.mrb[0].mxu0
    %v3766 = vadd.f32 0.0, %v3765
    %v3767 = vpop.f32.mrb[0].mxu0
    %v3768 = vadd.f32 0.0, %v3767
    %v3769 = vpop.f32.mrb[0].mxu0
    %v3770 = vadd.f32 0.0, %v3769
    %v3771 = vpop.f32.mrb[0].mxu0
    %v3772 = vadd.f32 0.0, %v3771
    %3773 = vmatprep.mubr.bf16.mxu0 0
    %3774 = vmatmul.mubr.bf16.gmra.mrb[0].mxu0 %v509
    %v3775 = vpop.f32.mrb[0].mxu0
    %v3776 = vadd.f32 0.0, %v3775
    %v3777 = vpop.f32.mrb[0].mxu0
    %v3778 = vadd.f32 0.0, %v3777
    %v3779 = vpop.f32.mrb[0].mxu0
    %v3780 = vadd.f32 0.0, %v3779
    %v3781 = vpop.f32.mrb[0].mxu0
    %v3782 = vadd.f32 0.0, %v3781
    %3783 = vmatprep.mubr.bf16.mxu0 0
    %3784 = vmatmul.mubr.bf16.gmra.mrb[0].mxu0 %v510
    %v3785 = vpop.f32.mrb[0].mxu0
    %v3786 = vadd.f32 0.0, %v3785
    %v3787 = vpop.f32.mrb[0].mxu0
    %v3788 = vadd.f32 0.0, %v3787
    %v3789 = vpop.f32.mrb[0].mxu0
    %v3790 = vadd.f32 0.0, %v3789
    %v3791 = vpop.f32.mrb[0].mxu0
    %v3792 = vadd.f32 0.0, %v3791
    %3793 = vmatprep.mubr.bf16.mxu0 0
    %3794 = vmatmul.mubr.bf16.gmra.mrb[0].mxu0 %v511
    %v3795 = vpop.f32.mrb[0].mxu0
    %v3796 = vadd.f32 0.0, %v3795
    %v3797 = vpop.f32.mrb[0].mxu0
    %v3798 = vadd.f32 0.0, %v3797
    %v3799 = vpop.f32.mrb[0].mxu0
    %v3800 = vadd.f32 0.0, %v3799
    %v3801 = vpop.f32.mrb[0].mxu0
    %v3802 = vadd.f32 0.0, %v3801
    %3803 = vmatprep.mubr.bf16.mxu0 0
    %3804 = vmatmul.mubr.bf16.gmra.mrb[0].mxu0 %v512
    %v3805 = vpop.f32.mrb[0].mxu0
    %v3806 = vadd.f32 0.0, %v3805
    %v3807 = vpop.f32.mrb[0].mxu0
    %v3808 = vadd.f32 0.0, %v3807
    %v3809 = vpop.f32.mrb[0].mxu0
    %v3810 = vadd.f32 0.0, %v3809
    %v3811 = vpop.f32.mrb[0].mxu0
    %v3812 = vadd.f32 0.0, %v3811
    %3813 = vmatprep.mubr.bf16.mxu0 0
    %3814 = vmatmul.mubr.bf16.gmra.mrb[0].mxu0 %v513
    %v3815 = vpop.f32.mrb[0].mxu0
    %v3816 = vadd.f32 0.0, %v3815
    %v3817 = vpop.f32.mrb[0].mxu0
    %v3818 = vadd.f32 0.0, %v3817
    %v3819 = vpop.f32.mrb[0].mxu0
    %v3820 = vadd.f32 0.0, %v3819
    %v3821 = vpop.f32.mrb[0].mxu0
    %v3822 = vadd.f32 0.0, %v3821
    %3823 = vmatprep.mubr.bf16.mxu0 0
    %3824 = vmatmul.mubr.bf16.gmra.mrb[0].mxu0 %v514
    %v3825 = vpop.f32.mrb[0].mxu0
    %v3826 = vadd.f32 0.0, %v3825
    %v3827 = vpop.f32.mrb[0].mxu0
    %v3828 = vadd.f32 0.0, %v3827
    %v3829 = vpop.f32.mrb[0].mxu0
    %v3830 = vadd.f32 0.0, %v3829
    %v3831 = vpop.f32.mrb[0].mxu0
    %v3832 = vadd.f32 0.0, %v3831
    %3833 = vmatprep.mubr.bf16.mxu0 0
    %3834 = vmatmul.mubr.bf16.gmra.mrb[0].mxu0 %v515
    %v3835 = vpop.f32.mrb[0].mxu0
    %v3836 = vadd.f32 0.0, %v3835
    %v3837 = vpop.f32.mrb[0].mxu0
    %v3838 = vadd.f32 0.0, %v3837
    %v3839 = vpop.f32.mrb[0].mxu0
    %v3840 = vadd.f32 0.0, %v3839
    %v3841 = vpop.f32.mrb[0].mxu0
    %v3842 = vadd.f32 0.0, %v3841
    %3843 = vmatprep.mubr.bf16.mxu0 0
    %3844 = vmatmul.mubr.bf16.gmra.mrb[0].mxu0 %v516
    %v3845 = vpop.f32.mrb[0].mxu0
    %v3846 = vadd.f32 0.0, %v3845
    %v3847 = vpop.f32.mrb[0].mxu0
    %v3848 = vadd.f32 0.0, %v3847
    %v3849 = vpop.f32.mrb[0].mxu0
    %v3850 = vadd.f32 0.0, %v3849
    %v3851 = vpop.f32.mrb[0].mxu0
    %v3852 = vadd.f32 0.0, %v3851
    %3853 = vmatprep.mubr.bf16.mxu0 0
    %3854 = vmatmul.mubr.bf16.gmra.mrb[0].mxu0 %v517
    %v3855 = vpop.f32.mrb[0].mxu0
    %v3856 = vadd.f32 0.0, %v3855
    %v3857 = vpop.f32.mrb[0].mxu0
    %v3858 = vadd.f32 0.0, %v3857
    %v3859 = vpop.f32.mrb[0].mxu0
    %v3860 = vadd.f32 0.0, %v3859
    %v3861 = vpop.f32.mrb[0].mxu0
    %v3862 = vadd.f32 0.0, %v3861
    %3863 = vmatprep.mubr.bf16.mxu0 0
    %3864 = vmatmul.mubr.bf16.gmra.mrb[0].mxu0 %v518
    %v3865 = vpop.f32.mrb[0].mxu0
    %v3866 = vadd.f32 0.0, %v3865
    %v3867 = vpop.f32.mrb[0].mxu0
    %v3868 = vadd.f32 0.0, %v3867
    %v3869 = vpop.f32.mrb[0].mxu0
    %v3870 = vadd.f32 0.0, %v3869
    %v3871 = vpop.f32.mrb[0].mxu0
    %v3872 = vadd.f32 0.0, %v3871
    %3873 = vmatprep.mubr.bf16.mxu0 0
    %3874 = vmatmul.mubr.bf16.gmra.mrb[0].mxu0 %v519
    %v3875 = vpop.f32.mrb[0].mxu0
    %v3876 = vadd.f32 0.0, %v3875
    %v3877 = vpop.f32.mrb[0].mxu0
    %v3878 = vadd.f32 0.0, %v3877
    %v3879 = vpop.f32.mrb[0].mxu0
    %v3880 = vadd.f32 0.0, %v3879
    %v3881 = vpop.f32.mrb[0].mxu0
    %v3882 = vadd.f32 0.0, %v3881
    %3883 = vmatprep.mubr.bf16.mxu0 0
    %3884 = vmatmul.mubr.bf16.gmra.mrb[0].mxu0 %v520
    %v3885 = vpop.f32.mrb[0].mxu0
    %v3886 = vadd.f32 0.0, %v3885
    %v3887 = vpop.f32.mrb[0].mxu0
    %v3888 = vadd.f32 0.0, %v3887
    %v3889 = vpop.f32.mrb[0].mxu0
    %v3890 = vadd.f32 0.0, %v3889
    %v3891 = vpop.f32.mrb[0].mxu0
    %v3892 = vadd.f32 0.0, %v3891
    %3893 = vmatprep.mubr.bf16.mxu0 0
    %3894 = vmatmul.mubr.bf16.gmra.mrb[0].mxu0 %v521
    %v3895 = vpop.f32.mrb[0].mxu0
    %v3896 = vadd.f32 0.0, %v3895
    %v3897 = vpop.f32.mrb[0].mxu0
    %v3898 = vadd.f32 0.0, %v3897
    %v3899 = vpop.f32.mrb[0].mxu0
    %v3900 = vadd.f32 0.0, %v3899
    %v3901 = vpop.f32.mrb[0].mxu0
    %v3902 = vadd.f32 0.0, %v3901
    %3903 = vmatprep.mubr.bf16.mxu0 0
    %3904 = vmatmul.mubr.bf16.gmra.mrb[0].mxu0 %v522
    %v3905 = vpop.f32.mrb[0].mxu0
    %v3906 = vadd.f32 0.0, %v3905
    %v3907 = vpop.f32.mrb[0].mxu0
    %v3908 = vadd.f32 0.0, %v3907
    %v3909 = vpop.f32.mrb[0].mxu0
    %v3910 = vadd.f32 0.0, %v3909
    %v3911 = vpop.f32.mrb[0].mxu0
    %v3912 = vadd.f32 0.0, %v3911
    %3913 = vmatprep.mubr.bf16.mxu0 0
    %3914 = vmatmul.mubr.bf16.gmra.mrb[0].mxu0 %v523
    %v3915 = vpop.f32.mrb[0].mxu0
    %v3916 = vadd.f32 0.0, %v3915
    %v3917 = vpop.f32.mrb[0].mxu0
    %v3918 = vadd.f32 0.0, %v3917
    %v3919 = vpop.f32.mrb[0].mxu0
    %v3920 = vadd.f32 0.0, %v3919
    %v3921 = vpop.f32.mrb[0].mxu0
    %v3922 = vadd.f32 0.0, %v3921
    %3923 = vdwg.mxu0
    %v3924 = vmul.f32 %v815, 0.5
    %v3925 = vmul.f32 %v819, 0.5
    %v3926 = vmul.f32 %v825, 0.5
    %v3927 = vmul.f32 %v829, 0.5
    %v3928 = vmul.f32 %v835, 0.5
    %v3929 = vmul.f32 %v839, 0.5
    %v3930 = vmul.f32 %v845, 0.5
    %v3931 = vmul.f32 %v849, 0.5
    %v3932 = vmul.f32 %v855, 0.5
    %v3933 = vmul.f32 %v859, 0.5
    %v3934 = vmul.f32 %v865, 0.5
    %v3935 = vmul.f32 %v869, 0.5
    %v3936 = vmul.f32 %v875, 0.5
    %v3937 = vmul.f32 %v879, 0.5
    %v3938 = vmul.f32 %v885, 0.5
    %v3939 = vmul.f32 %v889, 0.5
    %v3940 = vmul.f32 %v895, 0.5
    %v3941 = vmul.f32 %v899, 0.5
    %v3942 = vmul.f32 %v905, 0.5
    %v3943 = vmul.f32 %v909, 0.5
    %v3944 = vmul.f32 %v915, 0.5
    %v3945 = vmul.f32 %v919, 0.5
    %v3946 = vmul.f32 %v925, 0.5
    %v3947 = vmul.f32 %v929, 0.5
    %v3948 = vmul.f32 %v935, 0.5
    %v3949 = vmul.f32 %v939, 0.5
    %v3950 = vmul.f32 %v945, 0.5
    %v3951 = vmul.f32 %v949, 0.5
    %v3952 = vmul.f32 %v955, 0.5
    %v3953 = vmul.f32 %v959, 0.5
    %v3954 = vmul.f32 %v965, 0.5
    %v3955 = vmul.f32 %v969, 0.5
    %v3956 = vmul.f32 %v975, 0.5
    %v3957 = vmul.f32 %v979, 0.5
    %v3958 = vmul.f32 %v985, 0.5
    %v3959 = vmul.f32 %v989, 0.5
    %v3960 = vmul.f32 %v995, 0.5
    %v3961 = vmul.f32 %v999, 0.5
    %v3962 = vmul.f32 %v1005, 0.5
    %v3963 = vmul.f32 %v1009, 0.5
    %v3964 = vmul.f32 %v1015, 0.5
    %v3965 = vmul.f32 %v1019, 0.5
    %v3966 = vmul.f32 %v1025, 0.5
    %v3967 = vmul.f32 %v1029, 0.5
    %v3968 = vmul.f32 %v1035, 0.5
    %v3969 = vmul.f32 %v1039, 0.5
    %v3970 = vmul.f32 %v1045, 0.5
    %v3971 = vmul.f32 %v1049, 0.5
    %v3972 = vmul.f32 %v1055, 0.5
    %v3973 = vmul.f32 %v1059, 0.5
    %v3974 = vmul.f32 %v1065, 0.5
    %v3975 = vmul.f32 %v1069, 0.5
    %v3976 = vmul.f32 %v1075, 0.5
    %v3977 = vmul.f32 %v1079, 0.5
    %v3978 = vmul.f32 %v1085, 0.5
    %v3979 = vmul.f32 %v1089, 0.5
    %v3980 = vmul.f32 %v1095, 0.5
    %v3981 = vmul.f32 %v1099, 0.5
    %v3982 = vmul.f32 %v1105, 0.5
    %v3983 = vmul.f32 %v1109, 0.5
    %v3984 = vmul.f32 %v1115, 0.5
    %v3985 = vmul.f32 %v1119, 0.5
    %v3986 = vmul.f32 %v1125, 0.5
    %v3987 = vmul.f32 %v1129, 0.5
    %v3988 = vtanh.pop %v3924
    %v3989 = vtanh.pop %v3925
    %v3990 = vtanh.pop %v3926
    %v3991 = vtanh.pop %v3927
    %v3992 = vtanh.pop %v3928
    %v3993 = vtanh.pop %v3929
    %v3994 = vtanh.pop %v3930
    %v3995 = vtanh.pop %v3931
    %v3996 = vtanh.pop %v3932
    %v3997 = vtanh.pop %v3933
    %v3998 = vtanh.pop %v3934
    %v3999 = vtanh.pop %v3935
    %v4000 = vtanh.pop %v3936
    %v4001 = vtanh.pop %v3937
    %v4002 = vtanh.pop %v3938
    %v4003 = vtanh.pop %v3939
    %v4004 = vtanh.pop %v3940
    %v4005 = vtanh.pop %v3941
    %v4006 = vtanh.pop %v3942
    %v4007 = vtanh.pop %v3943
    %v4008 = vtanh.pop %v3944
    %v4009 = vtanh.pop %v3945
    %v4010 = vtanh.pop %v3946
    %v4011 = vtanh.pop %v3947
    %v4012 = vtanh.pop %v3948
    %v4013 = vtanh.pop %v3949
    %v4014 = vtanh.pop %v3950
    %v4015 = vtanh.pop %v3951
    %v4016 = vtanh.pop %v3952
    %v4017 = vtanh.pop %v3953
    %v4018 = vtanh.pop %v3954
    %v4019 = vtanh.pop %v3955
    %v4020 = vtanh.pop %v3956
    %v4021 = vtanh.pop %v3957
    %v4022 = vtanh.pop %v3958
    %v4023 = vtanh.pop %v3959
    %v4024 = vtanh.pop %v3960
    %v4025 = vtanh.pop %v3961
    %v4026 = vtanh.pop %v3962
    %v4027 = vtanh.pop %v3963
    %v4028 = vtanh.pop %v3964
    %v4029 = vtanh.pop %v3965
    %v4030 = vtanh.pop %v3966
    %v4031 = vtanh.pop %v3967
    %v4032 = vtanh.pop %v3968
    %v4033 = vtanh.pop %v3969
    %v4034 = vtanh.pop %v3970
    %v4035 = vtanh.pop %v3971
    %v4036 = vtanh.pop %v3972
    %v4037 = vtanh.pop %v3973
    %v4038 = vtanh.pop %v3974
    %v4039 = vtanh.pop %v3975
    %v4040 = vtanh.pop %v3976
    %v4041 = vtanh.pop %v3977
    %v4042 = vtanh.pop %v3978
    %v4043 = vtanh.pop %v3979
    %v4044 = vtanh.pop %v3980
    %v4045 = vtanh.pop %v3981
    %v4046 = vtanh.pop %v3982
    %v4047 = vtanh.pop %v3983
    %v4048 = vtanh.pop %v3984
    %v4049 = vtanh.pop %v3985
    %v4050 = vtanh.pop %v3986
    %v4051 = vtanh.pop %v3987
    %v4052 = vadd.f32 %v3988, 1.0
    %v4053 = vadd.f32 %v3989, 1.0
    %v4054 = vadd.f32 %v3990, 1.0
    %v4055 = vadd.f32 %v3991, 1.0
    %v4056 = vadd.f32 %v3992, 1.0
    %v4057 = vadd.f32 %v3993, 1.0
    %v4058 = vadd.f32 %v3994, 1.0
    %v4059 = vadd.f32 %v3995, 1.0
    %v4060 = vadd.f32 %v3996, 1.0
    %v4061 = vadd.f32 %v3997, 1.0
    %v4062 = vadd.f32 %v3998, 1.0
    %v4063 = vadd.f32 %v3999, 1.0
    %v4064 = vadd.f32 %v4000, 1.0
    %v4065 = vadd.f32 %v4001, 1.0
    %v4066 = vadd.f32 %v4002, 1.0
    %v4067 = vadd.f32 %v4003, 1.0
    %v4068 = vadd.f32 %v4004, 1.0
    %v4069 = vadd.f32 %v4005, 1.0
    %v4070 = vadd.f32 %v4006, 1.0
    %v4071 = vadd.f32 %v4007, 1.0
    %v4072 = vadd.f32 %v4008, 1.0
    %v4073 = vadd.f32 %v4009, 1.0
    %v4074 = vadd.f32 %v4010, 1.0
    %v4075 = vadd.f32 %v4011, 1.0
    %v4076 = vadd.f32 %v4012, 1.0
    %v4077 = vadd.f32 %v4013, 1.0
    %v4078 = vadd.f32 %v4014, 1.0
    %v4079 = vadd.f32 %v4015, 1.0
    %v4080 = vadd.f32 %v4016, 1.0
    %v4081 = vadd.f32 %v4017, 1.0
    %v4082 = vadd.f32 %v4018, 1.0
    %v4083 = vadd.f32 %v4019, 1.0
    %v4084 = vadd.f32 %v4020, 1.0
    %v4085 = vadd.f32 %v4021, 1.0
    %v4086 = vadd.f32 %v4022, 1.0
    %v4087 = vadd.f32 %v4023, 1.0
    %v4088 = vadd.f32 %v4024, 1.0
    %v4089 = vadd.f32 %v4025, 1.0
    %v4090 = vadd.f32 %v4026, 1.0
    %v4091 = vadd.f32 %v4027, 1.0
    %v4092 = vadd.f32 %v4028, 1.0
    %v4093 = vadd.f32 %v4029, 1.0
    %v4094 = vadd.f32 %v4030, 1.0
    %v4095 = vadd.f32 %v4031, 1.0
    %v4096 = vadd.f32 %v4032, 1.0
    %v4097 = vadd.f32 %v4033, 1.0
    %v4098 = vadd.f32 %v4034, 1.0
    %v4099 = vadd.f32 %v4035, 1.0
    %v4100 = vadd.f32 %v4036, 1.0
    %v4101 = vadd.f32 %v4037, 1.0
    %v4102 = vadd.f32 %v4038, 1.0
    %v4103 = vadd.f32 %v4039, 1.0
    %v4104 = vadd.f32 %v4040, 1.0
    %v4105 = vadd.f32 %v4041, 1.0
    %v4106 = vadd.f32 %v4042, 1.0
    %v4107 = vadd.f32 %v4043, 1.0
    %v4108 = vadd.f32 %v4044, 1.0
    %v4109 = vadd.f32 %v4045, 1.0
    %v4110 = vadd.f32 %v4046, 1.0
    %v4111 = vadd.f32 %v4047, 1.0
    %v4112 = vadd.f32 %v4048, 1.0
    %v4113 = vadd.f32 %v4049, 1.0
    %v4114 = vadd.f32 %v4050, 1.0
    %v4115 = vadd.f32 %v4051, 1.0
    %v4116 = vmul.f32 %v4052, 0.5
    %v4117 = vmul.f32 %v4053, 0.5
    %v4118 = vmul.f32 %v4054, 0.5
    %v4119 = vmul.f32 %v4055, 0.5
    %v4120 = vmul.f32 %v4056, 0.5
    %v4121 = vmul.f32 %v4057, 0.5
    %v4122 = vmul.f32 %v4058, 0.5
    %v4123 = vmul.f32 %v4059, 0.5
    %v4124 = vmul.f32 %v4060, 0.5
    %v4125 = vmul.f32 %v4061, 0.5
    %v4126 = vmul.f32 %v4062, 0.5
    %v4127 = vmul.f32 %v4063, 0.5
    %v4128 = vmul.f32 %v4064, 0.5
    %v4129 = vmul.f32 %v4065, 0.5
    %v4130 = vmul.f32 %v4066, 0.5
    %v4131 = vmul.f32 %v4067, 0.5
    %v4132 = vmul.f32 %v4068, 0.5
    %v4133 = vmul.f32 %v4069, 0.5
    %v4134 = vmul.f32 %v4070, 0.5
    %v4135 = vmul.f32 %v4071, 0.5
    %v4136 = vmul.f32 %v4072, 0.5
    %v4137 = vmul.f32 %v4073, 0.5
    %v4138 = vmul.f32 %v4074, 0.5
    %v4139 = vmul.f32 %v4075, 0.5
    %v4140 = vmul.f32 %v4076, 0.5
    %v4141 = vmul.f32 %v4077, 0.5
    %v4142 = vmul.f32 %v4078, 0.5
    %v4143 = vmul.f32 %v4079, 0.5
    %v4144 = vmul.f32 %v4080, 0.5
    %v4145 = vmul.f32 %v4081, 0.5
    %v4146 = vmul.f32 %v4082, 0.5
    %v4147 = vmul.f32 %v4083, 0.5
    %v4148 = vmul.f32 %v4084, 0.5
    %v4149 = vmul.f32 %v4085, 0.5
    %v4150 = vmul.f32 %v4086, 0.5
    %v4151 = vmul.f32 %v4087, 0.5
    %v4152 = vmul.f32 %v4088, 0.5
    %v4153 = vmul.f32 %v4089, 0.5
    %v4154 = vmul.f32 %v4090, 0.5
    %v4155 = vmul.f32 %v4091, 0.5
    %v4156 = vmul.f32 %v4092, 0.5
    %v4157 = vmul.f32 %v4093, 0.5
    %v4158 = vmul.f32 %v4094, 0.5
    %v4159 = vmul.f32 %v4095, 0.5
    %v4160 = vmul.f32 %v4096, 0.5
    %v4161 = vmul.f32 %v4097, 0.5
    %v4162 = vmul.f32 %v4098, 0.5
    %v4163 = vmul.f32 %v4099, 0.5
    %v4164 = vmul.f32 %v4100, 0.5
    %v4165 = vmul.f32 %v4101, 0.5
    %v4166 = vmul.f32 %v4102, 0.5
    %v4167 = vmul.f32 %v4103, 0.5
    %v4168 = vmul.f32 %v4104, 0.5
    %v4169 = vmul.f32 %v4105, 0.5
    %v4170 = vmul.f32 %v4106, 0.5
    %v4171 = vmul.f32 %v4107, 0.5
    %v4172 = vmul.f32 %v4108, 0.5
    %v4173 = vmul.f32 %v4109, 0.5
    %v4174 = vmul.f32 %v4110, 0.5
    %v4175 = vmul.f32 %v4111, 0.5
    %v4176 = vmul.f32 %v4112, 0.5
    %v4177 = vmul.f32 %v4113, 0.5
    %v4178 = vmul.f32 %v4114, 0.5
    %v4179 = vmul.f32 %v4115, 0.5
    %v4180 = vadd.f32 %v817, %v2002
    %v4181 = vadd.f32 %v821, %v2006
    %v4182 = vadd.f32 %v827, %v2012
    %v4183 = vadd.f32 %v831, %v2016
    %v4184 = vadd.f32 %v837, %v2022
    %v4185 = vadd.f32 %v841, %v2026
    %v4186 = vadd.f32 %v847, %v2032
    %v4187 = vadd.f32 %v851, %v2036
    %v4188 = vadd.f32 %v857, %v2042
    %v4189 = vadd.f32 %v861, %v2046
    %v4190 = vadd.f32 %v867, %v2052
    %v4191 = vadd.f32 %v871, %v2056
    %v4192 = vadd.f32 %v877, %v2062
    %v4193 = vadd.f32 %v881, %v2066
    %v4194 = vadd.f32 %v887, %v2072
    %v4195 = vadd.f32 %v891, %v2076
    %v4196 = vadd.f32 %v897, %v2082
    %v4197 = vadd.f32 %v901, %v2086
    %v4198 = vadd.f32 %v907, %v2092
    %v4199 = vadd.f32 %v911, %v2096
    %v4200 = vadd.f32 %v917, %v2102
    %v4201 = vadd.f32 %v921, %v2106
    %v4202 = vadd.f32 %v927, %v2112
    %v4203 = vadd.f32 %v931, %v2116
    %v4204 = vadd.f32 %v937, %v2122
    %v4205 = vadd.f32 %v941, %v2126
    %v4206 = vadd.f32 %v947, %v2132
    %v4207 = vadd.f32 %v951, %v2136
    %v4208 = vadd.f32 %v957, %v2142
    %v4209 = vadd.f32 %v961, %v2146
    %v4210 = vadd.f32 %v967, %v2152
    %v4211 = vadd.f32 %v971, %v2156
    %v4212 = vadd.f32 %v977, %v2162
    %v4213 = vadd.f32 %v981, %v2166
    %v4214 = vadd.f32 %v987, %v2172
    %v4215 = vadd.f32 %v991, %v2176
    %v4216 = vadd.f32 %v997, %v2182
    %v4217 = vadd.f32 %v1001, %v2186
    %v4218 = vadd.f32 %v1007, %v2192
    %v4219 = vadd.f32 %v1011, %v2196
    %v4220 = vadd.f32 %v1017, %v2202
    %v4221 = vadd.f32 %v1021, %v2206
    %v4222 = vadd.f32 %v1027, %v2212
    %v4223 = vadd.f32 %v1031, %v2216
    %v4224 = vadd.f32 %v1037, %v2222
    %v4225 = vadd.f32 %v1041, %v2226
    %v4226 = vadd.f32 %v1047, %v2232
    %v4227 = vadd.f32 %v1051, %v2236
    %v4228 = vadd.f32 %v1057, %v2242
    %v4229 = vadd.f32 %v1061, %v2246
    %v4230 = vadd.f32 %v1067, %v2252
    %v4231 = vadd.f32 %v1071, %v2256
    %v4232 = vadd.f32 %v1077, %v2262
    %v4233 = vadd.f32 %v1081, %v2266
    %v4234 = vadd.f32 %v1087, %v2272
    %v4235 = vadd.f32 %v1091, %v2276
    %v4236 = vadd.f32 %v1097, %v2282
    %v4237 = vadd.f32 %v1101, %v2286
    %v4238 = vadd.f32 %v1107, %v2292
    %v4239 = vadd.f32 %v1111, %v2296
    %v4240 = vadd.f32 %v1117, %v2302
    %v4241 = vadd.f32 %v1121, %v2306
    %v4242 = vadd.f32 %v1127, %v2312
    %v4243 = vadd.f32 %v1131, %v2316
    %v4244 = vmul.f32 %v4180, 0.5
    %v4245 = vmul.f32 %v4181, 0.5
    %v4246 = vmul.f32 %v4182, 0.5
    %v4247 = vmul.f32 %v4183, 0.5
    %v4248 = vmul.f32 %v4184, 0.5
    %v4249 = vmul.f32 %v4185, 0.5
    %v4250 = vmul.f32 %v4186, 0.5
    %v4251 = vmul.f32 %v4187, 0.5
    %v4252 = vmul.f32 %v4188, 0.5
    %v4253 = vmul.f32 %v4189, 0.5
    %v4254 = vmul.f32 %v4190, 0.5
    %v4255 = vmul.f32 %v4191, 0.5
    %v4256 = vmul.f32 %v4192, 0.5
    %v4257 = vmul.f32 %v4193, 0.5
    %v4258 = vmul.f32 %v4194, 0.5
    %v4259 = vmul.f32 %v4195, 0.5
    %v4260 = vmul.f32 %v4196, 0.5
    %v4261 = vmul.f32 %v4197, 0.5
    %v4262 = vmul.f32 %v4198, 0.5
    %v4263 = vmul.f32 %v4199, 0.5
    %v4264 = vmul.f32 %v4200, 0.5
    %v4265 = vmul.f32 %v4201, 0.5
    %v4266 = vmul.f32 %v4202, 0.5
    %v4267 = vmul.f32 %v4203, 0.5
    %v4268 = vmul.f32 %v4204, 0.5
    %v4269 = vmul.f32 %v4205, 0.5
    %v4270 = vmul.f32 %v4206, 0.5
    %v4271 = vmul.f32 %v4207, 0.5
    %v4272 = vmul.f32 %v4208, 0.5
    %v4273 = vmul.f32 %v4209, 0.5
    %v4274 = vmul.f32 %v4210, 0.5
    %v4275 = vmul.f32 %v4211, 0.5
    %v4276 = vmul.f32 %v4212, 0.5
    %v4277 = vmul.f32 %v4213, 0.5
    %v4278 = vmul.f32 %v4214, 0.5
    %v4279 = vmul.f32 %v4215, 0.5
    %v4280 = vmul.f32 %v4216, 0.5
    %v4281 = vmul.f32 %v4217, 0.5
    %v4282 = vmul.f32 %v4218, 0.5
    %v4283 = vmul.f32 %v4219, 0.5
    %v4284 = vmul.f32 %v4220, 0.5
    %v4285 = vmul.f32 %v4221, 0.5
    %v4286 = vmul.f32 %v4222, 0.5
    %v4287 = vmul.f32 %v4223, 0.5
    %v4288 = vmul.f32 %v4224, 0.5
    %v4289 = vmul.f32 %v4225, 0.5
    %v4290 = vmul.f32 %v4226, 0.5
    %v4291 = vmul.f32 %v4227, 0.5
    %v4292 = vmul.f32 %v4228, 0.5
    %v4293 = vmul.f32 %v4229, 0.5
    %v4294 = vmul.f32 %v4230, 0.5
    %v4295 = vmul.f32 %v4231, 0.5
    %v4296 = vmul.f32 %v4232, 0.5
    %v4297 = vmul.f32 %v4233, 0.5
    %v4298 = vmul.f32 %v4234, 0.5
    %v4299 = vmul.f32 %v4235, 0.5
    %v4300 = vmul.f32 %v4236, 0.5
    %v4301 = vmul.f32 %v4237, 0.5
    %v4302 = vmul.f32 %v4238, 0.5
    %v4303 = vmul.f32 %v4239, 0.5
    %v4304 = vmul.f32 %v4240, 0.5
    %v4305 = vmul.f32 %v4241, 0.5
    %v4306 = vmul.f32 %v4242, 0.5
    %v4307 = vmul.f32 %v4243, 0.5
    %v4308 = vtanh.pop %v4244
    %v4309 = vtanh.pop %v4245
    %v4310 = vtanh.pop %v4246
    %v4311 = vtanh.pop %v4247
    %v4312 = vtanh.pop %v4248
    %v4313 = vtanh.pop %v4249
    %v4314 = vtanh.pop %v4250
    %v4315 = vtanh.pop %v4251
    %v4316 = vtanh.pop %v4252
    %v4317 = vtanh.pop %v4253
    %v4318 = vtanh.pop %v4254
    %v4319 = vtanh.pop %v4255
    %v4320 = vtanh.pop %v4256
    %v4321 = vtanh.pop %v4257
    %v4322 = vtanh.pop %v4258
    %v4323 = vtanh.pop %v4259
    %v4324 = vtanh.pop %v4260
    %v4325 = vtanh.pop %v4261
    %v4326 = vtanh.pop %v4262
    %v4327 = vtanh.pop %v4263
    %v4328 = vtanh.pop %v4264
    %v4329 = vtanh.pop %v4265
    %v4330 = vtanh.pop %v4266
    %v4331 = vtanh.pop %v4267
    %v4332 = vtanh.pop %v4268
    %v4333 = vtanh.pop %v4269
    %v4334 = vtanh.pop %v4270
    %v4335 = vtanh.pop %v4271
    %v4336 = vtanh.pop %v4272
    %v4337 = vtanh.pop %v4273
    %v4338 = vtanh.pop %v4274
    %v4339 = vtanh.pop %v4275
    %v4340 = vtanh.pop %v4276
    %v4341 = vtanh.pop %v4277
    %v4342 = vtanh.pop %v4278
    %v4343 = vtanh.pop %v4279
    %v4344 = vtanh.pop %v4280
    %v4345 = vtanh.pop %v4281
    %v4346 = vtanh.pop %v4282
    %v4347 = vtanh.pop %v4283
    %v4348 = vtanh.pop %v4284
    %v4349 = vtanh.pop %v4285
    %v4350 = vtanh.pop %v4286
    %v4351 = vtanh.pop %v4287
    %v4352 = vtanh.pop %v4288
    %v4353 = vtanh.pop %v4289
    %v4354 = vtanh.pop %v4290
    %v4355 = vtanh.pop %v4291
    %v4356 = vtanh.pop %v4292
    %v4357 = vtanh.pop %v4293
    %v4358 = vtanh.pop %v4294
    %v4359 = vtanh.pop %v4295
    %v4360 = vtanh.pop %v4296
    %v4361 = vtanh.pop %v4297
    %v4362 = vtanh.pop %v4298
    %v4363 = vtanh.pop %v4299
    %v4364 = vtanh.pop %v4300
    %v4365 = vtanh.pop %v4301
    %v4366 = vtanh.pop %v4302
    %v4367 = vtanh.pop %v4303
    %v4368 = vtanh.pop %v4304
    %v4369 = vtanh.pop %v4305
    %v4370 = vtanh.pop %v4306
    %v4371 = vtanh.pop %v4307
    %v4372 = vadd.f32 %v4308, 1.0
    %v4373 = vadd.f32 %v4309, 1.0
    %v4374 = vadd.f32 %v4310, 1.0
    %v4375 = vadd.f32 %v4311, 1.0
    %v4376 = vadd.f32 %v4312, 1.0
    %v4377 = vadd.f32 %v4313, 1.0
    %v4378 = vadd.f32 %v4314, 1.0
    %v4379 = vadd.f32 %v4315, 1.0
    %v4380 = vadd.f32 %v4316, 1.0
    %v4381 = vadd.f32 %v4317, 1.0
    %v4382 = vadd.f32 %v4318, 1.0
    %v4383 = vadd.f32 %v4319, 1.0
    %v4384 = vadd.f32 %v4320, 1.0
    %v4385 = vadd.f32 %v4321, 1.0
    %v4386 = vadd.f32 %v4322, 1.0
    %v4387 = vadd.f32 %v4323, 1.0
    %v4388 = vadd.f32 %v4324, 1.0
    %v4389 = vadd.f32 %v4325, 1.0
    %v4390 = vadd.f32 %v4326, 1.0
    %v4391 = vadd.f32 %v4327, 1.0
    %v4392 = vadd.f32 %v4328, 1.0
    %v4393 = vadd.f32 %v4329, 1.0
    %v4394 = vadd.f32 %v4330, 1.0
    %v4395 = vadd.f32 %v4331, 1.0
    %v4396 = vadd.f32 %v4332, 1.0
    %v4397 = vadd.f32 %v4333, 1.0
    %v4398 = vadd.f32 %v4334, 1.0
    %v4399 = vadd.f32 %v4335, 1.0
    %v4400 = vadd.f32 %v4336, 1.0
    %v4401 = vadd.f32 %v4337, 1.0
    %v4402 = vadd.f32 %v4338, 1.0
    %v4403 = vadd.f32 %v4339, 1.0
    %v4404 = vadd.f32 %v4340, 1.0
    %v4405 = vadd.f32 %v4341, 1.0
    %v4406 = vadd.f32 %v4342, 1.0
    %v4407 = vadd.f32 %v4343, 1.0
    %v4408 = vadd.f32 %v4344, 1.0
    %v4409 = vadd.f32 %v4345, 1.0
    %v4410 = vadd.f32 %v4346, 1.0
    %v4411 = vadd.f32 %v4347, 1.0
    %v4412 = vadd.f32 %v4348, 1.0
    %v4413 = vadd.f32 %v4349, 1.0
    %v4414 = vadd.f32 %v4350, 1.0
    %v4415 = vadd.f32 %v4351, 1.0
    %v4416 = vadd.f32 %v4352, 1.0
    %v4417 = vadd.f32 %v4353, 1.0
    %v4418 = vadd.f32 %v4354, 1.0
    %v4419 = vadd.f32 %v4355, 1.0
    %v4420 = vadd.f32 %v4356, 1.0
    %v4421 = vadd.f32 %v4357, 1.0
    %v4422 = vadd.f32 %v4358, 1.0
    %v4423 = vadd.f32 %v4359, 1.0
    %v4424 = vadd.f32 %v4360, 1.0
    %v4425 = vadd.f32 %v4361, 1.0
    %v4426 = vadd.f32 %v4362, 1.0
    %v4427 = vadd.f32 %v4363, 1.0
    %v4428 = vadd.f32 %v4364, 1.0
    %v4429 = vadd.f32 %v4365, 1.0
    %v4430 = vadd.f32 %v4366, 1.0
    %v4431 = vadd.f32 %v4367, 1.0
    %v4432 = vadd.f32 %v4368, 1.0
    %v4433 = vadd.f32 %v4369, 1.0
    %v4434 = vadd.f32 %v4370, 1.0
    %v4435 = vadd.f32 %v4371, 1.0
    %v4436 = vmul.f32 %v4372, 0.5
    %v4437 = vmul.f32 %v4373, 0.5
    %v4438 = vmul.f32 %v4374, 0.5
    %v4439 = vmul.f32 %v4375, 0.5
    %v4440 = vmul.f32 %v4376, 0.5
    %v4441 = vmul.f32 %v4377, 0.5
    %v4442 = vmul.f32 %v4378, 0.5
    %v4443 = vmul.f32 %v4379, 0.5
    %v4444 = vmul.f32 %v4380, 0.5
    %v4445 = vmul.f32 %v4381, 0.5
    %v4446 = vmul.f32 %v4382, 0.5
    %v4447 = vmul.f32 %v4383, 0.5
    %v4448 = vmul.f32 %v4384, 0.5
    %v4449 = vmul.f32 %v4385, 0.5
    %v4450 = vmul.f32 %v4386, 0.5
    %v4451 = vmul.f32 %v4387, 0.5
    %v4452 = vmul.f32 %v4388, 0.5
    %v4453 = vmul.f32 %v4389, 0.5
    %v4454 = vmul.f32 %v4390, 0.5
    %v4455 = vmul.f32 %v4391, 0.5
    %v4456 = vmul.f32 %v4392, 0.5
    %v4457 = vmul.f32 %v4393, 0.5
    %v4458 = vmul.f32 %v4394, 0.5
    %v4459 = vmul.f32 %v4395, 0.5
    %v4460 = vmul.f32 %v4396, 0.5
    %v4461 = vmul.f32 %v4397, 0.5
    %v4462 = vmul.f32 %v4398, 0.5
    %v4463 = vmul.f32 %v4399, 0.5
    %v4464 = vmul.f32 %v4400, 0.5
    %v4465 = vmul.f32 %v4401, 0.5
    %v4466 = vmul.f32 %v4402, 0.5
    %v4467 = vmul.f32 %v4403, 0.5
    %v4468 = vmul.f32 %v4404, 0.5
    %v4469 = vmul.f32 %v4405, 0.5
    %v4470 = vmul.f32 %v4406, 0.5
    %v4471 = vmul.f32 %v4407, 0.5
    %v4472 = vmul.f32 %v4408, 0.5
    %v4473 = vmul.f32 %v4409, 0.5
    %v4474 = vmul.f32 %v4410, 0.5
    %v4475 = vmul.f32 %v4411, 0.5
    %v4476 = vmul.f32 %v4412, 0.5
    %v4477 = vmul.f32 %v4413, 0.5
    %v4478 = vmul.f32 %v4414, 0.5
    %v4479 = vmul.f32 %v4415, 0.5
    %v4480 = vmul.f32 %v4416, 0.5
    %v4481 = vmul.f32 %v4417, 0.5
    %v4482 = vmul.f32 %v4418, 0.5
    %v4483 = vmul.f32 %v4419, 0.5
    %v4484 = vmul.f32 %v4420, 0.5
    %v4485 = vmul.f32 %v4421, 0.5
    %v4486 = vmul.f32 %v4422, 0.5
    %v4487 = vmul.f32 %v4423, 0.5
    %v4488 = vmul.f32 %v4424, 0.5
    %v4489 = vmul.f32 %v4425, 0.5
    %v4490 = vmul.f32 %v4426, 0.5
    %v4491 = vmul.f32 %v4427, 0.5
    %v4492 = vmul.f32 %v4428, 0.5
    %v4493 = vmul.f32 %v4429, 0.5
    %v4494 = vmul.f32 %v4430, 0.5
    %v4495 = vmul.f32 %v4431, 0.5
    %v4496 = vmul.f32 %v4432, 0.5
    %v4497 = vmul.f32 %v4433, 0.5
    %v4498 = vmul.f32 %v4434, 0.5
    %v4499 = vmul.f32 %v4435, 0.5
    %v4500 = vadd.f32 %v1168, %v2004
    %v4501 = vadd.f32 %v1172, %v2008
    %v4502 = vadd.f32 %v1178, %v2014
    %v4503 = vadd.f32 %v1182, %v2018
    %v4504 = vadd.f32 %v1188, %v2024
    %v4505 = vadd.f32 %v1192, %v2028
    %v4506 = vadd.f32 %v1198, %v2034
    %v4507 = vadd.f32 %v1202, %v2038
    %v4508 = vadd.f32 %v1208, %v2044
    %v4509 = vadd.f32 %v1212, %v2048
    %v4510 = vadd.f32 %v1218, %v2054
    %v4511 = vadd.f32 %v1222, %v2058
    %v4512 = vadd.f32 %v1228, %v2064
    %v4513 = vadd.f32 %v1232, %v2068
    %v4514 = vadd.f32 %v1238, %v2074
    %v4515 = vadd.f32 %v1242, %v2078
    %v4516 = vadd.f32 %v1248, %v2084
    %v4517 = vadd.f32 %v1252, %v2088
    %v4518 = vadd.f32 %v1258, %v2094
    %v4519 = vadd.f32 %v1262, %v2098
    %v4520 = vadd.f32 %v1268, %v2104
    %v4521 = vadd.f32 %v1272, %v2108
    %v4522 = vadd.f32 %v1278, %v2114
    %v4523 = vadd.f32 %v1282, %v2118
    %v4524 = vadd.f32 %v1288, %v2124
    %v4525 = vadd.f32 %v1292, %v2128
    %v4526 = vadd.f32 %v1298, %v2134
    %v4527 = vadd.f32 %v1302, %v2138
    %v4528 = vadd.f32 %v1308, %v2144
    %v4529 = vadd.f32 %v1312, %v2148
    %v4530 = vadd.f32 %v1318, %v2154
    %v4531 = vadd.f32 %v1322, %v2158
    %v4532 = vadd.f32 %v1328, %v2164
    %v4533 = vadd.f32 %v1332, %v2168
    %v4534 = vadd.f32 %v1338, %v2174
    %v4535 = vadd.f32 %v1342, %v2178
    %v4536 = vadd.f32 %v1348, %v2184
    %v4537 = vadd.f32 %v1352, %v2188
    %v4538 = vadd.f32 %v1358, %v2194
    %v4539 = vadd.f32 %v1362, %v2198
    %v4540 = vadd.f32 %v1368, %v2204
    %v4541 = vadd.f32 %v1372, %v2208
    %v4542 = vadd.f32 %v1378, %v2214
    %v4543 = vadd.f32 %v1382, %v2218
    %v4544 = vadd.f32 %v1388, %v2224
    %v4545 = vadd.f32 %v1392, %v2228
    %v4546 = vadd.f32 %v1398, %v2234
    %v4547 = vadd.f32 %v1402, %v2238
    %v4548 = vadd.f32 %v1408, %v2244
    %v4549 = vadd.f32 %v1412, %v2248
    %v4550 = vadd.f32 %v1418, %v2254
    %v4551 = vadd.f32 %v1422, %v2258
    %v4552 = vadd.f32 %v1428, %v2264
    %v4553 = vadd.f32 %v1432, %v2268
    %v4554 = vadd.f32 %v1438, %v2274
    %v4555 = vadd.f32 %v1442, %v2278
    %v4556 = vadd.f32 %v1448, %v2284
    %v4557 = vadd.f32 %v1452, %v2288
    %v4558 = vadd.f32 %v1458, %v2294
    %v4559 = vadd.f32 %v1462, %v2298
    %v4560 = vadd.f32 %v1468, %v2304
    %v4561 = vadd.f32 %v1472, %v2308
    %v4562 = vadd.f32 %v1478, %v2314
    %v4563 = vadd.f32 %v1482, %v2318
    %v4564 = vadd.f32 %v4500, %v2868
    %v4565 = vadd.f32 %v4501, %v2872
    %v4566 = vadd.f32 %v4502, %v2878
    %v4567 = vadd.f32 %v4503, %v2882
    %v4568 = vadd.f32 %v4504, %v2888
    %v4569 = vadd.f32 %v4505, %v2892
    %v4570 = vadd.f32 %v4506, %v2898
    %v4571 = vadd.f32 %v4507, %v2902
    %v4572 = vadd.f32 %v4508, %v2908
    %v4573 = vadd.f32 %v4509, %v2912
    %v4574 = vadd.f32 %v4510, %v2918
    %v4575 = vadd.f32 %v4511, %v2922
    %v4576 = vadd.f32 %v4512, %v2928
    %v4577 = vadd.f32 %v4513, %v2932
    %v4578 = vadd.f32 %v4514, %v2938
    %v4579 = vadd.f32 %v4515, %v2942
    %v4580 = vadd.f32 %v4516, %v2948
    %v4581 = vadd.f32 %v4517, %v2952
    %v4582 = vadd.f32 %v4518, %v2958
    %v4583 = vadd.f32 %v4519, %v2962
    %v4584 = vadd.f32 %v4520, %v2968
    %v4585 = vadd.f32 %v4521, %v2972
    %v4586 = vadd.f32 %v4522, %v2978
    %v4587 = vadd.f32 %v4523, %v2982
    %v4588 = vadd.f32 %v4524, %v2988
    %v4589 = vadd.f32 %v4525, %v2992
    %v4590 = vadd.f32 %v4526, %v2998
    %v4591 = vadd.f32 %v4527, %v3002
    %v4592 = vadd.f32 %v4528, %v3008
    %v4593 = vadd.f32 %v4529, %v3012
    %v4594 = vadd.f32 %v4530, %v3018
    %v4595 = vadd.f32 %v4531, %v3022
    %v4596 = vadd.f32 %v4532, %v3028
    %v4597 = vadd.f32 %v4533, %v3032
    %v4598 = vadd.f32 %v4534, %v3038
    %v4599 = vadd.f32 %v4535, %v3042
    %v4600 = vadd.f32 %v4536, %v3048
    %v4601 = vadd.f32 %v4537, %v3052
    %v4602 = vadd.f32 %v4538, %v3058
    %v4603 = vadd.f32 %v4539, %v3062
    %v4604 = vadd.f32 %v4540, %v3068
    %v4605 = vadd.f32 %v4541, %v3072
    %v4606 = vadd.f32 %v4542, %v3078
    %v4607 = vadd.f32 %v4543, %v3082
    %v4608 = vadd.f32 %v4544, %v3088
    %v4609 = vadd.f32 %v4545, %v3092
    %v4610 = vadd.f32 %v4546, %v3098
    %v4611 = vadd.f32 %v4547, %v3102
    %v4612 = vadd.f32 %v4548, %v3108
    %v4613 = vadd.f32 %v4549, %v3112
    %v4614 = vadd.f32 %v4550, %v3118
    %v4615 = vadd.f32 %v4551, %v3122
    %v4616 = vadd.f32 %v4552, %v3128
    %v4617 = vadd.f32 %v4553, %v3132
    %v4618 = vadd.f32 %v4554, %v3138
    %v4619 = vadd.f32 %v4555, %v3142
    %v4620 = vadd.f32 %v4556, %v3148
    %v4621 = vadd.f32 %v4557, %v3152
    %v4622 = vadd.f32 %v4558, %v3158
    %v4623 = vadd.f32 %v4559, %v3162
    %v4624 = vadd.f32 %v4560, %v3168
    %v4625 = vadd.f32 %v4561, %v3172
    %v4626 = vadd.f32 %v4562, %v3178
    %v4627 = vadd.f32 %v4563, %v3182
    %v4628 = vmul.f32 %v4564, 0.5
    %v4629 = vmul.f32 %v4565, 0.5
    %v4630 = vmul.f32 %v4566, 0.5
    %v4631 = vmul.f32 %v4567, 0.5
    %v4632 = vmul.f32 %v4568, 0.5
    %v4633 = vmul.f32 %v4569, 0.5
    %v4634 = vmul.f32 %v4570, 0.5
    %v4635 = vmul.f32 %v4571, 0.5
    %v4636 = vmul.f32 %v4572, 0.5
    %v4637 = vmul.f32 %v4573, 0.5
    %v4638 = vmul.f32 %v4574, 0.5
    %v4639 = vmul.f32 %v4575, 0.5
    %v4640 = vmul.f32 %v4576, 0.5
    %v4641 = vmul.f32 %v4577, 0.5
    %v4642 = vmul.f32 %v4578, 0.5
    %v4643 = vmul.f32 %v4579, 0.5
    %v4644 = vmul.f32 %v4580, 0.5
    %v4645 = vmul.f32 %v4581, 0.5
    %v4646 = vmul.f32 %v4582, 0.5
    %v4647 = vmul.f32 %v4583, 0.5
    %v4648 = vmul.f32 %v4584, 0.5
    %v4649 = vmul.f32 %v4585, 0.5
    %v4650 = vmul.f32 %v4586, 0.5
    %v4651 = vmul.f32 %v4587, 0.5
    %v4652 = vmul.f32 %v4588, 0.5
    %v4653 = vmul.f32 %v4589, 0.5
    %v4654 = vmul.f32 %v4590, 0.5
    %v4655 = vmul.f32 %v4591, 0.5
    %v4656 = vmul.f32 %v4592, 0.5
    %v4657 = vmul.f32 %v4593, 0.5
    %v4658 = vmul.f32 %v4594, 0.5
    %v4659 = vmul.f32 %v4595, 0.5
    %v4660 = vmul.f32 %v4596, 0.5
    %v4661 = vmul.f32 %v4597, 0.5
    %v4662 = vmul.f32 %v4598, 0.5
    %v4663 = vmul.f32 %v4599, 0.5
    %v4664 = vmul.f32 %v4600, 0.5
    %v4665 = vmul.f32 %v4601, 0.5
    %v4666 = vmul.f32 %v4602, 0.5
    %v4667 = vmul.f32 %v4603, 0.5
    %v4668 = vmul.f32 %v4604, 0.5
    %v4669 = vmul.f32 %v4605, 0.5
    %v4670 = vmul.f32 %v4606, 0.5
    %v4671 = vmul.f32 %v4607, 0.5
    %v4672 = vmul.f32 %v4608, 0.5
    %v4673 = vmul.f32 %v4609, 0.5
    %v4674 = vmul.f32 %v4610, 0.5
    %v4675 = vmul.f32 %v4611, 0.5
    %v4676 = vmul.f32 %v4612, 0.5
    %v4677 = vmul.f32 %v4613, 0.5
    %v4678 = vmul.f32 %v4614, 0.5
    %v4679 = vmul.f32 %v4615, 0.5
    %v4680 = vmul.f32 %v4616, 0.5
    %v4681 = vmul.f32 %v4617, 0.5
    %v4682 = vmul.f32 %v4618, 0.5
    %v4683 = vmul.f32 %v4619, 0.5
    %v4684 = vmul.f32 %v4620, 0.5
    %v4685 = vmul.f32 %v4621, 0.5
    %v4686 = vmul.f32 %v4622, 0.5
    %v4687 = vmul.f32 %v4623, 0.5
    %v4688 = vmul.f32 %v4624, 0.5
    %v4689 = vmul.f32 %v4625, 0.5
    %v4690 = vmul.f32 %v4626, 0.5
    %v4691 = vmul.f32 %v4627, 0.5
    %v4692 = vtanh.pop %v4628
    %v4693 = vtanh.pop %v4629
    %v4694 = vtanh.pop %v4630
    %v4695 = vtanh.pop %v4631
    %v4696 = vtanh.pop %v4632
    %v4697 = vtanh.pop %v4633
    %v4698 = vtanh.pop %v4634
    %v4699 = vtanh.pop %v4635
    %v4700 = vtanh.pop %v4636
    %v4701 = vtanh.pop %v4637
    %v4702 = vtanh.pop %v4638
    %v4703 = vtanh.pop %v4639
    %v4704 = vtanh.pop %v4640
    %v4705 = vtanh.pop %v4641
    %v4706 = vtanh.pop %v4642
    %v4707 = vtanh.pop %v4643
    %v4708 = vtanh.pop %v4644
    %v4709 = vtanh.pop %v4645
    %v4710 = vtanh.pop %v4646
    %v4711 = vtanh.pop %v4647
    %v4712 = vtanh.pop %v4648
    %v4713 = vtanh.pop %v4649
    %v4714 = vtanh.pop %v4650
    %v4715 = vtanh.pop %v4651
    %v4716 = vtanh.pop %v4652
    %v4717 = vtanh.pop %v4653
    %v4718 = vtanh.pop %v4654
    %v4719 = vtanh.pop %v4655
    %v4720 = vtanh.pop %v4656
    %v4721 = vtanh.pop %v4657
    %v4722 = vtanh.pop %v4658
    %v4723 = vtanh.pop %v4659
    %v4724 = vtanh.pop %v4660
    %v4725 = vtanh.pop %v4661
    %v4726 = vtanh.pop %v4662
    %v4727 = vtanh.pop %v4663
    %v4728 = vtanh.pop %v4664
    %v4729 = vtanh.pop %v4665
    %v4730 = vtanh.pop %v4666
    %v4731 = vtanh.pop %v4667
    %v4732 = vtanh.pop %v4668
    %v4733 = vtanh.pop %v4669
    %v4734 = vtanh.pop %v4670
    %v4735 = vtanh.pop %v4671
    %v4736 = vtanh.pop %v4672
    %v4737 = vtanh.pop %v4673
    %v4738 = vtanh.pop %v4674
    %v4739 = vtanh.pop %v4675
    %v4740 = vtanh.pop %v4676
    %v4741 = vtanh.pop %v4677
    %v4742 = vtanh.pop %v4678
    %v4743 = vtanh.pop %v4679
    %v4744 = vtanh.pop %v4680
    %v4745 = vtanh.pop %v4681
    %v4746 = vtanh.pop %v4682
    %v4747 = vtanh.pop %v4683
    %v4748 = vtanh.pop %v4684
    %v4749 = vtanh.pop %v4685
    %v4750 = vtanh.pop %v4686
    %v4751 = vtanh.pop %v4687
    %v4752 = vtanh.pop %v4688
    %v4753 = vtanh.pop %v4689
    %v4754 = vtanh.pop %v4690
    %v4755 = vtanh.pop %v4691
    %v4756 = vadd.f32 %v4692, 1.0
    %v4757 = vadd.f32 %v4693, 1.0
    %v4758 = vadd.f32 %v4694, 1.0
    %v4759 = vadd.f32 %v4695, 1.0
    %v4760 = vadd.f32 %v4696, 1.0
    %v4761 = vadd.f32 %v4697, 1.0
    %v4762 = vadd.f32 %v4698, 1.0
    %v4763 = vadd.f32 %v4699, 1.0
    %v4764 = vadd.f32 %v4700, 1.0
    %v4765 = vadd.f32 %v4701, 1.0
    %v4766 = vadd.f32 %v4702, 1.0
    %v4767 = vadd.f32 %v4703, 1.0
    %v4768 = vadd.f32 %v4704, 1.0
    %v4769 = vadd.f32 %v4705, 1.0
    %v4770 = vadd.f32 %v4706, 1.0
    %v4771 = vadd.f32 %v4707, 1.0
    %v4772 = vadd.f32 %v4708, 1.0
    %v4773 = vadd.f32 %v4709, 1.0
    %v4774 = vadd.f32 %v4710, 1.0
    %v4775 = vadd.f32 %v4711, 1.0
    %v4776 = vadd.f32 %v4712, 1.0
    %v4777 = vadd.f32 %v4713, 1.0
    %v4778 = vadd.f32 %v4714, 1.0
    %v4779 = vadd.f32 %v4715, 1.0
    %v4780 = vadd.f32 %v4716, 1.0
    %v4781 = vadd.f32 %v4717, 1.0
    %v4782 = vadd.f32 %v4718, 1.0
    %v4783 = vadd.f32 %v4719, 1.0
    %v4784 = vadd.f32 %v4720, 1.0
    %v4785 = vadd.f32 %v4721, 1.0
    %v4786 = vadd.f32 %v4722, 1.0
    %v4787 = vadd.f32 %v4723, 1.0
    %v4788 = vadd.f32 %v4724, 1.0
    %v4789 = vadd.f32 %v4725, 1.0
    %v4790 = vadd.f32 %v4726, 1.0
    %v4791 = vadd.f32 %v4727, 1.0
    %v4792 = vadd.f32 %v4728, 1.0
    %v4793 = vadd.f32 %v4729, 1.0
    %v4794 = vadd.f32 %v4730, 1.0
    %v4795 = vadd.f32 %v4731, 1.0
    %v4796 = vadd.f32 %v4732, 1.0
    %v4797 = vadd.f32 %v4733, 1.0
    %v4798 = vadd.f32 %v4734, 1.0
    %v4799 = vadd.f32 %v4735, 1.0
    %v4800 = vadd.f32 %v4736, 1.0
    %v4801 = vadd.f32 %v4737, 1.0
    %v4802 = vadd.f32 %v4738, 1.0
    %v4803 = vadd.f32 %v4739, 1.0
    %v4804 = vadd.f32 %v4740, 1.0
    %v4805 = vadd.f32 %v4741, 1.0
    %v4806 = vadd.f32 %v4742, 1.0
    %v4807 = vadd.f32 %v4743, 1.0
    %v4808 = vadd.f32 %v4744, 1.0
    %v4809 = vadd.f32 %v4745, 1.0
    %v4810 = vadd.f32 %v4746, 1.0
    %v4811 = vadd.f32 %v4747, 1.0
    %v4812 = vadd.f32 %v4748, 1.0
    %v4813 = vadd.f32 %v4749, 1.0
    %v4814 = vadd.f32 %v4750, 1.0
    %v4815 = vadd.f32 %v4751, 1.0
    %v4816 = vadd.f32 %v4752, 1.0
    %v4817 = vadd.f32 %v4753, 1.0
    %v4818 = vadd.f32 %v4754, 1.0
    %v4819 = vadd.f32 %v4755, 1.0
    %v4820 = vmul.f32 %v4756, 0.5
    %v4821 = vmul.f32 %v4757, 0.5
    %v4822 = vmul.f32 %v4758, 0.5
    %v4823 = vmul.f32 %v4759, 0.5
    %v4824 = vmul.f32 %v4760, 0.5
    %v4825 = vmul.f32 %v4761, 0.5
    %v4826 = vmul.f32 %v4762, 0.5
    %v4827 = vmul.f32 %v4763, 0.5
    %v4828 = vmul.f32 %v4764, 0.5
    %v4829 = vmul.f32 %v4765, 0.5
    %v4830 = vmul.f32 %v4766, 0.5
    %v4831 = vmul.f32 %v4767, 0.5
    %v4832 = vmul.f32 %v4768, 0.5
    %v4833 = vmul.f32 %v4769, 0.5
    %v4834 = vmul.f32 %v4770, 0.5
    %v4835 = vmul.f32 %v4771, 0.5
    %v4836 = vmul.f32 %v4772, 0.5
    %v4837 = vmul.f32 %v4773, 0.5
    %v4838 = vmul.f32 %v4774, 0.5
    %v4839 = vmul.f32 %v4775, 0.5
    %v4840 = vmul.f32 %v4776, 0.5
    %v4841 = vmul.f32 %v4777, 0.5
    %v4842 = vmul.f32 %v4778, 0.5
    %v4843 = vmul.f32 %v4779, 0.5
    %v4844 = vmul.f32 %v4780, 0.5
    %v4845 = vmul.f32 %v4781, 0.5
    %v4846 = vmul.f32 %v4782, 0.5
    %v4847 = vmul.f32 %v4783, 0.5
    %v4848 = vmul.f32 %v4784, 0.5
    %v4849 = vmul.f32 %v4785, 0.5
    %v4850 = vmul.f32 %v4786, 0.5
    %v4851 = vmul.f32 %v4787, 0.5
    %v4852 = vmul.f32 %v4788, 0.5
    %v4853 = vmul.f32 %v4789, 0.5
    %v4854 = vmul.f32 %v4790, 0.5
    %v4855 = vmul.f32 %v4791, 0.5
    %v4856 = vmul.f32 %v4792, 0.5
    %v4857 = vmul.f32 %v4793, 0.5
    %v4858 = vmul.f32 %v4794, 0.5
    %v4859 = vmul.f32 %v4795, 0.5
    %v4860 = vmul.f32 %v4796, 0.5
    %v4861 = vmul.f32 %v4797, 0.5
    %v4862 = vmul.f32 %v4798, 0.5
    %v4863 = vmul.f32 %v4799, 0.5
    %v4864 = vmul.f32 %v4800, 0.5
    %v4865 = vmul.f32 %v4801, 0.5
    %v4866 = vmul.f32 %v4802, 0.5
    %v4867 = vmul.f32 %v4803, 0.5
    %v4868 = vmul.f32 %v4804, 0.5
    %v4869 = vmul.f32 %v4805, 0.5
    %v4870 = vmul.f32 %v4806, 0.5
    %v4871 = vmul.f32 %v4807, 0.5
    %v4872 = vmul.f32 %v4808, 0.5
    %v4873 = vmul.f32 %v4809, 0.5
    %v4874 = vmul.f32 %v4810, 0.5
    %v4875 = vmul.f32 %v4811, 0.5
    %v4876 = vmul.f32 %v4812, 0.5
    %v4877 = vmul.f32 %v4813, 0.5
    %v4878 = vmul.f32 %v4814, 0.5
    %v4879 = vmul.f32 %v4815, 0.5
    %v4880 = vmul.f32 %v4816, 0.5
    %v4881 = vmul.f32 %v4817, 0.5
    %v4882 = vmul.f32 %v4818, 0.5
    %v4883 = vmul.f32 %v4819, 0.5
    %v4884 = vadd.f32 %v1170, %v2355
    %v4885 = vadd.f32 %v1174, %v2359
    %v4886 = vadd.f32 %v1180, %v2365
    %v4887 = vadd.f32 %v1184, %v2369
    %v4888 = vadd.f32 %v1190, %v2375
    %v4889 = vadd.f32 %v1194, %v2379
    %v4890 = vadd.f32 %v1200, %v2385
    %v4891 = vadd.f32 %v1204, %v2389
    %v4892 = vadd.f32 %v1210, %v2395
    %v4893 = vadd.f32 %v1214, %v2399
    %v4894 = vadd.f32 %v1220, %v2405
    %v4895 = vadd.f32 %v1224, %v2409
    %v4896 = vadd.f32 %v1230, %v2415
    %v4897 = vadd.f32 %v1234, %v2419
    %v4898 = vadd.f32 %v1240, %v2425
    %v4899 = vadd.f32 %v1244, %v2429
    %v4900 = vadd.f32 %v1250, %v2435
    %v4901 = vadd.f32 %v1254, %v2439
    %v4902 = vadd.f32 %v1260, %v2445
    %v4903 = vadd.f32 %v1264, %v2449
    %v4904 = vadd.f32 %v1270, %v2455
    %v4905 = vadd.f32 %v1274, %v2459
    %v4906 = vadd.f32 %v1280, %v2465
    %v4907 = vadd.f32 %v1284, %v2469
    %v4908 = vadd.f32 %v1290, %v2475
    %v4909 = vadd.f32 %v1294, %v2479
    %v4910 = vadd.f32 %v1300, %v2485
    %v4911 = vadd.f32 %v1304, %v2489
    %v4912 = vadd.f32 %v1310, %v2495
    %v4913 = vadd.f32 %v1314, %v2499
    %v4914 = vadd.f32 %v1320, %v2505
    %v4915 = vadd.f32 %v1324, %v2509
    %v4916 = vadd.f32 %v1330, %v2515
    %v4917 = vadd.f32 %v1334, %v2519
    %v4918 = vadd.f32 %v1340, %v2525
    %v4919 = vadd.f32 %v1344, %v2529
    %v4920 = vadd.f32 %v1350, %v2535
    %v4921 = vadd.f32 %v1354, %v2539
    %v4922 = vadd.f32 %v1360, %v2545
    %v4923 = vadd.f32 %v1364, %v2549
    %v4924 = vadd.f32 %v1370, %v2555
    %v4925 = vadd.f32 %v1374, %v2559
    %v4926 = vadd.f32 %v1380, %v2565
    %v4927 = vadd.f32 %v1384, %v2569
    %v4928 = vadd.f32 %v1390, %v2575
    %v4929 = vadd.f32 %v1394, %v2579
    %v4930 = vadd.f32 %v1400, %v2585
    %v4931 = vadd.f32 %v1404, %v2589
    %v4932 = vadd.f32 %v1410, %v2595
    %v4933 = vadd.f32 %v1414, %v2599
    %v4934 = vadd.f32 %v1420, %v2605
    %v4935 = vadd.f32 %v1424, %v2609
    %v4936 = vadd.f32 %v1430, %v2615
    %v4937 = vadd.f32 %v1434, %v2619
    %v4938 = vadd.f32 %v1440, %v2625
    %v4939 = vadd.f32 %v1444, %v2629
    %v4940 = vadd.f32 %v1450, %v2635
    %v4941 = vadd.f32 %v1454, %v2639
    %v4942 = vadd.f32 %v1460, %v2645
    %v4943 = vadd.f32 %v1464, %v2649
    %v4944 = vadd.f32 %v1470, %v2655
    %v4945 = vadd.f32 %v1474, %v2659
    %v4946 = vadd.f32 %v1480, %v2665
    %v4947 = vadd.f32 %v1484, %v2669
    %v4948 = vadd.f32 %v4884, %v2870
    %v4949 = vadd.f32 %v4885, %v2874
    %v4950 = vadd.f32 %v4886, %v2880
    %v4951 = vadd.f32 %v4887, %v2884
    %v4952 = vadd.f32 %v4888, %v2890
    %v4953 = vadd.f32 %v4889, %v2894
    %v4954 = vadd.f32 %v4890, %v2900
    %v4955 = vadd.f32 %v4891, %v2904
    %v4956 = vadd.f32 %v4892, %v2910
    %v4957 = vadd.f32 %v4893, %v2914
    %v4958 = vadd.f32 %v4894, %v2920
    %v4959 = vadd.f32 %v4895, %v2924
    %v4960 = vadd.f32 %v4896, %v2930
    %v4961 = vadd.f32 %v4897, %v2934
    %v4962 = vadd.f32 %v4898, %v2940
    %v4963 = vadd.f32 %v4899, %v2944
    %v4964 = vadd.f32 %v4900, %v2950
    %v4965 = vadd.f32 %v4901, %v2954
    %v4966 = vadd.f32 %v4902, %v2960
    %v4967 = vadd.f32 %v4903, %v2964
    %v4968 = vadd.f32 %v4904, %v2970
    %v4969 = vadd.f32 %v4905, %v2974
    %v4970 = vadd.f32 %v4906, %v2980
    %v4971 = vadd.f32 %v4907, %v2984
    %v4972 = vadd.f32 %v4908, %v2990
    %v4973 = vadd.f32 %v4909, %v2994
    %v4974 = vadd.f32 %v4910, %v3000
    %v4975 = vadd.f32 %v4911, %v3004
    %v4976 = vadd.f32 %v4912, %v3010
    %v4977 = vadd.f32 %v4913, %v3014
    %v4978 = vadd.f32 %v4914, %v3020
    %v4979 = vadd.f32 %v4915, %v3024
    %v4980 = vadd.f32 %v4916, %v3030
    %v4981 = vadd.f32 %v4917, %v3034
    %v4982 = vadd.f32 %v4918, %v3040
    %v4983 = vadd.f32 %v4919, %v3044
    %v4984 = vadd.f32 %v4920, %v3050
    %v4985 = vadd.f32 %v4921, %v3054
    %v4986 = vadd.f32 %v4922, %v3060
    %v4987 = vadd.f32 %v4923, %v3064
    %v4988 = vadd.f32 %v4924, %v3070
    %v4989 = vadd.f32 %v4925, %v3074
    %v4990 = vadd.f32 %v4926, %v3080
    %v4991 = vadd.f32 %v4927, %v3084
    %v4992 = vadd.f32 %v4928, %v3090
    %v4993 = vadd.f32 %v4929, %v3094
    %v4994 = vadd.f32 %v4930, %v3100
    %v4995 = vadd.f32 %v4931, %v3104
    %v4996 = vadd.f32 %v4932, %v3110
    %v4997 = vadd.f32 %v4933, %v3114
    %v4998 = vadd.f32 %v4934, %v3120
    %v4999 = vadd.f32 %v4935, %v3124
    %v5000 = vadd.f32 %v4936, %v3130
    %v5001 = vadd.f32 %v4937, %v3134
    %v5002 = vadd.f32 %v4938, %v3140
    %v5003 = vadd.f32 %v4939, %v3144
    %v5004 = vadd.f32 %v4940, %v3150
    %v5005 = vadd.f32 %v4941, %v3154
    %v5006 = vadd.f32 %v4942, %v3160
    %v5007 = vadd.f32 %v4943, %v3164
    %v5008 = vadd.f32 %v4944, %v3170
    %v5009 = vadd.f32 %v4945, %v3174
    %v5010 = vadd.f32 %v4946, %v3180
    %v5011 = vadd.f32 %v4947, %v3184
    %v5012 = vadd.f32 %v4948, %v3606
    %v5013 = vadd.f32 %v4949, %v3610
    %v5014 = vadd.f32 %v4950, %v3616
    %v5015 = vadd.f32 %v4951, %v3620
    %v5016 = vadd.f32 %v4952, %v3626
    %v5017 = vadd.f32 %v4953, %v3630
    %v5018 = vadd.f32 %v4954, %v3636
    %v5019 = vadd.f32 %v4955, %v3640
    %v5020 = vadd.f32 %v4956, %v3646
    %v5021 = vadd.f32 %v4957, %v3650
    %v5022 = vadd.f32 %v4958, %v3656
    %v5023 = vadd.f32 %v4959, %v3660
    %v5024 = vadd.f32 %v4960, %v3666
    %v5025 = vadd.f32 %v4961, %v3670
    %v5026 = vadd.f32 %v4962, %v3676
    %v5027 = vadd.f32 %v4963, %v3680
    %v5028 = vadd.f32 %v4964, %v3686
    %v5029 = vadd.f32 %v4965, %v3690
    %v5030 = vadd.f32 %v4966, %v3696
    %v5031 = vadd.f32 %v4967, %v3700
    %v5032 = vadd.f32 %v4968, %v3706
    %v5033 = vadd.f32 %v4969, %v3710
    %v5034 = vadd.f32 %v4970, %v3716
    %v5035 = vadd.f32 %v4971, %v3720
    %v5036 = vadd.f32 %v4972, %v3726
    %v5037 = vadd.f32 %v4973, %v3730
    %v5038 = vadd.f32 %v4974, %v3736
    %v5039 = vadd.f32 %v4975, %v3740
    %v5040 = vadd.f32 %v4976, %v3746
    %v5041 = vadd.f32 %v4977, %v3750
    %v5042 = vadd.f32 %v4978, %v3756
    %v5043 = vadd.f32 %v4979, %v3760
    %v5044 = vadd.f32 %v4980, %v3766
    %v5045 = vadd.f32 %v4981, %v3770
    %v5046 = vadd.f32 %v4982, %v3776
    %v5047 = vadd.f32 %v4983, %v3780
    %v5048 = vadd.f32 %v4984, %v3786
    %v5049 = vadd.f32 %v4985, %v3790
    %v5050 = vadd.f32 %v4986, %v3796
    %v5051 = vadd.f32 %v4987, %v3800
    %v5052 = vadd.f32 %v4988, %v3806
    %v5053 = vadd.f32 %v4989, %v3810
    %v5054 = vadd.f32 %v4990, %v3816
    %v5055 = vadd.f32 %v4991, %v3820
    %v5056 = vadd.f32 %v4992, %v3826
    %v5057 = vadd.f32 %v4993, %v3830
    %v5058 = vadd.f32 %v4994, %v3836
    %v5059 = vadd.f32 %v4995, %v3840
    %v5060 = vadd.f32 %v4996, %v3846
    %v5061 = vadd.f32 %v4997, %v3850
    %v5062 = vadd.f32 %v4998, %v3856
    %v5063 = vadd.f32 %v4999, %v3860
    %v5064 = vadd.f32 %v5000, %v3866
    %v5065 = vadd.f32 %v5001, %v3870
    %v5066 = vadd.f32 %v5002, %v3876
    %v5067 = vadd.f32 %v5003, %v3880
    %v5068 = vadd.f32 %v5004, %v3886
    %v5069 = vadd.f32 %v5005, %v3890
    %v5070 = vadd.f32 %v5006, %v3896
    %v5071 = vadd.f32 %v5007, %v3900
    %v5072 = vadd.f32 %v5008, %v3906
    %v5073 = vadd.f32 %v5009, %v3910
    %v5074 = vadd.f32 %v5010, %v3916
    %v5075 = vadd.f32 %v5011, %v3920
    %v5076 = vmul.f32 %v5012, 0.5
    %v5077 = vmul.f32 %v5013, 0.5
    %v5078 = vmul.f32 %v5014, 0.5
    %v5079 = vmul.f32 %v5015, 0.5
    %v5080 = vmul.f32 %v5016, 0.5
    %v5081 = vmul.f32 %v5017, 0.5
    %v5082 = vmul.f32 %v5018, 0.5
    %v5083 = vmul.f32 %v5019, 0.5
    %v5084 = vmul.f32 %v5020, 0.5
    %v5085 = vmul.f32 %v5021, 0.5
    %v5086 = vmul.f32 %v5022, 0.5
    %v5087 = vmul.f32 %v5023, 0.5
    %v5088 = vmul.f32 %v5024, 0.5
    %v5089 = vmul.f32 %v5025, 0.5
    %v5090 = vmul.f32 %v5026, 0.5
    %v5091 = vmul.f32 %v5027, 0.5
    %v5092 = vmul.f32 %v5028, 0.5
    %v5093 = vmul.f32 %v5029, 0.5
    %v5094 = vmul.f32 %v5030, 0.5
    %v5095 = vmul.f32 %v5031, 0.5
    %v5096 = vmul.f32 %v5032, 0.5
    %v5097 = vmul.f32 %v5033, 0.5
    %v5098 = vmul.f32 %v5034, 0.5
    %v5099 = vmul.f32 %v5035, 0.5
    %v5100 = vmul.f32 %v5036, 0.5
    %v5101 = vmul.f32 %v5037, 0.5
    %v5102 = vmul.f32 %v5038, 0.5
    %v5103 = vmul.f32 %v5039, 0.5
    %v5104 = vmul.f32 %v5040, 0.5
    %v5105 = vmul.f32 %v5041, 0.5
    %v5106 = vmul.f32 %v5042, 0.5
    %v5107 = vmul.f32 %v5043, 0.5
    %v5108 = vmul.f32 %v5044, 0.5
    %v5109 = vmul.f32 %v5045, 0.5
    %v5110 = vmul.f32 %v5046, 0.5
    %v5111 = vmul.f32 %v5047, 0.5
    %v5112 = vmul.f32 %v5048, 0.5
    %v5113 = vmul.f32 %v5049, 0.5
    %v5114 = vmul.f32 %v5050, 0.5
    %v5115 = vmul.f32 %v5051, 0.5
    %v5116 = vmul.f32 %v5052, 0.5
    %v5117 = vmul.f32 %v5053, 0.5
    %v5118 = vmul.f32 %v5054, 0.5
    %v5119 = vmul.f32 %v5055, 0.5
    %v5120 = vmul.f32 %v5056, 0.5
    %v5121 = vmul.f32 %v5057, 0.5
    %v5122 = vmul.f32 %v5058, 0.5
    %v5123 = vmul.f32 %v5059, 0.5
    %v5124 = vmul.f32 %v5060, 0.5
    %v5125 = vmul.f32 %v5061, 0.5
    %v5126 = vmul.f32 %v5062, 0.5
    %v5127 = vmul.f32 %v5063, 0.5
    %v5128 = vmul.f32 %v5064, 0.5
    %v5129 = vmul.f32 %v5065, 0.5
    %v5130 = vmul.f32 %v5066, 0.5
    %v5131 = vmul.f32 %v5067, 0.5
    %v5132 = vmul.f32 %v5068, 0.5
    %v5133 = vmul.f32 %v5069, 0.5
    %v5134 = vmul.f32 %v5070, 0.5
    %v5135 = vmul.f32 %v5071, 0.5
    %v5136 = vmul.f32 %v5072, 0.5
    %v5137 = vmul.f32 %v5073, 0.5
    %v5138 = vmul.f32 %v5074, 0.5
    %v5139 = vmul.f32 %v5075, 0.5
    %v5140 = vtanh.pop %v5076
    %v5141 = vtanh.pop %v5077
    %v5142 = vtanh.pop %v5078
    %v5143 = vtanh.pop %v5079
    %v5144 = vtanh.pop %v5080
    %v5145 = vtanh.pop %v5081
    %v5146 = vtanh.pop %v5082
    %v5147 = vtanh.pop %v5083
    %v5148 = vtanh.pop %v5084
    %v5149 = vtanh.pop %v5085
    %v5150 = vtanh.pop %v5086
    %v5151 = vtanh.pop %v5087
    %v5152 = vtanh.pop %v5088
    %v5153 = vtanh.pop %v5089
    %v5154 = vtanh.pop %v5090
    %v5155 = vtanh.pop %v5091
    %v5156 = vtanh.pop %v5092
    %v5157 = vtanh.pop %v5093
    %v5158 = vtanh.pop %v5094
    %v5159 = vtanh.pop %v5095
    %v5160 = vtanh.pop %v5096
    %v5161 = vtanh.pop %v5097
    %v5162 = vtanh.pop %v5098
    %v5163 = vtanh.pop %v5099
    %v5164 = vtanh.pop %v5100
    %v5165 = vtanh.pop %v5101
    %v5166 = vtanh.pop %v5102
    %v5167 = vtanh.pop %v5103
    %v5168 = vtanh.pop %v5104
    %v5169 = vtanh.pop %v5105
    %v5170 = vtanh.pop %v5106
    %v5171 = vtanh.pop %v5107
    %v5172 = vtanh.pop %v5108
    %v5173 = vtanh.pop %v5109
    %v5174 = vtanh.pop %v5110
    %v5175 = vtanh.pop %v5111
    %v5176 = vtanh.pop %v5112
    %v5177 = vtanh.pop %v5113
    %v5178 = vtanh.pop %v5114
    %v5179 = vtanh.pop %v5115
    %v5180 = vtanh.pop %v5116
    %v5181 = vtanh.pop %v5117
    %v5182 = vtanh.pop %v5118
    %v5183 = vtanh.pop %v5119
    %v5184 = vtanh.pop %v5120
    %v5185 = vtanh.pop %v5121
    %v5186 = vtanh.pop %v5122
    %v5187 = vtanh.pop %v5123
    %v5188 = vtanh.pop %v5124
    %v5189 = vtanh.pop %v5125
    %v5190 = vtanh.pop %v5126
    %v5191 = vtanh.pop %v5127
    %v5192 = vtanh.pop %v5128
    %v5193 = vtanh.pop %v5129
    %v5194 = vtanh.pop %v5130
    %v5195 = vtanh.pop %v5131
    %v5196 = vtanh.pop %v5132
    %v5197 = vtanh.pop %v5133
    %v5198 = vtanh.pop %v5134
    %v5199 = vtanh.pop %v5135
    %v5200 = vtanh.pop %v5136
    %v5201 = vtanh.pop %v5137
    %v5202 = vtanh.pop %v5138
    %v5203 = vtanh.pop %v5139
    %v5204 = vadd.f32 %v5140, 1.0
    %v5205 = vadd.f32 %v5141, 1.0
    %v5206 = vadd.f32 %v5142, 1.0
    %v5207 = vadd.f32 %v5143, 1.0
    %v5208 = vadd.f32 %v5144, 1.0
    %v5209 = vadd.f32 %v5145, 1.0
    %v5210 = vadd.f32 %v5146, 1.0
    %v5211 = vadd.f32 %v5147, 1.0
    %v5212 = vadd.f32 %v5148, 1.0
    %v5213 = vadd.f32 %v5149, 1.0
    %v5214 = vadd.f32 %v5150, 1.0
    %v5215 = vadd.f32 %v5151, 1.0
    %v5216 = vadd.f32 %v5152, 1.0
    %v5217 = vadd.f32 %v5153, 1.0
    %v5218 = vadd.f32 %v5154, 1.0
    %v5219 = vadd.f32 %v5155, 1.0
    %v5220 = vadd.f32 %v5156, 1.0
    %v5221 = vadd.f32 %v5157, 1.0
    %v5222 = vadd.f32 %v5158, 1.0
    %v5223 = vadd.f32 %v5159, 1.0
    %v5224 = vadd.f32 %v5160, 1.0
    %v5225 = vadd.f32 %v5161, 1.0
    %v5226 = vadd.f32 %v5162, 1.0
    %v5227 = vadd.f32 %v5163, 1.0
    %v5228 = vadd.f32 %v5164, 1.0
    %v5229 = vadd.f32 %v5165, 1.0
    %v5230 = vadd.f32 %v5166, 1.0
    %v5231 = vadd.f32 %v5167, 1.0
    %v5232 = vadd.f32 %v5168, 1.0
    %v5233 = vadd.f32 %v5169, 1.0
    %v5234 = vadd.f32 %v5170, 1.0
    %v5235 = vadd.f32 %v5171, 1.0
    %v5236 = vadd.f32 %v5172, 1.0
    %v5237 = vadd.f32 %v5173, 1.0
    %v5238 = vadd.f32 %v5174, 1.0
    %v5239 = vadd.f32 %v5175, 1.0
    %v5240 = vadd.f32 %v5176, 1.0
    %v5241 = vadd.f32 %v5177, 1.0
    %v5242 = vadd.f32 %v5178, 1.0
    %v5243 = vadd.f32 %v5179, 1.0
    %v5244 = vadd.f32 %v5180, 1.0
    %v5245 = vadd.f32 %v5181, 1.0
    %v5246 = vadd.f32 %v5182, 1.0
    %v5247 = vadd.f32 %v5183, 1.0
    %v5248 = vadd.f32 %v5184, 1.0
    %v5249 = vadd.f32 %v5185, 1.0
    %v5250 = vadd.f32 %v5186, 1.0
    %v5251 = vadd.f32 %v5187, 1.0
    %v5252 = vadd.f32 %v5188, 1.0
    %v5253 = vadd.f32 %v5189, 1.0
    %v5254 = vadd.f32 %v5190, 1.0
    %v5255 = vadd.f32 %v5191, 1.0
    %v5256 = vadd.f32 %v5192, 1.0
    %v5257 = vadd.f32 %v5193, 1.0
    %v5258 = vadd.f32 %v5194, 1.0
    %v5259 = vadd.f32 %v5195, 1.0
    %v5260 = vadd.f32 %v5196, 1.0
    %v5261 = vadd.f32 %v5197, 1.0
    %v5262 = vadd.f32 %v5198, 1.0
    %v5263 = vadd.f32 %v5199, 1.0
    %v5264 = vadd.f32 %v5200, 1.0
    %v5265 = vadd.f32 %v5201, 1.0
    %v5266 = vadd.f32 %v5202, 1.0
    %v5267 = vadd.f32 %v5203, 1.0
    %v5268 = vmul.f32 %v5204, 0.5
    %v5269 = vmul.f32 %v5205, 0.5
    %v5270 = vmul.f32 %v5206, 0.5
    %v5271 = vmul.f32 %v5207, 0.5
    %v5272 = vmul.f32 %v5208, 0.5
    %v5273 = vmul.f32 %v5209, 0.5
    %v5274 = vmul.f32 %v5210, 0.5
    %v5275 = vmul.f32 %v5211, 0.5
    %v5276 = vmul.f32 %v5212, 0.5
    %v5277 = vmul.f32 %v5213, 0.5
    %v5278 = vmul.f32 %v5214, 0.5
    %v5279 = vmul.f32 %v5215, 0.5
    %v5280 = vmul.f32 %v5216, 0.5
    %v5281 = vmul.f32 %v5217, 0.5
    %v5282 = vmul.f32 %v5218, 0.5
    %v5283 = vmul.f32 %v5219, 0.5
    %v5284 = vmul.f32 %v5220, 0.5
    %v5285 = vmul.f32 %v5221, 0.5
    %v5286 = vmul.f32 %v5222, 0.5
    %v5287 = vmul.f32 %v5223, 0.5
    %v5288 = vmul.f32 %v5224, 0.5
    %v5289 = vmul.f32 %v5225, 0.5
    %v5290 = vmul.f32 %v5226, 0.5
    %v5291 = vmul.f32 %v5227, 0.5
    %v5292 = vmul.f32 %v5228, 0.5
    %v5293 = vmul.f32 %v5229, 0.5
    %v5294 = vmul.f32 %v5230, 0.5
    %v5295 = vmul.f32 %v5231, 0.5
    %v5296 = vmul.f32 %v5232, 0.5
    %v5297 = vmul.f32 %v5233, 0.5
    %v5298 = vmul.f32 %v5234, 0.5
    %v5299 = vmul.f32 %v5235, 0.5
    %v5300 = vmul.f32 %v5236, 0.5
    %v5301 = vmul.f32 %v5237, 0.5
    %v5302 = vmul.f32 %v5238, 0.5
    %v5303 = vmul.f32 %v5239, 0.5
    %v5304 = vmul.f32 %v5240, 0.5
    %v5305 = vmul.f32 %v5241, 0.5
    %v5306 = vmul.f32 %v5242, 0.5
    %v5307 = vmul.f32 %v5243, 0.5
    %v5308 = vmul.f32 %v5244, 0.5
    %v5309 = vmul.f32 %v5245, 0.5
    %v5310 = vmul.f32 %v5246, 0.5
    %v5311 = vmul.f32 %v5247, 0.5
    %v5312 = vmul.f32 %v5248, 0.5
    %v5313 = vmul.f32 %v5249, 0.5
    %v5314 = vmul.f32 %v5250, 0.5
    %v5315 = vmul.f32 %v5251, 0.5
    %v5316 = vmul.f32 %v5252, 0.5
    %v5317 = vmul.f32 %v5253, 0.5
    %v5318 = vmul.f32 %v5254, 0.5
    %v5319 = vmul.f32 %v5255, 0.5
    %v5320 = vmul.f32 %v5256, 0.5
    %v5321 = vmul.f32 %v5257, 0.5
    %v5322 = vmul.f32 %v5258, 0.5
    %v5323 = vmul.f32 %v5259, 0.5
    %v5324 = vmul.f32 %v5260, 0.5
    %v5325 = vmul.f32 %v5261, 0.5
    %v5326 = vmul.f32 %v5262, 0.5
    %v5327 = vmul.f32 %v5263, 0.5
    %v5328 = vmul.f32 %v5264, 0.5
    %v5329 = vmul.f32 %v5265, 0.5
    %v5330 = vmul.f32 %v5266, 0.5
    %v5331 = vmul.f32 %v5267, 0.5
    %v5332 = vtanh.pop %v1521
    %v5333 = vtanh.pop %v1524
    %v5334 = vtanh.pop %v1529
    %v5335 = vtanh.pop %v1532
    %v5336 = vtanh.pop %v1537
    %v5337 = vtanh.pop %v1540
    %v5338 = vtanh.pop %v1545
    %v5339 = vtanh.pop %v1548
    %v5340 = vtanh.pop %v1553
    %v5341 = vtanh.pop %v1556
    %v5342 = vtanh.pop %v1561
    %v5343 = vtanh.pop %v1564
    %v5344 = vtanh.pop %v1569
    %v5345 = vtanh.pop %v1572
    %v5346 = vtanh.pop %v1577
    %v5347 = vtanh.pop %v1580
    %v5348 = vtanh.pop %v1585
    %v5349 = vtanh.pop %v1588
    %v5350 = vtanh.pop %v1593
    %v5351 = vtanh.pop %v1596
    %v5352 = vtanh.pop %v1601
    %v5353 = vtanh.pop %v1604
    %v5354 = vtanh.pop %v1609
    %v5355 = vtanh.pop %v1612
    %v5356 = vtanh.pop %v1617
    %v5357 = vtanh.pop %v1620
    %v5358 = vtanh.pop %v1625
    %v5359 = vtanh.pop %v1628
    %v5360 = vtanh.pop %v1633
    %v5361 = vtanh.pop %v1636
    %v5362 = vtanh.pop %v1641
    %v5363 = vtanh.pop %v1644
    %v5364 = vtanh.pop %v1649
    %v5365 = vtanh.pop %v1652
    %v5366 = vtanh.pop %v1657
    %v5367 = vtanh.pop %v1660
    %v5368 = vtanh.pop %v1665
    %v5369 = vtanh.pop %v1668
    %v5370 = vtanh.pop %v1673
    %v5371 = vtanh.pop %v1676
    %v5372 = vtanh.pop %v1681
    %v5373 = vtanh.pop %v1684
    %v5374 = vtanh.pop %v1689
    %v5375 = vtanh.pop %v1692
    %v5376 = vtanh.pop %v1697
    %v5377 = vtanh.pop %v1700
    %v5378 = vtanh.pop %v1705
    %v5379 = vtanh.pop %v1708
    %v5380 = vtanh.pop %v1713
    %v5381 = vtanh.pop %v1716
    %v5382 = vtanh.pop %v1721
    %v5383 = vtanh.pop %v1724
    %v5384 = vtanh.pop %v1729
    %v5385 = vtanh.pop %v1732
    %v5386 = vtanh.pop %v1737
    %v5387 = vtanh.pop %v1740
    %v5388 = vtanh.pop %v1745
    %v5389 = vtanh.pop %v1748
    %v5390 = vtanh.pop %v1753
    %v5391 = vtanh.pop %v1756
    %v5392 = vtanh.pop %v1761
    %v5393 = vtanh.pop %v1764
    %v5394 = vtanh.pop %v1769
    %v5395 = vtanh.pop %v1772
    %v5396 = vtanh.pop %v2357
    %v5397 = vtanh.pop %v2361
    %v5398 = vtanh.pop %v2367
    %v5399 = vtanh.pop %v2371
    %v5400 = vtanh.pop %v2377
    %v5401 = vtanh.pop %v2381
    %v5402 = vtanh.pop %v2387
    %v5403 = vtanh.pop %v2391
    %v5404 = vtanh.pop %v2397
    %v5405 = vtanh.pop %v2401
    %v5406 = vtanh.pop %v2407
    %v5407 = vtanh.pop %v2411
    %v5408 = vtanh.pop %v2417
    %v5409 = vtanh.pop %v2421
    %v5410 = vtanh.pop %v2427
    %v5411 = vtanh.pop %v2431
    %v5412 = vtanh.pop %v2437
    %v5413 = vtanh.pop %v2441
    %v5414 = vtanh.pop %v2447
    %v5415 = vtanh.pop %v2451
    %v5416 = vtanh.pop %v2457
    %v5417 = vtanh.pop %v2461
    %v5418 = vtanh.pop %v2467
    %v5419 = vtanh.pop %v2471
    %v5420 = vtanh.pop %v2477
    %v5421 = vtanh.pop %v2481
    %v5422 = vtanh.pop %v2487
    %v5423 = vtanh.pop %v2491
    %v5424 = vtanh.pop %v2497
    %v5425 = vtanh.pop %v2501
    %v5426 = vtanh.pop %v2507
    %v5427 = vtanh.pop %v2511
    %v5428 = vtanh.pop %v2517
    %v5429 = vtanh.pop %v2521
    %v5430 = vtanh.pop %v2527
    %v5431 = vtanh.pop %v2531
    %v5432 = vtanh.pop %v2537
    %v5433 = vtanh.pop %v2541
    %v5434 = vtanh.pop %v2547
    %v5435 = vtanh.pop %v2551
    %v5436 = vtanh.pop %v2557
    %v5437 = vtanh.pop %v2561
    %v5438 = vtanh.pop %v2567
    %v5439 = vtanh.pop %v2571
    %v5440 = vtanh.pop %v2577
    %v5441 = vtanh.pop %v2581
    %v5442 = vtanh.pop %v2587
    %v5443 = vtanh.pop %v2591
    %v5444 = vtanh.pop %v2597
    %v5445 = vtanh.pop %v2601
    %v5446 = vtanh.pop %v2607
    %v5447 = vtanh.pop %v2611
    %v5448 = vtanh.pop %v2617
    %v5449 = vtanh.pop %v2621
    %v5450 = vtanh.pop %v2627
    %v5451 = vtanh.pop %v2631
    %v5452 = vtanh.pop %v2637
    %v5453 = vtanh.pop %v2641
    %v5454 = vtanh.pop %v2647
    %v5455 = vtanh.pop %v2651
    %v5456 = vtanh.pop %v2657
    %v5457 = vtanh.pop %v2661
    %v5458 = vtanh.pop %v2667
    %v5459 = vtanh.pop %v2671
    %v5460 = vtanh.pop %v3221
    %v5461 = vtanh.pop %v3224
    %v5462 = vtanh.pop %v3229
    %v5463 = vtanh.pop %v3232
    %v5464 = vtanh.pop %v3237
    %v5465 = vtanh.pop %v3240
    %v5466 = vtanh.pop %v3245
    %v5467 = vtanh.pop %v3248
    %v5468 = vtanh.pop %v3253
    %v5469 = vtanh.pop %v3256
    %v5470 = vtanh.pop %v3261
    %v5471 = vtanh.pop %v3264
    %v5472 = vtanh.pop %v3269
    %v5473 = vtanh.pop %v3272
    %v5474 = vtanh.pop %v3277
    %v5475 = vtanh.pop %v3280
    %v5476 = vtanh.pop %v3285
    %v5477 = vtanh.pop %v3288
    %v5478 = vtanh.pop %v3293
    %v5479 = vtanh.pop %v3296
    %v5480 = vtanh.pop %v3301
    %v5481 = vtanh.pop %v3304
    %v5482 = vtanh.pop %v3309
    %v5483 = vtanh.pop %v3312
    %v5484 = vtanh.pop %v3317
    %v5485 = vtanh.pop %v3320
    %v5486 = vtanh.pop %v3325
    %v5487 = vtanh.pop %v3328
    %v5488 = vtanh.pop %v3333
    %v5489 = vtanh.pop %v3336
    %v5490 = vtanh.pop %v3341
    %v5491 = vtanh.pop %v3344
    %v5492 = vtanh.pop %v3349
    %v5493 = vtanh.pop %v3352
    %v5494 = vtanh.pop %v3357
    %v5495 = vtanh.pop %v3360
    %v5496 = vtanh.pop %v3365
    %v5497 = vtanh.pop %v3368
    %v5498 = vtanh.pop %v3373
    %v5499 = vtanh.pop %v3376
    %v5500 = vtanh.pop %v3381
    %v5501 = vtanh.pop %v3384
    %v5502 = vtanh.pop %v3389
    %v5503 = vtanh.pop %v3392
    %v5504 = vtanh.pop %v3397
    %v5505 = vtanh.pop %v3400
    %v5506 = vtanh.pop %v3405
    %v5507 = vtanh.pop %v3408
    %v5508 = vtanh.pop %v3413
    %v5509 = vtanh.pop %v3416
    %v5510 = vtanh.pop %v3421
    %v5511 = vtanh.pop %v3424
    %v5512 = vtanh.pop %v3429
    %v5513 = vtanh.pop %v3432
    %v5514 = vtanh.pop %v3437
    %v5515 = vtanh.pop %v3440
    %v5516 = vtanh.pop %v3445
    %v5517 = vtanh.pop %v3448
    %v5518 = vtanh.pop %v3453
    %v5519 = vtanh.pop %v3456
    %v5520 = vtanh.pop %v3461
    %v5521 = vtanh.pop %v3464
    %v5522 = vtanh.pop %v3469
    %v5523 = vtanh.pop %v3472
    %v5524 = vtanh.pop %v3608
    %v5525 = vtanh.pop %v3612
    %v5526 = vtanh.pop %v3618
    %v5527 = vtanh.pop %v3622
    %v5528 = vtanh.pop %v3628
    %v5529 = vtanh.pop %v3632
    %v5530 = vtanh.pop %v3638
    %v5531 = vtanh.pop %v3642
    %v5532 = vtanh.pop %v3648
    %v5533 = vtanh.pop %v3652
    %v5534 = vtanh.pop %v3658
    %v5535 = vtanh.pop %v3662
    %v5536 = vtanh.pop %v3668
    %v5537 = vtanh.pop %v3672
    %v5538 = vtanh.pop %v3678
    %v5539 = vtanh.pop %v3682
    %v5540 = vtanh.pop %v3688
    %v5541 = vtanh.pop %v3692
    %v5542 = vtanh.pop %v3698
    %v5543 = vtanh.pop %v3702
    %v5544 = vtanh.pop %v3708
    %v5545 = vtanh.pop %v3712
    %v5546 = vtanh.pop %v3718
    %v5547 = vtanh.pop %v3722
    %v5548 = vtanh.pop %v3728
    %v5549 = vtanh.pop %v3732
    %v5550 = vtanh.pop %v3738
    %v5551 = vtanh.pop %v3742
    %v5552 = vtanh.pop %v3748
    %v5553 = vtanh.pop %v3752
    %v5554 = vtanh.pop %v3758
    %v5555 = vtanh.pop %v3762
    %v5556 = vtanh.pop %v3768
    %v5557 = vtanh.pop %v3772
    %v5558 = vtanh.pop %v3778
    %v5559 = vtanh.pop %v3782
    %v5560 = vtanh.pop %v3788
    %v5561 = vtanh.pop %v3792
    %v5562 = vtanh.pop %v3798
    %v5563 = vtanh.pop %v3802
    %v5564 = vtanh.pop %v3808
    %v5565 = vtanh.pop %v3812
    %v5566 = vtanh.pop %v3818
    %v5567 = vtanh.pop %v3822
    %v5568 = vtanh.pop %v3828
    %v5569 = vtanh.pop %v3832
    %v5570 = vtanh.pop %v3838
    %v5571 = vtanh.pop %v3842
    %v5572 = vtanh.pop %v3848
    %v5573 = vtanh.pop %v3852
    %v5574 = vtanh.pop %v3858
    %v5575 = vtanh.pop %v3862
    %v5576 = vtanh.pop %v3868
    %v5577 = vtanh.pop %v3872
    %v5578 = vtanh.pop %v3878
    %v5579 = vtanh.pop %v3882
    %v5580 = vtanh.pop %v3888
    %v5581 = vtanh.pop %v3892
    %v5582 = vtanh.pop %v3898
    %v5583 = vtanh.pop %v3902
    %v5584 = vtanh.pop %v3908
    %v5585 = vtanh.pop %v3912
    %v5586 = vtanh.pop %v3918
    %v5587 = vtanh.pop %v3922
    %v5588 = vmul.f32 %v5332, %v4116
    %v5589 = vmul.f32 %v5333, %v4117
    %v5590 = vmul.f32 %v5334, %v4118
    %v5591 = vmul.f32 %v5335, %v4119
    %v5592 = vmul.f32 %v5336, %v4120
    %v5593 = vmul.f32 %v5337, %v4121
    %v5594 = vmul.f32 %v5338, %v4122
    %v5595 = vmul.f32 %v5339, %v4123
    %v5596 = vmul.f32 %v5340, %v4124
    %v5597 = vmul.f32 %v5341, %v4125
    %v5598 = vmul.f32 %v5342, %v4126
    %v5599 = vmul.f32 %v5343, %v4127
    %v5600 = vmul.f32 %v5344, %v4128
    %v5601 = vmul.f32 %v5345, %v4129
    %v5602 = vmul.f32 %v5346, %v4130
    %v5603 = vmul.f32 %v5347, %v4131
    %v5604 = vmul.f32 %v5348, %v4132
    %v5605 = vmul.f32 %v5349, %v4133
    %v5606 = vmul.f32 %v5350, %v4134
    %v5607 = vmul.f32 %v5351, %v4135
    %v5608 = vmul.f32 %v5352, %v4136
    %v5609 = vmul.f32 %v5353, %v4137
    %v5610 = vmul.f32 %v5354, %v4138
    %v5611 = vmul.f32 %v5355, %v4139
    %v5612 = vmul.f32 %v5356, %v4140
    %v5613 = vmul.f32 %v5357, %v4141
    %v5614 = vmul.f32 %v5358, %v4142
    %v5615 = vmul.f32 %v5359, %v4143
    %v5616 = vmul.f32 %v5360, %v4144
    %v5617 = vmul.f32 %v5361, %v4145
    %v5618 = vmul.f32 %v5362, %v4146
    %v5619 = vmul.f32 %v5363, %v4147
    %v5620 = vmul.f32 %v5364, %v4148
    %v5621 = vmul.f32 %v5365, %v4149
    %v5622 = vmul.f32 %v5366, %v4150
    %v5623 = vmul.f32 %v5367, %v4151
    %v5624 = vmul.f32 %v5368, %v4152
    %v5625 = vmul.f32 %v5369, %v4153
    %v5626 = vmul.f32 %v5370, %v4154
    %v5627 = vmul.f32 %v5371, %v4155
    %v5628 = vmul.f32 %v5372, %v4156
    %v5629 = vmul.f32 %v5373, %v4157
    %v5630 = vmul.f32 %v5374, %v4158
    %v5631 = vmul.f32 %v5375, %v4159
    %v5632 = vmul.f32 %v5376, %v4160
    %v5633 = vmul.f32 %v5377, %v4161
    %v5634 = vmul.f32 %v5378, %v4162
    %v5635 = vmul.f32 %v5379, %v4163
    %v5636 = vmul.f32 %v5380, %v4164
    %v5637 = vmul.f32 %v5381, %v4165
    %v5638 = vmul.f32 %v5382, %v4166
    %v5639 = vmul.f32 %v5383, %v4167
    %v5640 = vmul.f32 %v5384, %v4168
    %v5641 = vmul.f32 %v5385, %v4169
    %v5642 = vmul.f32 %v5386, %v4170
    %v5643 = vmul.f32 %v5387, %v4171
    %v5644 = vmul.f32 %v5388, %v4172
    %v5645 = vmul.f32 %v5389, %v4173
    %v5646 = vmul.f32 %v5390, %v4174
    %v5647 = vmul.f32 %v5391, %v4175
    %v5648 = vmul.f32 %v5392, %v4176
    %v5649 = vmul.f32 %v5393, %v4177
    %v5650 = vmul.f32 %v5394, %v4178
    %v5651 = vmul.f32 %v5395, %v4179
    %v5652 = vmul.f32 %v5396, %v4436
    %v5653 = vmul.f32 %v5397, %v4437
    %v5654 = vmul.f32 %v5398, %v4438
    %v5655 = vmul.f32 %v5399, %v4439
    %v5656 = vmul.f32 %v5400, %v4440
    %v5657 = vmul.f32 %v5401, %v4441
    %v5658 = vmul.f32 %v5402, %v4442
    %v5659 = vmul.f32 %v5403, %v4443
    %v5660 = vmul.f32 %v5404, %v4444
    %v5661 = vmul.f32 %v5405, %v4445
    %v5662 = vmul.f32 %v5406, %v4446
    %v5663 = vmul.f32 %v5407, %v4447
    %v5664 = vmul.f32 %v5408, %v4448
    %v5665 = vmul.f32 %v5409, %v4449
    %v5666 = vmul.f32 %v5410, %v4450
    %v5667 = vmul.f32 %v5411, %v4451
    %v5668 = vmul.f32 %v5412, %v4452
    %v5669 = vmul.f32 %v5413, %v4453
    %v5670 = vmul.f32 %v5414, %v4454
    %v5671 = vmul.f32 %v5415, %v4455
    %v5672 = vmul.f32 %v5416, %v4456
    %v5673 = vmul.f32 %v5417, %v4457
    %v5674 = vmul.f32 %v5418, %v4458
    %v5675 = vmul.f32 %v5419, %v4459
    %v5676 = vmul.f32 %v5420, %v4460
    %v5677 = vmul.f32 %v5421, %v4461
    %v5678 = vmul.f32 %v5422, %v4462
    %v5679 = vmul.f32 %v5423, %v4463
    %v5680 = vmul.f32 %v5424, %v4464
    %v5681 = vmul.f32 %v5425, %v4465
    %v5682 = vmul.f32 %v5426, %v4466
    %v5683 = vmul.f32 %v5427, %v4467
    %v5684 = vmul.f32 %v5428, %v4468
    %v5685 = vmul.f32 %v5429, %v4469
    %v5686 = vmul.f32 %v5430, %v4470
    %v5687 = vmul.f32 %v5431, %v4471
    %v5688 = vmul.f32 %v5432, %v4472
    %v5689 = vmul.f32 %v5433, %v4473
    %v5690 = vmul.f32 %v5434, %v4474
    %v5691 = vmul.f32 %v5435, %v4475
    %v5692 = vmul.f32 %v5436, %v4476
    %v5693 = vmul.f32 %v5437, %v4477
    %v5694 = vmul.f32 %v5438, %v4478
    %v5695 = vmul.f32 %v5439, %v4479
    %v5696 = vmul.f32 %v5440, %v4480
    %v5697 = vmul.f32 %v5441, %v4481
    %v5698 = vmul.f32 %v5442, %v4482
    %v5699 = vmul.f32 %v5443, %v4483
    %v5700 = vmul.f32 %v5444, %v4484
    %v5701 = vmul.f32 %v5445, %v4485
    %v5702 = vmul.f32 %v5446, %v4486
    %v5703 = vmul.f32 %v5447, %v4487
    %v5704 = vmul.f32 %v5448, %v4488
    %v5705 = vmul.f32 %v5449, %v4489
    %v5706 = vmul.f32 %v5450, %v4490
    %v5707 = vmul.f32 %v5451, %v4491
    %v5708 = vmul.f32 %v5452, %v4492
    %v5709 = vmul.f32 %v5453, %v4493
    %v5710 = vmul.f32 %v5454, %v4494
    %v5711 = vmul.f32 %v5455, %v4495
    %v5712 = vmul.f32 %v5456, %v4496
    %v5713 = vmul.f32 %v5457, %v4497
    %v5714 = vmul.f32 %v5458, %v4498
    %v5715 = vmul.f32 %v5459, %v4499
    %v5716 = vadd.f32 %v5588, %v5652
    %v5717 = vadd.f32 %v5589, %v5653
    %v5718 = vadd.f32 %v5590, %v5654
    %v5719 = vadd.f32 %v5591, %v5655
    %v5720 = vadd.f32 %v5592, %v5656
    %v5721 = vadd.f32 %v5593, %v5657
    %v5722 = vadd.f32 %v5594, %v5658
    %v5723 = vadd.f32 %v5595, %v5659
    %v5724 = vadd.f32 %v5596, %v5660
    %v5725 = vadd.f32 %v5597, %v5661
    %v5726 = vadd.f32 %v5598, %v5662
    %v5727 = vadd.f32 %v5599, %v5663
    %v5728 = vadd.f32 %v5600, %v5664
    %v5729 = vadd.f32 %v5601, %v5665
    %v5730 = vadd.f32 %v5602, %v5666
    %v5731 = vadd.f32 %v5603, %v5667
    %v5732 = vadd.f32 %v5604, %v5668
    %v5733 = vadd.f32 %v5605, %v5669
    %v5734 = vadd.f32 %v5606, %v5670
    %v5735 = vadd.f32 %v5607, %v5671
    %v5736 = vadd.f32 %v5608, %v5672
    %v5737 = vadd.f32 %v5609, %v5673
    %v5738 = vadd.f32 %v5610, %v5674
    %v5739 = vadd.f32 %v5611, %v5675
    %v5740 = vadd.f32 %v5612, %v5676
    %v5741 = vadd.f32 %v5613, %v5677
    %v5742 = vadd.f32 %v5614, %v5678
    %v5743 = vadd.f32 %v5615, %v5679
    %v5744 = vadd.f32 %v5616, %v5680
    %v5745 = vadd.f32 %v5617, %v5681
    %v5746 = vadd.f32 %v5618, %v5682
    %v5747 = vadd.f32 %v5619, %v5683
    %v5748 = vadd.f32 %v5620, %v5684
    %v5749 = vadd.f32 %v5621, %v5685
    %v5750 = vadd.f32 %v5622, %v5686
    %v5751 = vadd.f32 %v5623, %v5687
    %v5752 = vadd.f32 %v5624, %v5688
    %v5753 = vadd.f32 %v5625, %v5689
    %v5754 = vadd.f32 %v5626, %v5690
    %v5755 = vadd.f32 %v5627, %v5691
    %v5756 = vadd.f32 %v5628, %v5692
    %v5757 = vadd.f32 %v5629, %v5693
    %v5758 = vadd.f32 %v5630, %v5694
    %v5759 = vadd.f32 %v5631, %v5695
    %v5760 = vadd.f32 %v5632, %v5696
    %v5761 = vadd.f32 %v5633, %v5697
    %v5762 = vadd.f32 %v5634, %v5698
    %v5763 = vadd.f32 %v5635, %v5699
    %v5764 = vadd.f32 %v5636, %v5700
    %v5765 = vadd.f32 %v5637, %v5701
    %v5766 = vadd.f32 %v5638, %v5702
    %v5767 = vadd.f32 %v5639, %v5703
    %v5768 = vadd.f32 %v5640, %v5704
    %v5769 = vadd.f32 %v5641, %v5705
    %v5770 = vadd.f32 %v5642, %v5706
    %v5771 = vadd.f32 %v5643, %v5707
    %v5772 = vadd.f32 %v5644, %v5708
    %v5773 = vadd.f32 %v5645, %v5709
    %v5774 = vadd.f32 %v5646, %v5710
    %v5775 = vadd.f32 %v5647, %v5711
    %v5776 = vadd.f32 %v5648, %v5712
    %v5777 = vadd.f32 %v5649, %v5713
    %v5778 = vadd.f32 %v5650, %v5714
    %v5779 = vadd.f32 %v5651, %v5715
    %v5780 = vmul.f32 %v5460, %v4820
    %v5781 = vmul.f32 %v5461, %v4821
    %v5782 = vmul.f32 %v5462, %v4822
    %v5783 = vmul.f32 %v5463, %v4823
    %v5784 = vmul.f32 %v5464, %v4824
    %v5785 = vmul.f32 %v5465, %v4825
    %v5786 = vmul.f32 %v5466, %v4826
    %v5787 = vmul.f32 %v5467, %v4827
    %v5788 = vmul.f32 %v5468, %v4828
    %v5789 = vmul.f32 %v5469, %v4829
    %v5790 = vmul.f32 %v5470, %v4830
    %v5791 = vmul.f32 %v5471, %v4831
    %v5792 = vmul.f32 %v5472, %v4832
    %v5793 = vmul.f32 %v5473, %v4833
    %v5794 = vmul.f32 %v5474, %v4834
    %v5795 = vmul.f32 %v5475, %v4835
    %v5796 = vmul.f32 %v5476, %v4836
    %v5797 = vmul.f32 %v5477, %v4837
    %v5798 = vmul.f32 %v5478, %v4838
    %v5799 = vmul.f32 %v5479, %v4839
    %v5800 = vmul.f32 %v5480, %v4840
    %v5801 = vmul.f32 %v5481, %v4841
    %v5802 = vmul.f32 %v5482, %v4842
    %v5803 = vmul.f32 %v5483, %v4843
    %v5804 = vmul.f32 %v5484, %v4844
    %v5805 = vmul.f32 %v5485, %v4845
    %v5806 = vmul.f32 %v5486, %v4846
    %v5807 = vmul.f32 %v5487, %v4847
    %v5808 = vmul.f32 %v5488, %v4848
    %v5809 = vmul.f32 %v5489, %v4849
    %v5810 = vmul.f32 %v5490, %v4850
    %v5811 = vmul.f32 %v5491, %v4851
    %v5812 = vmul.f32 %v5492, %v4852
    %v5813 = vmul.f32 %v5493, %v4853
    %v5814 = vmul.f32 %v5494, %v4854
    %v5815 = vmul.f32 %v5495, %v4855
    %v5816 = vmul.f32 %v5496, %v4856
    %v5817 = vmul.f32 %v5497, %v4857
    %v5818 = vmul.f32 %v5498, %v4858
    %v5819 = vmul.f32 %v5499, %v4859
    %v5820 = vmul.f32 %v5500, %v4860
    %v5821 = vmul.f32 %v5501, %v4861
    %v5822 = vmul.f32 %v5502, %v4862
    %v5823 = vmul.f32 %v5503, %v4863
    %v5824 = vmul.f32 %v5504, %v4864
    %v5825 = vmul.f32 %v5505, %v4865
    %v5826 = vmul.f32 %v5506, %v4866
    %v5827 = vmul.f32 %v5507, %v4867
    %v5828 = vmul.f32 %v5508, %v4868
    %v5829 = vmul.f32 %v5509, %v4869
    %v5830 = vmul.f32 %v5510, %v4870
    %v5831 = vmul.f32 %v5511, %v4871
    %v5832 = vmul.f32 %v5512, %v4872
    %v5833 = vmul.f32 %v5513, %v4873
    %v5834 = vmul.f32 %v5514, %v4874
    %v5835 = vmul.f32 %v5515, %v4875
    %v5836 = vmul.f32 %v5516, %v4876
    %v5837 = vmul.f32 %v5517, %v4877
    %v5838 = vmul.f32 %v5518, %v4878
    %v5839 = vmul.f32 %v5519, %v4879
    %v5840 = vmul.f32 %v5520, %v4880
    %v5841 = vmul.f32 %v5521, %v4881
    %v5842 = vmul.f32 %v5522, %v4882
    %v5843 = vmul.f32 %v5523, %v4883
    %v5844 = vadd.f32 %v5716, %v5780
    %v5845 = vadd.f32 %v5717, %v5781
    %v5846 = vadd.f32 %v5718, %v5782
    %v5847 = vadd.f32 %v5719, %v5783
    %v5848 = vadd.f32 %v5720, %v5784
    %v5849 = vadd.f32 %v5721, %v5785
    %v5850 = vadd.f32 %v5722, %v5786
    %v5851 = vadd.f32 %v5723, %v5787
    %v5852 = vadd.f32 %v5724, %v5788
    %v5853 = vadd.f32 %v5725, %v5789
    %v5854 = vadd.f32 %v5726, %v5790
    %v5855 = vadd.f32 %v5727, %v5791
    %v5856 = vadd.f32 %v5728, %v5792
    %v5857 = vadd.f32 %v5729, %v5793
    %v5858 = vadd.f32 %v5730, %v5794
    %v5859 = vadd.f32 %v5731, %v5795
    %v5860 = vadd.f32 %v5732, %v5796
    %v5861 = vadd.f32 %v5733, %v5797
    %v5862 = vadd.f32 %v5734, %v5798
    %v5863 = vadd.f32 %v5735, %v5799
    %v5864 = vadd.f32 %v5736, %v5800
    %v5865 = vadd.f32 %v5737, %v5801
    %v5866 = vadd.f32 %v5738, %v5802
    %v5867 = vadd.f32 %v5739, %v5803
    %v5868 = vadd.f32 %v5740, %v5804
    %v5869 = vadd.f32 %v5741, %v5805
    %v5870 = vadd.f32 %v5742, %v5806
    %v5871 = vadd.f32 %v5743, %v5807
    %v5872 = vadd.f32 %v5744, %v5808
    %v5873 = vadd.f32 %v5745, %v5809
    %v5874 = vadd.f32 %v5746, %v5810
    %v5875 = vadd.f32 %v5747, %v5811
    %v5876 = vadd.f32 %v5748, %v5812
    %v5877 = vadd.f32 %v5749, %v5813
    %v5878 = vadd.f32 %v5750, %v5814
    %v5879 = vadd.f32 %v5751, %v5815
    %v5880 = vadd.f32 %v5752, %v5816
    %v5881 = vadd.f32 %v5753, %v5817
    %v5882 = vadd.f32 %v5754, %v5818
    %v5883 = vadd.f32 %v5755, %v5819
    %v5884 = vadd.f32 %v5756, %v5820
    %v5885 = vadd.f32 %v5757, %v5821
    %v5886 = vadd.f32 %v5758, %v5822
    %v5887 = vadd.f32 %v5759, %v5823
    %v5888 = vadd.f32 %v5760, %v5824
    %v5889 = vadd.f32 %v5761, %v5825
    %v5890 = vadd.f32 %v5762, %v5826
    %v5891 = vadd.f32 %v5763, %v5827
    %v5892 = vadd.f32 %v5764, %v5828
    %v5893 = vadd.f32 %v5765, %v5829
    %v5894 = vadd.f32 %v5766, %v5830
    %v5895 = vadd.f32 %v5767, %v5831
    %v5896 = vadd.f32 %v5768, %v5832
    %v5897 = vadd.f32 %v5769, %v5833
    %v5898 = vadd.f32 %v5770, %v5834
    %v5899 = vadd.f32 %v5771, %v5835
    %v5900 = vadd.f32 %v5772, %v5836
    %v5901 = vadd.f32 %v5773, %v5837
    %v5902 = vadd.f32 %v5774, %v5838
    %v5903 = vadd.f32 %v5775, %v5839
    %v5904 = vadd.f32 %v5776, %v5840
    %v5905 = vadd.f32 %v5777, %v5841
    %v5906 = vadd.f32 %v5778, %v5842
    %v5907 = vadd.f32 %v5779, %v5843
    %v5908 = vmul.f32 %v5524, %v5268
    %v5909 = vmul.f32 %v5525, %v5269
    %v5910 = vmul.f32 %v5526, %v5270
    %v5911 = vmul.f32 %v5527, %v5271
    %v5912 = vmul.f32 %v5528, %v5272
    %v5913 = vmul.f32 %v5529, %v5273
    %v5914 = vmul.f32 %v5530, %v5274
    %v5915 = vmul.f32 %v5531, %v5275
    %v5916 = vmul.f32 %v5532, %v5276
    %v5917 = vmul.f32 %v5533, %v5277
    %v5918 = vmul.f32 %v5534, %v5278
    %v5919 = vmul.f32 %v5535, %v5279
    %v5920 = vmul.f32 %v5536, %v5280
    %v5921 = vmul.f32 %v5537, %v5281
    %v5922 = vmul.f32 %v5538, %v5282
    %v5923 = vmul.f32 %v5539, %v5283
    %v5924 = vmul.f32 %v5540, %v5284
    %v5925 = vmul.f32 %v5541, %v5285
    %v5926 = vmul.f32 %v5542, %v5286
    %v5927 = vmul.f32 %v5543, %v5287
    %v5928 = vmul.f32 %v5544, %v5288
    %v5929 = vmul.f32 %v5545, %v5289
    %v5930 = vmul.f32 %v5546, %v5290
    %v5931 = vmul.f32 %v5547, %v5291
    %v5932 = vmul.f32 %v5548, %v5292
    %v5933 = vmul.f32 %v5549, %v5293
    %v5934 = vmul.f32 %v5550, %v5294
    %v5935 = vmul.f32 %v5551, %v5295
    %v5936 = vmul.f32 %v5552, %v5296
    %v5937 = vmul.f32 %v5553, %v5297
    %v5938 = vmul.f32 %v5554, %v5298
    %v5939 = vmul.f32 %v5555, %v5299
    %v5940 = vmul.f32 %v5556, %v5300
    %v5941 = vmul.f32 %v5557, %v5301
    %v5942 = vmul.f32 %v5558, %v5302
    %v5943 = vmul.f32 %v5559, %v5303
    %v5944 = vmul.f32 %v5560, %v5304
    %v5945 = vmul.f32 %v5561, %v5305
    %v5946 = vmul.f32 %v5562, %v5306
    %v5947 = vmul.f32 %v5563, %v5307
    %v5948 = vmul.f32 %v5564, %v5308
    %v5949 = vmul.f32 %v5565, %v5309
    %v5950 = vmul.f32 %v5566, %v5310
    %v5951 = vmul.f32 %v5567, %v5311
    %v5952 = vmul.f32 %v5568, %v5312
    %v5953 = vmul.f32 %v5569, %v5313
    %v5954 = vmul.f32 %v5570, %v5314
    %v5955 = vmul.f32 %v5571, %v5315
    %v5956 = vmul.f32 %v5572, %v5316
    %v5957 = vmul.f32 %v5573, %v5317
    %v5958 = vmul.f32 %v5574, %v5318
    %v5959 = vmul.f32 %v5575, %v5319
    %v5960 = vmul.f32 %v5576, %v5320
    %v5961 = vmul.f32 %v5577, %v5321
    %v5962 = vmul.f32 %v5578, %v5322
    %v5963 = vmul.f32 %v5579, %v5323
    %v5964 = vmul.f32 %v5580, %v5324
    %v5965 = vmul.f32 %v5581, %v5325
    %v5966 = vmul.f32 %v5582, %v5326
    %v5967 = vmul.f32 %v5583, %v5327
    %v5968 = vmul.f32 %v5584, %v5328
    %v5969 = vmul.f32 %v5585, %v5329
    %v5970 = vmul.f32 %v5586, %v5330
    %v5971 = vmul.f32 %v5587, %v5331
    %v5972 = vadd.f32 %v5844, %v5908
    %v5973 = vadd.f32 %v5845, %v5909
    %v5974 = vadd.f32 %v5846, %v5910
    %v5975 = vadd.f32 %v5847, %v5911
    %v5976 = vadd.f32 %v5848, %v5912
    %v5977 = vadd.f32 %v5849, %v5913
    %v5978 = vadd.f32 %v5850, %v5914
    %v5979 = vadd.f32 %v5851, %v5915
    %v5980 = vadd.f32 %v5852, %v5916
    %v5981 = vadd.f32 %v5853, %v5917
    %v5982 = vadd.f32 %v5854, %v5918
    %v5983 = vadd.f32 %v5855, %v5919
    %v5984 = vadd.f32 %v5856, %v5920
    %v5985 = vadd.f32 %v5857, %v5921
    %v5986 = vadd.f32 %v5858, %v5922
    %v5987 = vadd.f32 %v5859, %v5923
    %v5988 = vadd.f32 %v5860, %v5924
    %v5989 = vadd.f32 %v5861, %v5925
    %v5990 = vadd.f32 %v5862, %v5926
    %v5991 = vadd.f32 %v5863, %v5927
    %v5992 = vadd.f32 %v5864, %v5928
    %v5993 = vadd.f32 %v5865, %v5929
    %v5994 = vadd.f32 %v5866, %v5930
    %v5995 = vadd.f32 %v5867, %v5931
    %v5996 = vadd.f32 %v5868, %v5932
    %v5997 = vadd.f32 %v5869, %v5933
    %v5998 = vadd.f32 %v5870, %v5934
    %v5999 = vadd.f32 %v5871, %v5935
    %v6000 = vadd.f32 %v5872, %v5936
    %v6001 = vadd.f32 %v5873, %v5937
    %v6002 = vadd.f32 %v5874, %v5938
    %v6003 = vadd.f32 %v5875, %v5939
    %v6004 = vadd.f32 %v5876, %v5940
    %v6005 = vadd.f32 %v5877, %v5941
    %v6006 = vadd.f32 %v5878, %v5942
    %v6007 = vadd.f32 %v5879, %v5943
    %v6008 = vadd.f32 %v5880, %v5944
    %v6009 = vadd.f32 %v5881, %v5945
    %v6010 = vadd.f32 %v5882, %v5946
    %v6011 = vadd.f32 %v5883, %v5947
    %v6012 = vadd.f32 %v5884, %v5948
    %v6013 = vadd.f32 %v5885, %v5949
    %v6014 = vadd.f32 %v5886, %v5950
    %v6015 = vadd.f32 %v5887, %v5951
    %v6016 = vadd.f32 %v5888, %v5952
    %v6017 = vadd.f32 %v5889, %v5953
    %v6018 = vadd.f32 %v5890, %v5954
    %v6019 = vadd.f32 %v5891, %v5955
    %v6020 = vadd.f32 %v5892, %v5956
    %v6021 = vadd.f32 %v5893, %v5957
    %v6022 = vadd.f32 %v5894, %v5958
    %v6023 = vadd.f32 %v5895, %v5959
    %v6024 = vadd.f32 %v5896, %v5960
    %v6025 = vadd.f32 %v5897, %v5961
    %v6026 = vadd.f32 %v5898, %v5962
    %v6027 = vadd.f32 %v5899, %v5963
    %v6028 = vadd.f32 %v5900, %v5964
    %v6029 = vadd.f32 %v5901, %v5965
    %v6030 = vadd.f32 %v5902, %v5966
    %v6031 = vadd.f32 %v5903, %v5967
    %v6032 = vadd.f32 %v5904, %v5968
    %v6033 = vadd.f32 %v5905, %v5969
    %v6034 = vadd.f32 %v5906, %v5970
    %v6035 = vadd.f32 %v5907, %v5971
    %6036 = vst [vmem:[#allocation16] sm:$0xff] %v5972
    %6037 = vst [vmem:[#allocation16 + $0x8] sm:$0xff] %v5973
    %6038 = vst [vmem:[#allocation16 + $0x10] sm:$0xff] %v5974
    %6039 = vst [vmem:[#allocation16 + $0x18] sm:$0xff] %v5975
    %6040 = vst [vmem:[#allocation16 + $0x20] sm:$0xff] %v5976
    %6041 = vst [vmem:[#allocation16 + $0x28] sm:$0xff] %v5977
    %6042 = vst [vmem:[#allocation16 + $0x30] sm:$0xff] %v5978
    %6043 = vst [vmem:[#allocation16 + $0x38] sm:$0xff] %v5979
    %6044 = vst [vmem:[#allocation16 + $0x40] sm:$0xff] %v5980
    %6045 = vst [vmem:[#allocation16 + $0x48] sm:$0xff] %v5981
    %6046 = vst [vmem:[#allocation16 + $0x50] sm:$0xff] %v5982
    %6047 = vst [vmem:[#allocation16 + $0x58] sm:$0xff] %v5983
    %6048 = vst [vmem:[#allocation16 + $0x60] sm:$0xff] %v5984
    %6049 = vst [vmem:[#allocation16 + $0x68] sm:$0xff] %v5985
    %6050 = vst [vmem:[#allocation16 + $0x70] sm:$0xff] %v5986
    %6051 = vst [vmem:[#allocation16 + $0x78] sm:$0xff] %v5987
    %6052 = vst [vmem:[#allocation16 + $0x80] sm:$0xff] %v5988
    %6053 = vst [vmem:[#allocation16 + $0x88] sm:$0xff] %v5989
    %6054 = vst [vmem:[#allocation16 + $0x90] sm:$0xff] %v5990
    %6055 = vst [vmem:[#allocation16 + $0x98] sm:$0xff] %v5991
    %6056 = vst [vmem:[#allocation16 + $0xa0] sm:$0xff] %v5992
    %6057 = vst [vmem:[#allocation16 + $0xa8] sm:$0xff] %v5993
    %6058 = vst [vmem:[#allocation16 + $0xb0] sm:$0xff] %v5994
    %6059 = vst [vmem:[#allocation16 + $0xb8] sm:$0xff] %v5995
    %6060 = vst [vmem:[#allocation16 + $0xc0] sm:$0xff] %v5996
    %6061 = vst [vmem:[#allocation16 + $0xc8] sm:$0xff] %v5997
    %6062 = vst [vmem:[#allocation16 + $0xd0] sm:$0xff] %v5998
    %6063 = vst [vmem:[#allocation16 + $0xd8] sm:$0xff] %v5999
    %6064 = vst [vmem:[#allocation16 + $0xe0] sm:$0xff] %v6000
    %6065 = vst [vmem:[#allocation16 + $0xe8] sm:$0xff] %v6001
    %6066 = vst [vmem:[#allocation16 + $0xf0] sm:$0xff] %v6002
    %6067 = vst [vmem:[#allocation16 + $0xf8] sm:$0xff] %v6003
    %6068 = vst [vmem:[#allocation16 + $0x100] sm:$0xff] %v6004
    %6069 = vst [vmem:[#allocation16 + $0x108] sm:$0xff] %v6005
    %6070 = vst [vmem:[#allocation16 + $0x110] sm:$0xff] %v6006
    %6071 = vst [vmem:[#allocation16 + $0x118] sm:$0xff] %v6007
    %6072 = vst [vmem:[#allocation16 + $0x120] sm:$0xff] %v6008
    %6073 = vst [vmem:[#allocation16 + $0x128] sm:$0xff] %v6009
    %6074 = vst [vmem:[#allocation16 + $0x130] sm:$0xff] %v6010
    %6075 = vst [vmem:[#allocation16 + $0x138] sm:$0xff] %v6011
    %6076 = vst [vmem:[#allocation16 + $0x140] sm:$0xff] %v6012
    %6077 = vst [vmem:[#allocation16 + $0x148] sm:$0xff] %v6013
    %6078 = vst [vmem:[#allocation16 + $0x150] sm:$0xff] %v6014
    %6079 = vst [vmem:[#allocation16 + $0x158] sm:$0xff] %v6015
    %6080 = vst [vmem:[#allocation16 + $0x160] sm:$0xff] %v6016
    %6081 = vst [vmem:[#allocation16 + $0x168] sm:$0xff] %v6017
    %6082 = vst [vmem:[#allocation16 + $0x170] sm:$0xff] %v6018
    %6083 = vst [vmem:[#allocation16 + $0x178] sm:$0xff] %v6019
    %6084 = vst [vmem:[#allocation16 + $0x180] sm:$0xff] %v6020
    %6085 = vst [vmem:[#allocation16 + $0x188] sm:$0xff] %v6021
    %6086 = vst [vmem:[#allocation16 + $0x190] sm:$0xff] %v6022
    %6087 = vst [vmem:[#allocation16 + $0x198] sm:$0xff] %v6023
    %6088 = vst [vmem:[#allocation16 + $0x1a0] sm:$0xff] %v6024
    %6089 = vst [vmem:[#allocation16 + $0x1a8] sm:$0xff] %v6025
    %6090 = vst [vmem:[#allocation16 + $0x1b0] sm:$0xff] %v6026
    %6091 = vst [vmem:[#allocation16 + $0x1b8] sm:$0xff] %v6027
    %6092 = vst [vmem:[#allocation16 + $0x1c0] sm:$0xff] %v6028
    %6093 = vst [vmem:[#allocation16 + $0x1c8] sm:$0xff] %v6029
    %6094 = vst [vmem:[#allocation16 + $0x1d0] sm:$0xff] %v6030
    %6095 = vst [vmem:[#allocation16 + $0x1d8] sm:$0xff] %v6031
    %6096 = vst [vmem:[#allocation16 + $0x1e0] sm:$0xff] %v6032
    %6097 = vst [vmem:[#allocation16 + $0x1e8] sm:$0xff] %v6033
    %6098 = vst [vmem:[#allocation16 + $0x1f0] sm:$0xff] %v6034
    %6099 = vst [vmem:[#allocation16 + $0x1f8] sm:$0xff] %v6035
    // Predicated region
    $region66: #{tpu_custom_call.1} parent=1 // pred_check
      _
    $region67: #{tpu_custom_call.1} parent=1 // pred_check_branch
      %6101 = sbr.rel (0) target = $region69
    $region68: #{tpu_custom_call.1} parent=1 // pred_region
      %s6103 = ssub.s32 8192, 8192
      %6104 = vsyncadd [#allocation4], %s6103
      %s6105 = sshll.u32 [#allocation16], 4
      %s6106 = int_to_ptr.vmem [resolvable:$true] %s6105
      %6111 = dma.vmem_to_hbm [thread:$0]  %s6106, 8192, %s8, [#allocation4], 128, 128, 8
    $region69: #{tpu_custom_call.1} parent=1 // pred_fallthru
      _
    // Predicated region
    $region70: #{tpu_custom_call.1} parent=1 // pred_check
      _
    $region71: #{tpu_custom_call.1} parent=1 // pred_check_branch
      %6113 = sbr.rel (0) target = $region73
    $region72: #{tpu_custom_call.1} parent=1 // pred_region
      %6114 = dma.done [#allocation4], 8192
    $region73: #{tpu_custom_call.1} parent=1 // pred_fallthru
      _
    %6115 = vsyncpa [#allocation3], 1
    %6116 = vsyncpa [#allocation6], 1
    %6117 = vsyncpa [#allocation9], 1
    %6118 = vsyncpa [#allocation12], 1
    %6119 = vsyncpa [#allocation15], 1
    %6120 = vsyncpa [#allocation4], 1

</llo_original>
